<compile_context>
chip_gen: v7x
topology: tpu7x:2x2x1
jax: 0.10.0
libtpu: 0.0.40
codegen_flags: <defaults>
</compile_context>

<pallas_src>
import functools

import jax
import jax.numpy as jnp
from jax import lax
from jax.experimental import pallas as pl
from jax.experimental.pallas import tpu as pltpu


def _round_up(x, m):
    return ((x + m - 1) // m) * m


# ----------------------------- fused kernel ---------------------------------

def _conv3x3_shiftmac(p, wv, taps, H, WC, padl):
    """3x3 conv as shifted VPU multiply-accumulates.

    p    : (H+2, PW) f32 zero-halo padded activations; interior at lanes
           [padl, padl+WC), interior lane index = w*C + c.
    wv   : (T, WC) f32 merged lane-periodic weight rows (one per tap group).
    taps : static tuple of (dy, off); row t multiplies
           p[dy:dy+H, padl+off : padl+off+WC].
    Returns the (H, WC) f32 convolution result (bias not included).
    """
    n_acc = 4                       # independent partials -> fill 4 VALU slots
    accs = [None] * n_acc
    for t, (dy, off) in enumerate(taps):
        lane0 = padl + off
        term = p[dy:dy + H, lane0:lane0 + WC] * wv[t:t + 1, :]
        i = t % n_acc
        accs[i] = term if accs[i] is None else accs[i] + term
    accs = [a for a in accs if a is not None]
    while len(accs) > 1:            # tree sum of the partials
        nxt = [accs[i] + accs[i + 1] for i in range(0, len(accs) - 1, 2)]
        if len(accs) % 2:
            nxt.append(accs[-1])
        accs = nxt
    return accs[0]


def _fused_kernel(x_ref, wv1_ref, b1_ref, wv2_ref, b2_ref, o_ref,
                  xp_ref, y1p_ref, *, H, WC, C, padl, taps):
    x2d = x_ref[0].astype(jnp.float32)                       # (H, WC)
    pw = xp_ref.shape[1]

    def write_padded(p_ref, interior):
        # Halo-only zeroing: the interior is fully overwritten below, so only
        # the 1-row top/bottom bands and the 2C-lane side bands need zeros.
        # (Zero-weight lanes may multiply stale data only where it is never
        #  read; every lane any tap slice touches is zeroed or overwritten.)
        p_ref[0:1, :] = jnp.zeros((1, pw), jnp.float32)
        p_ref[H + 1:H + 2, :] = jnp.zeros((1, pw), jnp.float32)
        p_ref[1:H + 1, padl - 2 * C:padl] = jnp.zeros((H, 2 * C), jnp.float32)
        p_ref[1:H + 1, padl + WC:padl + WC + 2 * C] = jnp.zeros((H, 2 * C),
                                                                jnp.float32)
        p_ref[1:H + 1, padl:padl + WC] = interior            # lane-aligned

    # ---- stage 1: y1 = relu(bn1(conv1(x))) ---- (never leaves VMEM)
    write_padded(xp_ref, x2d)
    y1 = _conv3x3_shiftmac(xp_ref[...], wv1_ref[...], taps, H, WC, padl)
    y1 = jnp.maximum(y1 + b1_ref[...], 0.0)

    # ---- stage 2: out = relu(bn2(conv2(y1)) + x) ----
    write_padded(y1p_ref, y1)
    y2 = _conv3x3_shiftmac(y1p_ref[...], wv2_ref[...], taps, H, WC, padl)
    o_ref[0] = jnp.maximum(y2 + b2_ref[...] + x2d, 0.0).astype(o_ref.dtype)


def _fused_call(x2d, wv1, b1, wv2, b2, *, H, W, C, Cb, taps):
    Np = x2d.shape[0]
    WC = W * C
    T = wv1.shape[0]
    padl = _round_up(2 * C, 128)             # 128-aligned interior lane offset
    pw = padl + WC + 2 * C                   # left pad + interior + right pad
    kernel = functools.partial(_fused_kernel, H=H, WC=WC, C=C, padl=padl,
                               taps=taps)
    flops = 4 * 9 * Cb * Np * H * W * C                  # 2 convs, 2 flop/MAC
    bytes_accessed = 4 * (2 * Np * H * WC + 2 * T * WC + 2 * WC)
    return pl.pallas_call(
        kernel,
        out_shape=jax.ShapeDtypeStruct((Np, H, WC), x2d.dtype),
        grid_spec=pltpu.PrefetchScalarGridSpec(
            num_scalar_prefetch=0,
            grid=(Np,),
            in_specs=[
                pl.BlockSpec((1, H, WC), lambda n: (n, 0, 0)),   # x (lane-dense)
                pl.BlockSpec((T, WC), lambda n: (0, 0)),         # wv1 (resident)
                pl.BlockSpec((1, WC), lambda n: (0, 0)),         # bias1
                pl.BlockSpec((T, WC), lambda n: (0, 0)),         # wv2 (resident)
                pl.BlockSpec((1, WC), lambda n: (0, 0)),         # bias2
            ],
            out_specs=pl.BlockSpec((1, H, WC), lambda n: (n, 0, 0)),
            scratch_shapes=[
                pltpu.VMEM((H + 2, pw), jnp.float32),            # padded x
                pltpu.VMEM((H + 2, pw), jnp.float32),            # padded y1
            ],
        ),
        compiler_params=pltpu.CompilerParams(
            dimension_semantics=("parallel",)),
        cost_estimate=pl.CostEstimate(flops=flops, transcendentals=0,
                                      bytes_accessed=bytes_accessed),
    )(x2d, wv1, b1, wv2, b2)


# --------------------------- parameter folding -------------------------------

def _fold(w_oihw, conv_bias, gamma, beta, mean, var, eps=1e-5):
    """Fold conv bias + inference BN into (BN-scaled 9-tap weights, bias)."""
    c_out, c_in = w_oihw.shape[0], w_oihw.shape[1]
    # OIHW -> HWIO -> (9, C_in, C_out), tap index = 3*dy + dx
    w9 = jnp.transpose(w_oihw, (2, 3, 1, 0)).reshape(9, c_in, c_out)
    scale = gamma / jnp.sqrt(var + eps)
    return w9 * scale[None, None, :], scale * (conv_bias - mean) + beta


def _block_diag_pair(w9):
    """(9, C, C) -> (9, 2C, 2C) block-diagonal: batch-pair lane packing treats
    two images as one 2C-channel image whose channels never mix."""
    z = jnp.zeros_like(w9)
    top = jnp.concatenate([w9, z], axis=2)
    bot = jnp.concatenate([z, w9], axis=2)
    return jnp.concatenate([top, bot], axis=1)


def _tap_plan(C, Cb):
    """Static merged tap plan.

    off = (dx-1)*C - s is the source-lane offset (relative to the output lane)
    of conv tap (dx, channel-shift s). All (dx, s) with the same (dy, off)
    read the identical activation slice, so their weight rows are pre-summed
    (12C-3 rows instead of 18C-9). Shifts are limited to |s| < Cb since
    cross-block weights are structurally zero (Cb = C normally; Cb = C/2 for
    the block-diagonal batch-pair packing). Returns (taps, groups).
    """
    taps, groups = [], []
    for dy in range(3):
        g = {}
        for dx in range(3):
            for s in range(-(Cb - 1), Cb):
                g.setdefault((dx - 1) * C - s, []).append((dx, s))
        for off in sorted(g):
            taps.append((dy, off))
            groups.append(tuple(g[off]))
    return tuple(taps), tuple(groups)


def _make_shift_weights(w9, W, C, taps, groups):
    """One merged lane-periodic f32 weight row of width W*C per tap group."""
    WC = W * C
    co = jnp.arange(WC) % C
    rows = []
    for (dy, _off), grp in zip(taps, groups):
        row = jnp.zeros((WC,), jnp.float32)
        for (dx, s) in grp:
            ci = co - s
            valid = (ci >= 0) & (ci < C)
            row = row + jnp.where(valid,
                                  w9[3 * dy + dx, jnp.clip(ci, 0, C - 1), co],
                                  0.0)
        rows.append(row)
    return jnp.stack(rows, axis=0).astype(jnp.float32)


def make_feature_refine_block(params, *, N, H, W, C):
    """Folds BN and builds merged shift-weight rows ONCE; returns jitted fwd."""
    w9_1, bias1 = _fold(params["w1"], params["b1"], params["bn1_gamma"],
                        params["bn1_beta"], params["bn1_mean"], params["bn1_var"])
    w9_2, bias2 = _fold(params["w2"], params["b2"], params["bn2_gamma"],
                        params["bn2_beta"], params["bn2_mean"], params["bn2_var"])

    # Batch-pair lane packing: if W*C leaves vregs half empty, treat a pair of
    # images as one image with 2C block-diagonal channels so kernel loads /
    # stores are lane-dense (128+ lanes). Wrapper-side layout plumbing only.
    pack = (W * C < 128) and (N % 2 == 0) and (N > 1)
    if pack:
        w9_1, bias1 = _block_diag_pair(w9_1), jnp.concatenate([bias1, bias1])
        w9_2, bias2 = _block_diag_pair(w9_2), jnp.concatenate([bias2, bias2])
        Ck, Cb, Np = 2 * C, C, N // 2
    else:
        Ck, Cb, Np = C, C, N

    taps, groups = _tap_plan(Ck, Cb)
    wv1 = _make_shift_weights(w9_1, W, Ck, taps, groups)
    wv2 = _make_shift_weights(w9_2, W, Ck, taps, groups)
    b1 = jnp.tile(bias1, W).reshape(1, W * Ck).astype(jnp.float32)
    b2 = jnp.tile(bias2, W).reshape(1, W * Ck).astype(jnp.float32)

    @jax.jit
    def forward(x):                                    # x: (N, H, W, C) NHWC
        if pack:
            x2d = (x.reshape(Np, 2, H, W, C)
                    .transpose(0, 2, 3, 1, 4)          # (Np, H, W, 2, C)
                    .reshape(Np, H, W * Ck))
        else:
            x2d = x.reshape(Np, H, W * Ck)
        out2d = _fused_call(x2d, wv1, b1, wv2, b2,
                            H=H, W=W, C=Ck, Cb=Cb, taps=taps)
        if pack:
            return (out2d.reshape(Np, H, W, 2, C)
                          .transpose(0, 3, 1, 2, 4)
                          .reshape(N, H, W, C))
        return out2d.reshape(N, H, W, C)

    return forward


# ------------------------------- params --------------------------------------

def init_params(key, C):
    """Deterministic parameter init matching the nn.Module shapes."""
    k1, k2, k3, k4 = jax.random.split(key, 4)
    return {
        # PyTorch OIHW conv weights
        "w1": jax.random.normal(k1, (C, C, 3, 3), jnp.float32) * 0.1,
        "b1": jax.random.normal(k2, (C,), jnp.float32) * 0.1,
        "w2": jax.random.normal(k3, (C, C, 3, 3), jnp.float32) * 0.1,
        "b2": jax.random.normal(k4, (C,), jnp.float32) * 0.1,
        # BatchNorm2d (inference statistics)
        "bn1_gamma": jnp.ones((C,), jnp.float32),
        "bn1_beta": jnp.zeros((C,), jnp.float32),
        "bn1_mean": jnp.zeros((C,), jnp.float32),
        "bn1_var": jnp.ones((C,), jnp.float32),
        "bn2_gamma": jnp.ones((C,), jnp.float32),
        "bn2_beta": jnp.zeros((C,), jnp.float32),
        "bn2_mean": jnp.zeros((C,), jnp.float32),
        "bn2_var": jnp.ones((C,), jnp.float32),
    }


# ---------------- pure-JAX reference for verification ------------------------

def _ref_conv(x, w_oihw, b):
    w_hwio = jnp.transpose(w_oihw, (2, 3, 1, 0))
    y = lax.conv_general_dilated(
        x, w_hwio, window_strides=(1, 1), padding="SAME",
        dimension_numbers=("NHWC", "HWIO", "NHWC"),
        precision=lax.Precision.HIGHEST)
    return y + b


def _ref_bn(y, gamma, beta, mean, var, eps=1e-5):
    return (y - mean) / jnp.sqrt(var + eps) * gamma + beta


def feature_refine_block_ref(x, p):
    y = _ref_conv(x, p["w1"], p["b1"])
    y = jnp.maximum(_ref_bn(y, p["bn1_gamma"], p["bn1_beta"],
                            p["bn1_mean"], p["bn1_var"]), 0.0)
    y = _ref_conv(y, p["w2"], p["b2"])
    y = _ref_bn(y, p["bn2_gamma"], p["bn2_beta"], p["bn2_mean"], p["bn2_var"])
    return jnp.maximum(y + x, 0.0)


if __name__ == "__main__":
    key = jax.random.PRNGKey(0)
    kx, kp, kx2 = jax.random.split(key, 3)

    # Case 1: W*C = 64 < 128 -> batch-pair lane-packed path (grid = N/2,
    # lane-dense 128-wide tiles).  NHWC (2,16,16,4) == PyTorch NCHW (2,4,16,16).
    N, H, W, C = 2, 16, 16, 4
    x = jax.random.normal(kx, (N, H, W, C), jnp.float32)
    params = init_params(kp, C)

    fwd = make_feature_refine_block(params, N=N, H=H, W=W, C=C)
    out = jax.block_until_ready(fwd(x))
    ref = feature_refine_block_ref(x, params)
    assert out.shape == (N, H, W, C)
    assert jnp.allclose(out, ref, rtol=1e-4, atol=1e-4), \
        float(jnp.max(jnp.abs(out - ref)))

    # Case 2: W*C = 128 -> unpacked lane-dense path with merged shift rows.
    N2, H2, W2, C2 = 2, 8, 32, 4
    x2 = jax.random.normal(kx2, (N2, H2, W2, C2), jnp.float32)
    fwd2 = make_feature_refine_block(params, N=N2, H=H2, W=W2, C=C2)
    out2 = jax.block_until_ready(fwd2(x2))
    ref2 = feature_refine_block_ref(x2, params)
    assert jnp.allclose(out2, ref2, rtol=1e-4, atol=1e-4), \
        float(jnp.max(jnp.abs(out2 - ref2)))

    print("KERNEL_OK")
</pallas_src>

<mosaic_0001>
module attributes {stable_mosaic.version = 11 : i64} {
  func.func @_fused_kernel(%arg0: i32, %arg1: memref<1x16x128xf32, #tpu.memory_space<vmem>>, %arg2: memref<63x128xf32, #tpu.memory_space<vmem>>, %arg3: memref<1x128xf32, #tpu.memory_space<vmem>>, %arg4: memref<63x128xf32, #tpu.memory_space<vmem>>, %arg5: memref<1x128xf32, #tpu.memory_space<vmem>>, %arg6: memref<1x16x128xf32, #tpu.memory_space<vmem>>, %arg7: memref<18x272xf32, #tpu.memory_space<vmem>>, %arg8: memref<18x272xf32, #tpu.memory_space<vmem>>) attributes {dimension_semantics = [#tpu.dimension_semantics<parallel>], iteration_bounds = array<i64: 1>, scalar_prefetch = 0 : i64, scratch_operands = 2 : i64, tpu.core_type = #tpu.core_type<tc>, window_params = [{transform_indices = @transform_0, window_bounds = array<i64: 1, 16, 128>}, {pipeline_mode = #tpu.pipeline_mode<synchronous>, transform_indices = @transform_1, window_bounds = array<i64: 63, 128>}, {pipeline_mode = #tpu.pipeline_mode<synchronous>, transform_indices = @transform_2, window_bounds = array<i64: 1, 128>}, {pipeline_mode = #tpu.pipeline_mode<synchronous>, transform_indices = @transform_3, window_bounds = array<i64: 63, 128>}, {pipeline_mode = #tpu.pipeline_mode<synchronous>, transform_indices = @transform_4, window_bounds = array<i64: 1, 128>}, {transform_indices = @transform_5, window_bounds = array<i64: 1, 16, 128>}]} {
    %c0 = arith.constant 0 : index
    %c0_0 = arith.constant 0 : index
    %c0_1 = arith.constant 0 : index
    %0 = vector.load %arg1[%c0, %c0_0, %c0_1] : memref<1x16x128xf32, #tpu.memory_space<vmem>>, vector<1x16x128xf32>
    %1 = vector.shape_cast %0 : vector<1x16x128xf32> to vector<16x128xf32>
    %cst = arith.constant 0.000000e+00 : f32
    %2 = vector.broadcast %cst : f32 to vector<1x272xf32>
    %c0_2 = arith.constant 0 : index
    %c0_3 = arith.constant 0 : index
    %3 = vector.load %arg7[%c0_2, %c0_3] : memref<18x272xf32, #tpu.memory_space<vmem>>, vector<1x272xf32>
    tpu.vector_store %arg7[%c0_2, %c0_3], %2 {strides = array<i32>} : memref<18x272xf32, #tpu.memory_space<vmem>>, vector<1x272xf32>,
    %cst_4 = arith.constant 0.000000e+00 : f32
    %4 = vector.broadcast %cst_4 : f32 to vector<1x272xf32>
    %c17 = arith.constant 17 : index
    %c0_5 = arith.constant 0 : index
    %5 = vector.load %arg7[%c17, %c0_5] : memref<18x272xf32, #tpu.memory_space<vmem>>, vector<1x272xf32>
    tpu.vector_store %arg7[%c17, %c0_5], %4 {strides = array<i32>} : memref<18x272xf32, #tpu.memory_space<vmem>>, vector<1x272xf32>,
    %cst_6 = arith.constant 0.000000e+00 : f32
    %6 = vector.broadcast %cst_6 : f32 to vector<16x16xf32>
    %c1 = arith.constant 1 : index
    %c112 = arith.constant 112 : index
    %7 = vector.load %arg7[%c1, %c112] : memref<18x272xf32, #tpu.memory_space<vmem>>, vector<16x16xf32>
    tpu.vector_store %arg7[%c1, %c112], %6 {strides = array<i32>} : memref<18x272xf32, #tpu.memory_space<vmem>>, vector<16x16xf32>,
    %cst_7 = arith.constant 0.000000e+00 : f32
    %8 = vector.broadcast %cst_7 : f32 to vector<16x16xf32>
    %c1_8 = arith.constant 1 : index
    %c256 = arith.constant 256 : index
    %9 = vector.load %arg7[%c1_8, %c256] : memref<18x272xf32, #tpu.memory_space<vmem>>, vector<16x16xf32>
    tpu.vector_store %arg7[%c1_8, %c256], %8 {strides = array<i32>} : memref<18x272xf32, #tpu.memory_space<vmem>>, vector<16x16xf32>,
    %c1_9 = arith.constant 1 : index
    %c128 = arith.constant 128 : index
    %10 = vector.load %arg7[%c1_9, %c128] : memref<18x272xf32, #tpu.memory_space<vmem>>, vector<16x128xf32>
    tpu.vector_store %arg7[%c1_9, %c128], %1 {strides = array<i32>} : memref<18x272xf32, #tpu.memory_space<vmem>>, vector<16x128xf32>,
    %c0_10 = arith.constant 0 : index
    %c0_11 = arith.constant 0 : index
    %11 = vector.load %arg7[%c0_10, %c0_11] : memref<18x272xf32, #tpu.memory_space<vmem>>, vector<18x272xf32>
    %c0_12 = arith.constant 0 : index
    %c0_13 = arith.constant 0 : index
    %12 = vector.load %arg2[%c0_12, %c0_13] : memref<63x128xf32, #tpu.memory_space<vmem>>, vector<63x128xf32>
    %13 = vector.extract_strided_slice %11 {offsets = [0, 117], sizes = [16, 128], strides = [1, 1]} : vector<18x272xf32> to vector<16x128xf32>
    %14 = vector.extract_strided_slice %12 {offsets = [0, 0], sizes = [1, 128], strides = [1, 1]} : vector<63x128xf32> to vector<1x128xf32>
    %15 = vector.broadcast %14 : vector<1x128xf32> to vector<16x128xf32>
    %16 = arith.mulf %13, %15 : vector<16x128xf32>
    %17 = vector.extract_strided_slice %11 {offsets = [0, 118], sizes = [16, 128], strides = [1, 1]} : vector<18x272xf32> to vector<16x128xf32>
    %18 = vector.extract_strided_slice %12 {offsets = [1, 0], sizes = [1, 128], strides = [1, 1]} : vector<63x128xf32> to vector<1x128xf32>
    %19 = vector.broadcast %18 : vector<1x128xf32> to vector<16x128xf32>
    %20 = arith.mulf %17, %19 : vector<16x128xf32>
    %21 = vector.extract_strided_slice %11 {offsets = [0, 119], sizes = [16, 128], strides = [1, 1]} : vector<18x272xf32> to vector<16x128xf32>
    %22 = vector.extract_strided_slice %12 {offsets = [2, 0], sizes = [1, 128], strides = [1, 1]} : vector<63x128xf32> to vector<1x128xf32>
    %23 = vector.broadcast %22 : vector<1x128xf32> to vector<16x128xf32>
    %24 = arith.mulf %21, %23 : vector<16x128xf32>
    %25 = vector.extract_strided_slice %11 {offsets = [0, 120], sizes = [16, 128], strides = [1, 1]} : vector<18x272xf32> to vector<16x128xf32>
    %26 = vector.extract_strided_slice %12 {offsets = [3, 0], sizes = [1, 128], strides = [1, 1]} : vector<63x128xf32> to vector<1x128xf32>
    %27 = vector.broadcast %26 : vector<1x128xf32> to vector<16x128xf32>
    %28 = arith.mulf %25, %27 : vector<16x128xf32>
    %29 = vector.extract_strided_slice %11 {offsets = [0, 121], sizes = [16, 128], strides = [1, 1]} : vector<18x272xf32> to vector<16x128xf32>
    %30 = vector.extract_strided_slice %12 {offsets = [4, 0], sizes = [1, 128], strides = [1, 1]} : vector<63x128xf32> to vector<1x128xf32>
    %31 = vector.broadcast %30 : vector<1x128xf32> to vector<16x128xf32>
    %32 = arith.mulf %29, %31 : vector<16x128xf32>
    %33 = arith.addf %16, %32 : vector<16x128xf32>
    %34 = vector.extract_strided_slice %11 {offsets = [0, 122], sizes = [16, 128], strides = [1, 1]} : vector<18x272xf32> to vector<16x128xf32>
    %35 = vector.extract_strided_slice %12 {offsets = [5, 0], sizes = [1, 128], strides = [1, 1]} : vector<63x128xf32> to vector<1x128xf32>
    %36 = vector.broadcast %35 : vector<1x128xf32> to vector<16x128xf32>
    %37 = arith.mulf %34, %36 : vector<16x128xf32>
    %38 = arith.addf %20, %37 : vector<16x128xf32>
    %39 = vector.extract_strided_slice %11 {offsets = [0, 123], sizes = [16, 128], strides = [1, 1]} : vector<18x272xf32> to vector<16x128xf32>
    %40 = vector.extract_strided_slice %12 {offsets = [6, 0], sizes = [1, 128], strides = [1, 1]} : vector<63x128xf32> to vector<1x128xf32>
    %41 = vector.broadcast %40 : vector<1x128xf32> to vector<16x128xf32>
    %42 = arith.mulf %39, %41 : vector<16x128xf32>
    %43 = arith.addf %24, %42 : vector<16x128xf32>
    %44 = vector.extract_strided_slice %11 {offsets = [0, 125], sizes = [16, 128], strides = [1, 1]} : vector<18x272xf32> to vector<16x128xf32>
    %45 = vector.extract_strided_slice %12 {offsets = [7, 0], sizes = [1, 128], strides = [1, 1]} : vector<63x128xf32> to vector<1x128xf32>
    %46 = vector.broadcast %45 : vector<1x128xf32> to vector<16x128xf32>
    %47 = arith.mulf %44, %46 : vector<16x128xf32>
    %48 = arith.addf %28, %47 : vector<16x128xf32>
    %49 = vector.extract_strided_slice %11 {offsets = [0, 126], sizes = [16, 128], strides = [1, 1]} : vector<18x272xf32> to vector<16x128xf32>
    %50 = vector.extract_strided_slice %12 {offsets = [8, 0], sizes = [1, 128], strides = [1, 1]} : vector<63x128xf32> to vector<1x128xf32>
    %51 = vector.broadcast %50 : vector<1x128xf32> to vector<16x128xf32>
    %52 = arith.mulf %49, %51 : vector<16x128xf32>
    %53 = arith.addf %33, %52 : vector<16x128xf32>
    %54 = vector.extract_strided_slice %11 {offsets = [0, 127], sizes = [16, 128], strides = [1, 1]} : vector<18x272xf32> to vector<16x128xf32>
    %55 = vector.extract_strided_slice %12 {offsets = [9, 0], sizes = [1, 128], strides = [1, 1]} : vector<63x128xf32> to vector<1x128xf32>
    %56 = vector.broadcast %55 : vector<1x128xf32> to vector<16x128xf32>
    %57 = arith.mulf %54, %56 : vector<16x128xf32>
    %58 = arith.addf %38, %57 : vector<16x128xf32>
    %59 = vector.extract_strided_slice %11 {offsets = [0, 128], sizes = [16, 128], strides = [1, 1]} : vector<18x272xf32> to vector<16x128xf32>
    %60 = vector.extract_strided_slice %12 {offsets = [10, 0], sizes = [1, 128], strides = [1, 1]} : vector<63x128xf32> to vector<1x128xf32>
    %61 = vector.broadcast %60 : vector<1x128xf32> to vector<16x128xf32>
    %62 = arith.mulf %59, %61 : vector<16x128xf32>
    %63 = arith.addf %43, %62 : vector<16x128xf32>
    %64 = vector.extract_strided_slice %11 {offsets = [0, 129], sizes = [16, 128], strides = [1, 1]} : vector<18x272xf32> to vector<16x128xf32>
    %65 = vector.extract_strided_slice %12 {offsets = [11, 0], sizes = [1, 128], strides = [1, 1]} : vector<63x128xf32> to vector<1x128xf32>
    %66 = vector.broadcast %65 : vector<1x128xf32> to vector<16x128xf32>
    %67 = arith.mulf %64, %66 : vector<16x128xf32>
    %68 = arith.addf %48, %67 : vector<16x128xf32>
    %69 = vector.extract_strided_slice %11 {offsets = [0, 130], sizes = [16, 128], strides = [1, 1]} : vector<18x272xf32> to vector<16x128xf32>
    %70 = vector.extract_strided_slice %12 {offsets = [12, 0], sizes = [1, 128], strides = [1, 1]} : vector<63x128xf32> to vector<1x128xf32>
    %71 = vector.broadcast %70 : vector<1x128xf32> to vector<16x128xf32>
    %72 = arith.mulf %69, %71 : vector<16x128xf32>
    %73 = arith.addf %53, %72 : vector<16x128xf32>
    %74 = vector.extract_strided_slice %11 {offsets = [0, 131], sizes = [16, 128], strides = [1, 1]} : vector<18x272xf32> to vector<16x128xf32>
    %75 = vector.extract_strided_slice %12 {offsets = [13, 0], sizes = [1, 128], strides = [1, 1]} : vector<63x128xf32> to vector<1x128xf32>
    %76 = vector.broadcast %75 : vector<1x128xf32> to vector<16x128xf32>
    %77 = arith.mulf %74, %76 : vector<16x128xf32>
    %78 = arith.addf %58, %77 : vector<16x128xf32>
    %79 = vector.extract_strided_slice %11 {offsets = [0, 133], sizes = [16, 128], strides = [1, 1]} : vector<18x272xf32> to vector<16x128xf32>
    %80 = vector.extract_strided_slice %12 {offsets = [14, 0], sizes = [1, 128], strides = [1, 1]} : vector<63x128xf32> to vector<1x128xf32>
    %81 = vector.broadcast %80 : vector<1x128xf32> to vector<16x128xf32>
    %82 = arith.mulf %79, %81 : vector<16x128xf32>
    %83 = arith.addf %63, %82 : vector<16x128xf32>
    %84 = vector.extract_strided_slice %11 {offsets = [0, 134], sizes = [16, 128], strides = [1, 1]} : vector<18x272xf32> to vector<16x128xf32>
    %85 = vector.extract_strided_slice %12 {offsets = [15, 0], sizes = [1, 128], strides = [1, 1]} : vector<63x128xf32> to vector<1x128xf32>
    %86 = vector.broadcast %85 : vector<1x128xf32> to vector<16x128xf32>
    %87 = arith.mulf %84, %86 : vector<16x128xf32>
    %88 = arith.addf %68, %87 : vector<16x128xf32>
    %89 = vector.extract_strided_slice %11 {offsets = [0, 135], sizes = [16, 128], strides = [1, 1]} : vector<18x272xf32> to vector<16x128xf32>
    %90 = vector.extract_strided_slice %12 {offsets = [16, 0], sizes = [1, 128], strides = [1, 1]} : vector<63x128xf32> to vector<1x128xf32>
    %91 = vector.broadcast %90 : vector<1x128xf32> to vector<16x128xf32>
    %92 = arith.mulf %89, %91 : vector<16x128xf32>
    %93 = arith.addf %73, %92 : vector<16x128xf32>
    %94 = vector.extract_strided_slice %11 {offsets = [0, 136], sizes = [16, 128], strides = [1, 1]} : vector<18x272xf32> to vector<16x128xf32>
    %95 = vector.extract_strided_slice %12 {offsets = [17, 0], sizes = [1, 128], strides = [1, 1]} : vector<63x128xf32> to vector<1x128xf32>
    %96 = vector.broadcast %95 : vector<1x128xf32> to vector<16x128xf32>
    %97 = arith.mulf %94, %96 : vector<16x128xf32>
    %98 = arith.addf %78, %97 : vector<16x128xf32>
    %99 = vector.extract_strided_slice %11 {offsets = [0, 137], sizes = [16, 128], strides = [1, 1]} : vector<18x272xf32> to vector<16x128xf32>
    %100 = vector.extract_strided_slice %12 {offsets = [18, 0], sizes = [1, 128], strides = [1, 1]} : vector<63x128xf32> to vector<1x128xf32>
    %101 = vector.broadcast %100 : vector<1x128xf32> to vector<16x128xf32>
    %102 = arith.mulf %99, %101 : vector<16x128xf32>
    %103 = arith.addf %83, %102 : vector<16x128xf32>
    %104 = vector.extract_strided_slice %11 {offsets = [0, 138], sizes = [16, 128], strides = [1, 1]} : vector<18x272xf32> to vector<16x128xf32>
    %105 = vector.extract_strided_slice %12 {offsets = [19, 0], sizes = [1, 128], strides = [1, 1]} : vector<63x128xf32> to vector<1x128xf32>
    %106 = vector.broadcast %105 : vector<1x128xf32> to vector<16x128xf32>
    %107 = arith.mulf %104, %106 : vector<16x128xf32>
    %108 = arith.addf %88, %107 : vector<16x128xf32>
    %109 = vector.extract_strided_slice %11 {offsets = [0, 139], sizes = [16, 128], strides = [1, 1]} : vector<18x272xf32> to vector<16x128xf32>
    %110 = vector.extract_strided_slice %12 {offsets = [20, 0], sizes = [1, 128], strides = [1, 1]} : vector<63x128xf32> to vector<1x128xf32>
    %111 = vector.broadcast %110 : vector<1x128xf32> to vector<16x128xf32>
    %112 = arith.mulf %109, %111 : vector<16x128xf32>
    %113 = arith.addf %93, %112 : vector<16x128xf32>
    %114 = vector.extract_strided_slice %11 {offsets = [1, 117], sizes = [16, 128], strides = [1, 1]} : vector<18x272xf32> to vector<16x128xf32>
    %115 = vector.extract_strided_slice %12 {offsets = [21, 0], sizes = [1, 128], strides = [1, 1]} : vector<63x128xf32> to vector<1x128xf32>
    %116 = vector.broadcast %115 : vector<1x128xf32> to vector<16x128xf32>
    %117 = arith.mulf %114, %116 : vector<16x128xf32>
    %118 = arith.addf %98, %117 : vector<16x128xf32>
    %119 = vector.extract_strided_slice %11 {offsets = [1, 118], sizes = [16, 128], strides = [1, 1]} : vector<18x272xf32> to vector<16x128xf32>
    %120 = vector.extract_strided_slice %12 {offsets = [22, 0], sizes = [1, 128], strides = [1, 1]} : vector<63x128xf32> to vector<1x128xf32>
    %121 = vector.broadcast %120 : vector<1x128xf32> to vector<16x128xf32>
    %122 = arith.mulf %119, %121 : vector<16x128xf32>
    %123 = arith.addf %103, %122 : vector<16x128xf32>
    %124 = vector.extract_strided_slice %11 {offsets = [1, 119], sizes = [16, 128], strides = [1, 1]} : vector<18x272xf32> to vector<16x128xf32>
    %125 = vector.extract_strided_slice %12 {offsets = [23, 0], sizes = [1, 128], strides = [1, 1]} : vector<63x128xf32> to vector<1x128xf32>
    %126 = vector.broadcast %125 : vector<1x128xf32> to vector<16x128xf32>
    %127 = arith.mulf %124, %126 : vector<16x128xf32>
    %128 = arith.addf %108, %127 : vector<16x128xf32>
    %129 = vector.extract_strided_slice %11 {offsets = [1, 120], sizes = [16, 128], strides = [1, 1]} : vector<18x272xf32> to vector<16x128xf32>
    %130 = vector.extract_strided_slice %12 {offsets = [24, 0], sizes = [1, 128], strides = [1, 1]} : vector<63x128xf32> to vector<1x128xf32>
    %131 = vector.broadcast %130 : vector<1x128xf32> to vector<16x128xf32>
    %132 = arith.mulf %129, %131 : vector<16x128xf32>
    %133 = arith.addf %113, %132 : vector<16x128xf32>
    %134 = vector.extract_strided_slice %11 {offsets = [1, 121], sizes = [16, 128], strides = [1, 1]} : vector<18x272xf32> to vector<16x128xf32>
    %135 = vector.extract_strided_slice %12 {offsets = [25, 0], sizes = [1, 128], strides = [1, 1]} : vector<63x128xf32> to vector<1x128xf32>
    %136 = vector.broadcast %135 : vector<1x128xf32> to vector<16x128xf32>
    %137 = arith.mulf %134, %136 : vector<16x128xf32>
    %138 = arith.addf %118, %137 : vector<16x128xf32>
    %139 = vector.extract_strided_slice %11 {offsets = [1, 122], sizes = [16, 128], strides = [1, 1]} : vector<18x272xf32> to vector<16x128xf32>
    %140 = vector.extract_strided_slice %12 {offsets = [26, 0], sizes = [1, 128], strides = [1, 1]} : vector<63x128xf32> to vector<1x128xf32>
    %141 = vector.broadcast %140 : vector<1x128xf32> to vector<16x128xf32>
    %142 = arith.mulf %139, %141 : vector<16x128xf32>
    %143 = arith.addf %123, %142 : vector<16x128xf32>
    %144 = vector.extract_strided_slice %11 {offsets = [1, 123], sizes = [16, 128], strides = [1, 1]} : vector<18x272xf32> to vector<16x128xf32>
    %145 = vector.extract_strided_slice %12 {offsets = [27, 0], sizes = [1, 128], strides = [1, 1]} : vector<63x128xf32> to vector<1x128xf32>
    %146 = vector.broadcast %145 : vector<1x128xf32> to vector<16x128xf32>
    %147 = arith.mulf %144, %146 : vector<16x128xf32>
    %148 = arith.addf %128, %147 : vector<16x128xf32>
    %149 = vector.extract_strided_slice %11 {offsets = [1, 125], sizes = [16, 128], strides = [1, 1]} : vector<18x272xf32> to vector<16x128xf32>
    %150 = vector.extract_strided_slice %12 {offsets = [28, 0], sizes = [1, 128], strides = [1, 1]} : vector<63x128xf32> to vector<1x128xf32>
    %151 = vector.broadcast %150 : vector<1x128xf32> to vector<16x128xf32>
    %152 = arith.mulf %149, %151 : vector<16x128xf32>
    %153 = arith.addf %133, %152 : vector<16x128xf32>
    %154 = vector.extract_strided_slice %11 {offsets = [1, 126], sizes = [16, 128], strides = [1, 1]} : vector<18x272xf32> to vector<16x128xf32>
    %155 = vector.extract_strided_slice %12 {offsets = [29, 0], sizes = [1, 128], strides = [1, 1]} : vector<63x128xf32> to vector<1x128xf32>
    %156 = vector.broadcast %155 : vector<1x128xf32> to vector<16x128xf32>
    %157 = arith.mulf %154, %156 : vector<16x128xf32>
    %158 = arith.addf %138, %157 : vector<16x128xf32>
    %159 = vector.extract_strided_slice %11 {offsets = [1, 127], sizes = [16, 128], strides = [1, 1]} : vector<18x272xf32> to vector<16x128xf32>
    %160 = vector.extract_strided_slice %12 {offsets = [30, 0], sizes = [1, 128], strides = [1, 1]} : vector<63x128xf32> to vector<1x128xf32>
    %161 = vector.broadcast %160 : vector<1x128xf32> to vector<16x128xf32>
    %162 = arith.mulf %159, %161 : vector<16x128xf32>
    %163 = arith.addf %143, %162 : vector<16x128xf32>
    %164 = vector.extract_strided_slice %11 {offsets = [1, 128], sizes = [16, 128], strides = [1, 1]} : vector<18x272xf32> to vector<16x128xf32>
    %165 = vector.extract_strided_slice %12 {offsets = [31, 0], sizes = [1, 128], strides = [1, 1]} : vector<63x128xf32> to vector<1x128xf32>
    %166 = vector.broadcast %165 : vector<1x128xf32> to vector<16x128xf32>
    %167 = arith.mulf %164, %166 : vector<16x128xf32>
    %168 = arith.addf %148, %167 : vector<16x128xf32>
    %169 = vector.extract_strided_slice %11 {offsets = [1, 129], sizes = [16, 128], strides = [1, 1]} : vector<18x272xf32> to vector<16x128xf32>
    %170 = vector.extract_strided_slice %12 {offsets = [32, 0], sizes = [1, 128], strides = [1, 1]} : vector<63x128xf32> to vector<1x128xf32>
    %171 = vector.broadcast %170 : vector<1x128xf32> to vector<16x128xf32>
    %172 = arith.mulf %169, %171 : vector<16x128xf32>
    %173 = arith.addf %153, %172 : vector<16x128xf32>
    %174 = vector.extract_strided_slice %11 {offsets = [1, 130], sizes = [16, 128], strides = [1, 1]} : vector<18x272xf32> to vector<16x128xf32>
    %175 = vector.extract_strided_slice %12 {offsets = [33, 0], sizes = [1, 128], strides = [1, 1]} : vector<63x128xf32> to vector<1x128xf32>
    %176 = vector.broadcast %175 : vector<1x128xf32> to vector<16x128xf32>
    %177 = arith.mulf %174, %176 : vector<16x128xf32>
    %178 = arith.addf %158, %177 : vector<16x128xf32>
    %179 = vector.extract_strided_slice %11 {offsets = [1, 131], sizes = [16, 128], strides = [1, 1]} : vector<18x272xf32> to vector<16x128xf32>
    %180 = vector.extract_strided_slice %12 {offsets = [34, 0], sizes = [1, 128], strides = [1, 1]} : vector<63x128xf32> to vector<1x128xf32>
    %181 = vector.broadcast %180 : vector<1x128xf32> to vector<16x128xf32>
    %182 = arith.mulf %179, %181 : vector<16x128xf32>
    %183 = arith.addf %163, %182 : vector<16x128xf32>
    %184 = vector.extract_strided_slice %11 {offsets = [1, 133], sizes = [16, 128], strides = [1, 1]} : vector<18x272xf32> to vector<16x128xf32>
    %185 = vector.extract_strided_slice %12 {offsets = [35, 0], sizes = [1, 128], strides = [1, 1]} : vector<63x128xf32> to vector<1x128xf32>
    %186 = vector.broadcast %185 : vector<1x128xf32> to vector<16x128xf32>
    %187 = arith.mulf %184, %186 : vector<16x128xf32>
    %188 = arith.addf %168, %187 : vector<16x128xf32>
    %189 = vector.extract_strided_slice %11 {offsets = [1, 134], sizes = [16, 128], strides = [1, 1]} : vector<18x272xf32> to vector<16x128xf32>
    %190 = vector.extract_strided_slice %12 {offsets = [36, 0], sizes = [1, 128], strides = [1, 1]} : vector<63x128xf32> to vector<1x128xf32>
    %191 = vector.broadcast %190 : vector<1x128xf32> to vector<16x128xf32>
    %192 = arith.mulf %189, %191 : vector<16x128xf32>
    %193 = arith.addf %173, %192 : vector<16x128xf32>
    %194 = vector.extract_strided_slice %11 {offsets = [1, 135], sizes = [16, 128], strides = [1, 1]} : vector<18x272xf32> to vector<16x128xf32>
    %195 = vector.extract_strided_slice %12 {offsets = [37, 0], sizes = [1, 128], strides = [1, 1]} : vector<63x128xf32> to vector<1x128xf32>
    %196 = vector.broadcast %195 : vector<1x128xf32> to vector<16x128xf32>
    %197 = arith.mulf %194, %196 : vector<16x128xf32>
    %198 = arith.addf %178, %197 : vector<16x128xf32>
    %199 = vector.extract_strided_slice %11 {offsets = [1, 136], sizes = [16, 128], strides = [1, 1]} : vector<18x272xf32> to vector<16x128xf32>
    %200 = vector.extract_strided_slice %12 {offsets = [38, 0], sizes = [1, 128], strides = [1, 1]} : vector<63x128xf32> to vector<1x128xf32>
    %201 = vector.broadcast %200 : vector<1x128xf32> to vector<16x128xf32>
    %202 = arith.mulf %199, %201 : vector<16x128xf32>
    %203 = arith.addf %183, %202 : vector<16x128xf32>
    %204 = vector.extract_strided_slice %11 {offsets = [1, 137], sizes = [16, 128], strides = [1, 1]} : vector<18x272xf32> to vector<16x128xf32>
    %205 = vector.extract_strided_slice %12 {offsets = [39, 0], sizes = [1, 128], strides = [1, 1]} : vector<63x128xf32> to vector<1x128xf32>
    %206 = vector.broadcast %205 : vector<1x128xf32> to vector<16x128xf32>
    %207 = arith.mulf %204, %206 : vector<16x128xf32>
    %208 = arith.addf %188, %207 : vector<16x128xf32>
    %209 = vector.extract_strided_slice %11 {offsets = [1, 138], sizes = [16, 128], strides = [1, 1]} : vector<18x272xf32> to vector<16x128xf32>
    %210 = vector.extract_strided_slice %12 {offsets = [40, 0], sizes = [1, 128], strides = [1, 1]} : vector<63x128xf32> to vector<1x128xf32>
    %211 = vector.broadcast %210 : vector<1x128xf32> to vector<16x128xf32>
    %212 = arith.mulf %209, %211 : vector<16x128xf32>
    %213 = arith.addf %193, %212 : vector<16x128xf32>
    %214 = vector.extract_strided_slice %11 {offsets = [1, 139], sizes = [16, 128], strides = [1, 1]} : vector<18x272xf32> to vector<16x128xf32>
    %215 = vector.extract_strided_slice %12 {offsets = [41, 0], sizes = [1, 128], strides = [1, 1]} : vector<63x128xf32> to vector<1x128xf32>
    %216 = vector.broadcast %215 : vector<1x128xf32> to vector<16x128xf32>
    %217 = arith.mulf %214, %216 : vector<16x128xf32>
    %218 = arith.addf %198, %217 : vector<16x128xf32>
    %219 = vector.extract_strided_slice %11 {offsets = [2, 117], sizes = [16, 128], strides = [1, 1]} : vector<18x272xf32> to vector<16x128xf32>
    %220 = vector.extract_strided_slice %12 {offsets = [42, 0], sizes = [1, 128], strides = [1, 1]} : vector<63x128xf32> to vector<1x128xf32>
    %221 = vector.broadcast %220 : vector<1x128xf32> to vector<16x128xf32>
    %222 = arith.mulf %219, %221 : vector<16x128xf32>
    %223 = arith.addf %203, %222 : vector<16x128xf32>
    %224 = vector.extract_strided_slice %11 {offsets = [2, 118], sizes = [16, 128], strides = [1, 1]} : vector<18x272xf32> to vector<16x128xf32>
    %225 = vector.extract_strided_slice %12 {offsets = [43, 0], sizes = [1, 128], strides = [1, 1]} : vector<63x128xf32> to vector<1x128xf32>
    %226 = vector.broadcast %225 : vector<1x128xf32> to vector<16x128xf32>
    %227 = arith.mulf %224, %226 : vector<16x128xf32>
    %228 = arith.addf %208, %227 : vector<16x128xf32>
    %229 = vector.extract_strided_slice %11 {offsets = [2, 119], sizes = [16, 128], strides = [1, 1]} : vector<18x272xf32> to vector<16x128xf32>
    %230 = vector.extract_strided_slice %12 {offsets = [44, 0], sizes = [1, 128], strides = [1, 1]} : vector<63x128xf32> to vector<1x128xf32>
    %231 = vector.broadcast %230 : vector<1x128xf32> to vector<16x128xf32>
    %232 = arith.mulf %229, %231 : vector<16x128xf32>
    %233 = arith.addf %213, %232 : vector<16x128xf32>
    %234 = vector.extract_strided_slice %11 {offsets = [2, 120], sizes = [16, 128], strides = [1, 1]} : vector<18x272xf32> to vector<16x128xf32>
    %235 = vector.extract_strided_slice %12 {offsets = [45, 0], sizes = [1, 128], strides = [1, 1]} : vector<63x128xf32> to vector<1x128xf32>
    %236 = vector.broadcast %235 : vector<1x128xf32> to vector<16x128xf32>
    %237 = arith.mulf %234, %236 : vector<16x128xf32>
    %238 = arith.addf %218, %237 : vector<16x128xf32>
    %239 = vector.extract_strided_slice %11 {offsets = [2, 121], sizes = [16, 128], strides = [1, 1]} : vector<18x272xf32> to vector<16x128xf32>
    %240 = vector.extract_strided_slice %12 {offsets = [46, 0], sizes = [1, 128], strides = [1, 1]} : vector<63x128xf32> to vector<1x128xf32>
    %241 = vector.broadcast %240 : vector<1x128xf32> to vector<16x128xf32>
    %242 = arith.mulf %239, %241 : vector<16x128xf32>
    %243 = arith.addf %223, %242 : vector<16x128xf32>
    %244 = vector.extract_strided_slice %11 {offsets = [2, 122], sizes = [16, 128], strides = [1, 1]} : vector<18x272xf32> to vector<16x128xf32>
    %245 = vector.extract_strided_slice %12 {offsets = [47, 0], sizes = [1, 128], strides = [1, 1]} : vector<63x128xf32> to vector<1x128xf32>
    %246 = vector.broadcast %245 : vector<1x128xf32> to vector<16x128xf32>
    %247 = arith.mulf %244, %246 : vector<16x128xf32>
    %248 = arith.addf %228, %247 : vector<16x128xf32>
    %249 = vector.extract_strided_slice %11 {offsets = [2, 123], sizes = [16, 128], strides = [1, 1]} : vector<18x272xf32> to vector<16x128xf32>
    %250 = vector.extract_strided_slice %12 {offsets = [48, 0], sizes = [1, 128], strides = [1, 1]} : vector<63x128xf32> to vector<1x128xf32>
    %251 = vector.broadcast %250 : vector<1x128xf32> to vector<16x128xf32>
    %252 = arith.mulf %249, %251 : vector<16x128xf32>
    %253 = arith.addf %233, %252 : vector<16x128xf32>
    %254 = vector.extract_strided_slice %11 {offsets = [2, 125], sizes = [16, 128], strides = [1, 1]} : vector<18x272xf32> to vector<16x128xf32>
    %255 = vector.extract_strided_slice %12 {offsets = [49, 0], sizes = [1, 128], strides = [1, 1]} : vector<63x128xf32> to vector<1x128xf32>
    %256 = vector.broadcast %255 : vector<1x128xf32> to vector<16x128xf32>
    %257 = arith.mulf %254, %256 : vector<16x128xf32>
    %258 = arith.addf %238, %257 : vector<16x128xf32>
    %259 = vector.extract_strided_slice %11 {offsets = [2, 126], sizes = [16, 128], strides = [1, 1]} : vector<18x272xf32> to vector<16x128xf32>
    %260 = vector.extract_strided_slice %12 {offsets = [50, 0], sizes = [1, 128], strides = [1, 1]} : vector<63x128xf32> to vector<1x128xf32>
    %261 = vector.broadcast %260 : vector<1x128xf32> to vector<16x128xf32>
    %262 = arith.mulf %259, %261 : vector<16x128xf32>
    %263 = arith.addf %243, %262 : vector<16x128xf32>
    %264 = vector.extract_strided_slice %11 {offsets = [2, 127], sizes = [16, 128], strides = [1, 1]} : vector<18x272xf32> to vector<16x128xf32>
    %265 = vector.extract_strided_slice %12 {offsets = [51, 0], sizes = [1, 128], strides = [1, 1]} : vector<63x128xf32> to vector<1x128xf32>
    %266 = vector.broadcast %265 : vector<1x128xf32> to vector<16x128xf32>
    %267 = arith.mulf %264, %266 : vector<16x128xf32>
    %268 = arith.addf %248, %267 : vector<16x128xf32>
    %269 = vector.extract_strided_slice %11 {offsets = [2, 128], sizes = [16, 128], strides = [1, 1]} : vector<18x272xf32> to vector<16x128xf32>
    %270 = vector.extract_strided_slice %12 {offsets = [52, 0], sizes = [1, 128], strides = [1, 1]} : vector<63x128xf32> to vector<1x128xf32>
    %271 = vector.broadcast %270 : vector<1x128xf32> to vector<16x128xf32>
    %272 = arith.mulf %269, %271 : vector<16x128xf32>
    %273 = arith.addf %253, %272 : vector<16x128xf32>
    %274 = vector.extract_strided_slice %11 {offsets = [2, 129], sizes = [16, 128], strides = [1, 1]} : vector<18x272xf32> to vector<16x128xf32>
    %275 = vector.extract_strided_slice %12 {offsets = [53, 0], sizes = [1, 128], strides = [1, 1]} : vector<63x128xf32> to vector<1x128xf32>
    %276 = vector.broadcast %275 : vector<1x128xf32> to vector<16x128xf32>
    %277 = arith.mulf %274, %276 : vector<16x128xf32>
    %278 = arith.addf %258, %277 : vector<16x128xf32>
    %279 = vector.extract_strided_slice %11 {offsets = [2, 130], sizes = [16, 128], strides = [1, 1]} : vector<18x272xf32> to vector<16x128xf32>
    %280 = vector.extract_strided_slice %12 {offsets = [54, 0], sizes = [1, 128], strides = [1, 1]} : vector<63x128xf32> to vector<1x128xf32>
    %281 = vector.broadcast %280 : vector<1x128xf32> to vector<16x128xf32>
    %282 = arith.mulf %279, %281 : vector<16x128xf32>
    %283 = arith.addf %263, %282 : vector<16x128xf32>
    %284 = vector.extract_strided_slice %11 {offsets = [2, 131], sizes = [16, 128], strides = [1, 1]} : vector<18x272xf32> to vector<16x128xf32>
    %285 = vector.extract_strided_slice %12 {offsets = [55, 0], sizes = [1, 128], strides = [1, 1]} : vector<63x128xf32> to vector<1x128xf32>
    %286 = vector.broadcast %285 : vector<1x128xf32> to vector<16x128xf32>
    %287 = arith.mulf %284, %286 : vector<16x128xf32>
    %288 = arith.addf %268, %287 : vector<16x128xf32>
    %289 = vector.extract_strided_slice %11 {offsets = [2, 133], sizes = [16, 128], strides = [1, 1]} : vector<18x272xf32> to vector<16x128xf32>
    %290 = vector.extract_strided_slice %12 {offsets = [56, 0], sizes = [1, 128], strides = [1, 1]} : vector<63x128xf32> to vector<1x128xf32>
    %291 = vector.broadcast %290 : vector<1x128xf32> to vector<16x128xf32>
    %292 = arith.mulf %289, %291 : vector<16x128xf32>
    %293 = arith.addf %273, %292 : vector<16x128xf32>
    %294 = vector.extract_strided_slice %11 {offsets = [2, 134], sizes = [16, 128], strides = [1, 1]} : vector<18x272xf32> to vector<16x128xf32>
    %295 = vector.extract_strided_slice %12 {offsets = [57, 0], sizes = [1, 128], strides = [1, 1]} : vector<63x128xf32> to vector<1x128xf32>
    %296 = vector.broadcast %295 : vector<1x128xf32> to vector<16x128xf32>
    %297 = arith.mulf %294, %296 : vector<16x128xf32>
    %298 = arith.addf %278, %297 : vector<16x128xf32>
    %299 = vector.extract_strided_slice %11 {offsets = [2, 135], sizes = [16, 128], strides = [1, 1]} : vector<18x272xf32> to vector<16x128xf32>
    %300 = vector.extract_strided_slice %12 {offsets = [58, 0], sizes = [1, 128], strides = [1, 1]} : vector<63x128xf32> to vector<1x128xf32>
    %301 = vector.broadcast %300 : vector<1x128xf32> to vector<16x128xf32>
    %302 = arith.mulf %299, %301 : vector<16x128xf32>
    %303 = arith.addf %283, %302 : vector<16x128xf32>
    %304 = vector.extract_strided_slice %11 {offsets = [2, 136], sizes = [16, 128], strides = [1, 1]} : vector<18x272xf32> to vector<16x128xf32>
    %305 = vector.extract_strided_slice %12 {offsets = [59, 0], sizes = [1, 128], strides = [1, 1]} : vector<63x128xf32> to vector<1x128xf32>
    %306 = vector.broadcast %305 : vector<1x128xf32> to vector<16x128xf32>
    %307 = arith.mulf %304, %306 : vector<16x128xf32>
    %308 = arith.addf %288, %307 : vector<16x128xf32>
    %309 = vector.extract_strided_slice %11 {offsets = [2, 137], sizes = [16, 128], strides = [1, 1]} : vector<18x272xf32> to vector<16x128xf32>
    %310 = vector.extract_strided_slice %12 {offsets = [60, 0], sizes = [1, 128], strides = [1, 1]} : vector<63x128xf32> to vector<1x128xf32>
    %311 = vector.broadcast %310 : vector<1x128xf32> to vector<16x128xf32>
    %312 = arith.mulf %309, %311 : vector<16x128xf32>
    %313 = arith.addf %293, %312 : vector<16x128xf32>
    %314 = vector.extract_strided_slice %11 {offsets = [2, 138], sizes = [16, 128], strides = [1, 1]} : vector<18x272xf32> to vector<16x128xf32>
    %315 = vector.extract_strided_slice %12 {offsets = [61, 0], sizes = [1, 128], strides = [1, 1]} : vector<63x128xf32> to vector<1x128xf32>
    %316 = vector.broadcast %315 : vector<1x128xf32> to vector<16x128xf32>
    %317 = arith.mulf %314, %316 : vector<16x128xf32>
    %318 = arith.addf %298, %317 : vector<16x128xf32>
    %319 = vector.extract_strided_slice %11 {offsets = [2, 139], sizes = [16, 128], strides = [1, 1]} : vector<18x272xf32> to vector<16x128xf32>
    %320 = vector.extract_strided_slice %12 {offsets = [62, 0], sizes = [1, 128], strides = [1, 1]} : vector<63x128xf32> to vector<1x128xf32>
    %321 = vector.broadcast %320 : vector<1x128xf32> to vector<16x128xf32>
    %322 = arith.mulf %319, %321 : vector<16x128xf32>
    %323 = arith.addf %303, %322 : vector<16x128xf32>
    %324 = arith.addf %313, %318 : vector<16x128xf32>
    %325 = arith.addf %323, %308 : vector<16x128xf32>
    %326 = arith.addf %324, %325 : vector<16x128xf32>
    %c0_14 = arith.constant 0 : index
    %c0_15 = arith.constant 0 : index
    %327 = vector.load %arg3[%c0_14, %c0_15] : memref<1x128xf32, #tpu.memory_space<vmem>>, vector<1x128xf32>
    %328 = vector.broadcast %327 : vector<1x128xf32> to vector<16x128xf32>
    %329 = arith.addf %326, %328 : vector<16x128xf32>
    %cst_16 = arith.constant 0.000000e+00 : f32
    %330 = vector.broadcast %cst_16 : f32 to vector<16x128xf32>
    %331 = arith.maximumf %329, %330 : vector<16x128xf32>
    %cst_17 = arith.constant 0.000000e+00 : f32
    %332 = vector.broadcast %cst_17 : f32 to vector<1x272xf32>
    %c0_18 = arith.constant 0 : index
    %c0_19 = arith.constant 0 : index
    %333 = vector.load %arg8[%c0_18, %c0_19] : memref<18x272xf32, #tpu.memory_space<vmem>>, vector<1x272xf32>
    tpu.vector_store %arg8[%c0_18, %c0_19], %332 {strides = array<i32>} : memref<18x272xf32, #tpu.memory_space<vmem>>, vector<1x272xf32>,
    %cst_20 = arith.constant 0.000000e+00 : f32
    %334 = vector.broadcast %cst_20 : f32 to vector<1x272xf32>
    %c17_21 = arith.constant 17 : index
    %c0_22 = arith.constant 0 : index
    %335 = vector.load %arg8[%c17_21, %c0_22] : memref<18x272xf32, #tpu.memory_space<vmem>>, vector<1x272xf32>
    tpu.vector_store %arg8[%c17_21, %c0_22], %334 {strides = array<i32>} : memref<18x272xf32, #tpu.memory_space<vmem>>, vector<1x272xf32>,
    %cst_23 = arith.constant 0.000000e+00 : f32
    %336 = vector.broadcast %cst_23 : f32 to vector<16x16xf32>
    %c1_24 = arith.constant 1 : index
    %c112_25 = arith.constant 112 : index
    %337 = vector.load %arg8[%c1_24, %c112_25] : memref<18x272xf32, #tpu.memory_space<vmem>>, vector<16x16xf32>
    tpu.vector_store %arg8[%c1_24, %c112_25], %336 {strides = array<i32>} : memref<18x272xf32, #tpu.memory_space<vmem>>, vector<16x16xf32>,
    %cst_26 = arith.constant 0.000000e+00 : f32
    %338 = vector.broadcast %cst_26 : f32 to vector<16x16xf32>
    %c1_27 = arith.constant 1 : index
    %c256_28 = arith.constant 256 : index
    %339 = vector.load %arg8[%c1_27, %c256_28] : memref<18x272xf32, #tpu.memory_space<vmem>>, vector<16x16xf32>
    tpu.vector_store %arg8[%c1_27, %c256_28], %338 {strides = array<i32>} : memref<18x272xf32, #tpu.memory_space<vmem>>, vector<16x16xf32>,
    %c1_29 = arith.constant 1 : index
    %c128_30 = arith.constant 128 : index
    %340 = vector.load %arg8[%c1_29, %c128_30] : memref<18x272xf32, #tpu.memory_space<vmem>>, vector<16x128xf32>
    tpu.vector_store %arg8[%c1_29, %c128_30], %331 {strides = array<i32>} : memref<18x272xf32, #tpu.memory_space<vmem>>, vector<16x128xf32>,
    %c0_31 = arith.constant 0 : index
    %c0_32 = arith.constant 0 : index
    %341 = vector.load %arg8[%c0_31, %c0_32] : memref<18x272xf32, #tpu.memory_space<vmem>>, vector<18x272xf32>
    %c0_33 = arith.constant 0 : index
    %c0_34 = arith.constant 0 : index
    %342 = vector.load %arg4[%c0_33, %c0_34] : memref<63x128xf32, #tpu.memory_space<vmem>>, vector<63x128xf32>
    %343 = vector.extract_strided_slice %341 {offsets = [0, 117], sizes = [16, 128], strides = [1, 1]} : vector<18x272xf32> to vector<16x128xf32>
    %344 = vector.extract_strided_slice %342 {offsets = [0, 0], sizes = [1, 128], strides = [1, 1]} : vector<63x128xf32> to vector<1x128xf32>
    %345 = vector.broadcast %344 : vector<1x128xf32> to vector<16x128xf32>
    %346 = arith.mulf %343, %345 : vector<16x128xf32>
    %347 = vector.extract_strided_slice %341 {offsets = [0, 118], sizes = [16, 128], strides = [1, 1]} : vector<18x272xf32> to vector<16x128xf32>
    %348 = vector.extract_strided_slice %342 {offsets = [1, 0], sizes = [1, 128], strides = [1, 1]} : vector<63x128xf32> to vector<1x128xf32>
    %349 = vector.broadcast %348 : vector<1x128xf32> to vector<16x128xf32>
    %350 = arith.mulf %347, %349 : vector<16x128xf32>
    %351 = vector.extract_strided_slice %341 {offsets = [0, 119], sizes = [16, 128], strides = [1, 1]} : vector<18x272xf32> to vector<16x128xf32>
    %352 = vector.extract_strided_slice %342 {offsets = [2, 0], sizes = [1, 128], strides = [1, 1]} : vector<63x128xf32> to vector<1x128xf32>
    %353 = vector.broadcast %352 : vector<1x128xf32> to vector<16x128xf32>
    %354 = arith.mulf %351, %353 : vector<16x128xf32>
    %355 = vector.extract_strided_slice %341 {offsets = [0, 120], sizes = [16, 128], strides = [1, 1]} : vector<18x272xf32> to vector<16x128xf32>
    %356 = vector.extract_strided_slice %342 {offsets = [3, 0], sizes = [1, 128], strides = [1, 1]} : vector<63x128xf32> to vector<1x128xf32>
    %357 = vector.broadcast %356 : vector<1x128xf32> to vector<16x128xf32>
    %358 = arith.mulf %355, %357 : vector<16x128xf32>
    %359 = vector.extract_strided_slice %341 {offsets = [0, 121], sizes = [16, 128], strides = [1, 1]} : vector<18x272xf32> to vector<16x128xf32>
    %360 = vector.extract_strided_slice %342 {offsets = [4, 0], sizes = [1, 128], strides = [1, 1]} : vector<63x128xf32> to vector<1x128xf32>
    %361 = vector.broadcast %360 : vector<1x128xf32> to vector<16x128xf32>
    %362 = arith.mulf %359, %361 : vector<16x128xf32>
    %363 = arith.addf %346, %362 : vector<16x128xf32>
    %364 = vector.extract_strided_slice %341 {offsets = [0, 122], sizes = [16, 128], strides = [1, 1]} : vector<18x272xf32> to vector<16x128xf32>
    %365 = vector.extract_strided_slice %342 {offsets = [5, 0], sizes = [1, 128], strides = [1, 1]} : vector<63x128xf32> to vector<1x128xf32>
    %366 = vector.broadcast %365 : vector<1x128xf32> to vector<16x128xf32>
    %367 = arith.mulf %364, %366 : vector<16x128xf32>
    %368 = arith.addf %350, %367 : vector<16x128xf32>
    %369 = vector.extract_strided_slice %341 {offsets = [0, 123], sizes = [16, 128], strides = [1, 1]} : vector<18x272xf32> to vector<16x128xf32>
    %370 = vector.extract_strided_slice %342 {offsets = [6, 0], sizes = [1, 128], strides = [1, 1]} : vector<63x128xf32> to vector<1x128xf32>
    %371 = vector.broadcast %370 : vector<1x128xf32> to vector<16x128xf32>
    %372 = arith.mulf %369, %371 : vector<16x128xf32>
    %373 = arith.addf %354, %372 : vector<16x128xf32>
    %374 = vector.extract_strided_slice %341 {offsets = [0, 125], sizes = [16, 128], strides = [1, 1]} : vector<18x272xf32> to vector<16x128xf32>
    %375 = vector.extract_strided_slice %342 {offsets = [7, 0], sizes = [1, 128], strides = [1, 1]} : vector<63x128xf32> to vector<1x128xf32>
    %376 = vector.broadcast %375 : vector<1x128xf32> to vector<16x128xf32>
    %377 = arith.mulf %374, %376 : vector<16x128xf32>
    %378 = arith.addf %358, %377 : vector<16x128xf32>
    %379 = vector.extract_strided_slice %341 {offsets = [0, 126], sizes = [16, 128], strides = [1, 1]} : vector<18x272xf32> to vector<16x128xf32>
    %380 = vector.extract_strided_slice %342 {offsets = [8, 0], sizes = [1, 128], strides = [1, 1]} : vector<63x128xf32> to vector<1x128xf32>
    %381 = vector.broadcast %380 : vector<1x128xf32> to vector<16x128xf32>
    %382 = arith.mulf %379, %381 : vector<16x128xf32>
    %383 = arith.addf %363, %382 : vector<16x128xf32>
    %384 = vector.extract_strided_slice %341 {offsets = [0, 127], sizes = [16, 128], strides = [1, 1]} : vector<18x272xf32> to vector<16x128xf32>
    %385 = vector.extract_strided_slice %342 {offsets = [9, 0], sizes = [1, 128], strides = [1, 1]} : vector<63x128xf32> to vector<1x128xf32>
    %386 = vector.broadcast %385 : vector<1x128xf32> to vector<16x128xf32>
    %387 = arith.mulf %384, %386 : vector<16x128xf32>
    %388 = arith.addf %368, %387 : vector<16x128xf32>
    %389 = vector.extract_strided_slice %341 {offsets = [0, 128], sizes = [16, 128], strides = [1, 1]} : vector<18x272xf32> to vector<16x128xf32>
    %390 = vector.extract_strided_slice %342 {offsets = [10, 0], sizes = [1, 128], strides = [1, 1]} : vector<63x128xf32> to vector<1x128xf32>
    %391 = vector.broadcast %390 : vector<1x128xf32> to vector<16x128xf32>
    %392 = arith.mulf %389, %391 : vector<16x128xf32>
    %393 = arith.addf %373, %392 : vector<16x128xf32>
    %394 = vector.extract_strided_slice %341 {offsets = [0, 129], sizes = [16, 128], strides = [1, 1]} : vector<18x272xf32> to vector<16x128xf32>
    %395 = vector.extract_strided_slice %342 {offsets = [11, 0], sizes = [1, 128], strides = [1, 1]} : vector<63x128xf32> to vector<1x128xf32>
    %396 = vector.broadcast %395 : vector<1x128xf32> to vector<16x128xf32>
    %397 = arith.mulf %394, %396 : vector<16x128xf32>
    %398 = arith.addf %378, %397 : vector<16x128xf32>
    %399 = vector.extract_strided_slice %341 {offsets = [0, 130], sizes = [16, 128], strides = [1, 1]} : vector<18x272xf32> to vector<16x128xf32>
    %400 = vector.extract_strided_slice %342 {offsets = [12, 0], sizes = [1, 128], strides = [1, 1]} : vector<63x128xf32> to vector<1x128xf32>
    %401 = vector.broadcast %400 : vector<1x128xf32> to vector<16x128xf32>
    %402 = arith.mulf %399, %401 : vector<16x128xf32>
    %403 = arith.addf %383, %402 : vector<16x128xf32>
    %404 = vector.extract_strided_slice %341 {offsets = [0, 131], sizes = [16, 128], strides = [1, 1]} : vector<18x272xf32> to vector<16x128xf32>
    %405 = vector.extract_strided_slice %342 {offsets = [13, 0], sizes = [1, 128], strides = [1, 1]} : vector<63x128xf32> to vector<1x128xf32>
    %406 = vector.broadcast %405 : vector<1x128xf32> to vector<16x128xf32>
    %407 = arith.mulf %404, %406 : vector<16x128xf32>
    %408 = arith.addf %388, %407 : vector<16x128xf32>
    %409 = vector.extract_strided_slice %341 {offsets = [0, 133], sizes = [16, 128], strides = [1, 1]} : vector<18x272xf32> to vector<16x128xf32>
    %410 = vector.extract_strided_slice %342 {offsets = [14, 0], sizes = [1, 128], strides = [1, 1]} : vector<63x128xf32> to vector<1x128xf32>
    %411 = vector.broadcast %410 : vector<1x128xf32> to vector<16x128xf32>
    %412 = arith.mulf %409, %411 : vector<16x128xf32>
    %413 = arith.addf %393, %412 : vector<16x128xf32>
    %414 = vector.extract_strided_slice %341 {offsets = [0, 134], sizes = [16, 128], strides = [1, 1]} : vector<18x272xf32> to vector<16x128xf32>
    %415 = vector.extract_strided_slice %342 {offsets = [15, 0], sizes = [1, 128], strides = [1, 1]} : vector<63x128xf32> to vector<1x128xf32>
    %416 = vector.broadcast %415 : vector<1x128xf32> to vector<16x128xf32>
    %417 = arith.mulf %414, %416 : vector<16x128xf32>
    %418 = arith.addf %398, %417 : vector<16x128xf32>
    %419 = vector.extract_strided_slice %341 {offsets = [0, 135], sizes = [16, 128], strides = [1, 1]} : vector<18x272xf32> to vector<16x128xf32>
    %420 = vector.extract_strided_slice %342 {offsets = [16, 0], sizes = [1, 128], strides = [1, 1]} : vector<63x128xf32> to vector<1x128xf32>
    %421 = vector.broadcast %420 : vector<1x128xf32> to vector<16x128xf32>
    %422 = arith.mulf %419, %421 : vector<16x128xf32>
    %423 = arith.addf %403, %422 : vector<16x128xf32>
    %424 = vector.extract_strided_slice %341 {offsets = [0, 136], sizes = [16, 128], strides = [1, 1]} : vector<18x272xf32> to vector<16x128xf32>
    %425 = vector.extract_strided_slice %342 {offsets = [17, 0], sizes = [1, 128], strides = [1, 1]} : vector<63x128xf32> to vector<1x128xf32>
    %426 = vector.broadcast %425 : vector<1x128xf32> to vector<16x128xf32>
    %427 = arith.mulf %424, %426 : vector<16x128xf32>
    %428 = arith.addf %408, %427 : vector<16x128xf32>
    %429 = vector.extract_strided_slice %341 {offsets = [0, 137], sizes = [16, 128], strides = [1, 1]} : vector<18x272xf32> to vector<16x128xf32>
    %430 = vector.extract_strided_slice %342 {offsets = [18, 0], sizes = [1, 128], strides = [1, 1]} : vector<63x128xf32> to vector<1x128xf32>
    %431 = vector.broadcast %430 : vector<1x128xf32> to vector<16x128xf32>
    %432 = arith.mulf %429, %431 : vector<16x128xf32>
    %433 = arith.addf %413, %432 : vector<16x128xf32>
    %434 = vector.extract_strided_slice %341 {offsets = [0, 138], sizes = [16, 128], strides = [1, 1]} : vector<18x272xf32> to vector<16x128xf32>
    %435 = vector.extract_strided_slice %342 {offsets = [19, 0], sizes = [1, 128], strides = [1, 1]} : vector<63x128xf32> to vector<1x128xf32>
    %436 = vector.broadcast %435 : vector<1x128xf32> to vector<16x128xf32>
    %437 = arith.mulf %434, %436 : vector<16x128xf32>
    %438 = arith.addf %418, %437 : vector<16x128xf32>
    %439 = vector.extract_strided_slice %341 {offsets = [0, 139], sizes = [16, 128], strides = [1, 1]} : vector<18x272xf32> to vector<16x128xf32>
    %440 = vector.extract_strided_slice %342 {offsets = [20, 0], sizes = [1, 128], strides = [1, 1]} : vector<63x128xf32> to vector<1x128xf32>
    %441 = vector.broadcast %440 : vector<1x128xf32> to vector<16x128xf32>
    %442 = arith.mulf %439, %441 : vector<16x128xf32>
    %443 = arith.addf %423, %442 : vector<16x128xf32>
    %444 = vector.extract_strided_slice %341 {offsets = [1, 117], sizes = [16, 128], strides = [1, 1]} : vector<18x272xf32> to vector<16x128xf32>
    %445 = vector.extract_strided_slice %342 {offsets = [21, 0], sizes = [1, 128], strides = [1, 1]} : vector<63x128xf32> to vector<1x128xf32>
    %446 = vector.broadcast %445 : vector<1x128xf32> to vector<16x128xf32>
    %447 = arith.mulf %444, %446 : vector<16x128xf32>
    %448 = arith.addf %428, %447 : vector<16x128xf32>
    %449 = vector.extract_strided_slice %341 {offsets = [1, 118], sizes = [16, 128], strides = [1, 1]} : vector<18x272xf32> to vector<16x128xf32>
    %450 = vector.extract_strided_slice %342 {offsets = [22, 0], sizes = [1, 128], strides = [1, 1]} : vector<63x128xf32> to vector<1x128xf32>
    %451 = vector.broadcast %450 : vector<1x128xf32> to vector<16x128xf32>
    %452 = arith.mulf %449, %451 : vector<16x128xf32>
    %453 = arith.addf %433, %452 : vector<16x128xf32>
    %454 = vector.extract_strided_slice %341 {offsets = [1, 119], sizes = [16, 128], strides = [1, 1]} : vector<18x272xf32> to vector<16x128xf32>
    %455 = vector.extract_strided_slice %342 {offsets = [23, 0], sizes = [1, 128], strides = [1, 1]} : vector<63x128xf32> to vector<1x128xf32>
    %456 = vector.broadcast %455 : vector<1x128xf32> to vector<16x128xf32>
    %457 = arith.mulf %454, %456 : vector<16x128xf32>
    %458 = arith.addf %438, %457 : vector<16x128xf32>
    %459 = vector.extract_strided_slice %341 {offsets = [1, 120], sizes = [16, 128], strides = [1, 1]} : vector<18x272xf32> to vector<16x128xf32>
    %460 = vector.extract_strided_slice %342 {offsets = [24, 0], sizes = [1, 128], strides = [1, 1]} : vector<63x128xf32> to vector<1x128xf32>
    %461 = vector.broadcast %460 : vector<1x128xf32> to vector<16x128xf32>
    %462 = arith.mulf %459, %461 : vector<16x128xf32>
    %463 = arith.addf %443, %462 : vector<16x128xf32>
    %464 = vector.extract_strided_slice %341 {offsets = [1, 121], sizes = [16, 128], strides = [1, 1]} : vector<18x272xf32> to vector<16x128xf32>
    %465 = vector.extract_strided_slice %342 {offsets = [25, 0], sizes = [1, 128], strides = [1, 1]} : vector<63x128xf32> to vector<1x128xf32>
    %466 = vector.broadcast %465 : vector<1x128xf32> to vector<16x128xf32>
    %467 = arith.mulf %464, %466 : vector<16x128xf32>
    %468 = arith.addf %448, %467 : vector<16x128xf32>
    %469 = vector.extract_strided_slice %341 {offsets = [1, 122], sizes = [16, 128], strides = [1, 1]} : vector<18x272xf32> to vector<16x128xf32>
    %470 = vector.extract_strided_slice %342 {offsets = [26, 0], sizes = [1, 128], strides = [1, 1]} : vector<63x128xf32> to vector<1x128xf32>
    %471 = vector.broadcast %470 : vector<1x128xf32> to vector<16x128xf32>
    %472 = arith.mulf %469, %471 : vector<16x128xf32>
    %473 = arith.addf %453, %472 : vector<16x128xf32>
    %474 = vector.extract_strided_slice %341 {offsets = [1, 123], sizes = [16, 128], strides = [1, 1]} : vector<18x272xf32> to vector<16x128xf32>
    %475 = vector.extract_strided_slice %342 {offsets = [27, 0], sizes = [1, 128], strides = [1, 1]} : vector<63x128xf32> to vector<1x128xf32>
    %476 = vector.broadcast %475 : vector<1x128xf32> to vector<16x128xf32>
    %477 = arith.mulf %474, %476 : vector<16x128xf32>
    %478 = arith.addf %458, %477 : vector<16x128xf32>
    %479 = vector.extract_strided_slice %341 {offsets = [1, 125], sizes = [16, 128], strides = [1, 1]} : vector<18x272xf32> to vector<16x128xf32>
    %480 = vector.extract_strided_slice %342 {offsets = [28, 0], sizes = [1, 128], strides = [1, 1]} : vector<63x128xf32> to vector<1x128xf32>
    %481 = vector.broadcast %480 : vector<1x128xf32> to vector<16x128xf32>
    %482 = arith.mulf %479, %481 : vector<16x128xf32>
    %483 = arith.addf %463, %482 : vector<16x128xf32>
    %484 = vector.extract_strided_slice %341 {offsets = [1, 126], sizes = [16, 128], strides = [1, 1]} : vector<18x272xf32> to vector<16x128xf32>
    %485 = vector.extract_strided_slice %342 {offsets = [29, 0], sizes = [1, 128], strides = [1, 1]} : vector<63x128xf32> to vector<1x128xf32>
    %486 = vector.broadcast %485 : vector<1x128xf32> to vector<16x128xf32>
    %487 = arith.mulf %484, %486 : vector<16x128xf32>
    %488 = arith.addf %468, %487 : vector<16x128xf32>
    %489 = vector.extract_strided_slice %341 {offsets = [1, 127], sizes = [16, 128], strides = [1, 1]} : vector<18x272xf32> to vector<16x128xf32>
    %490 = vector.extract_strided_slice %342 {offsets = [30, 0], sizes = [1, 128], strides = [1, 1]} : vector<63x128xf32> to vector<1x128xf32>
    %491 = vector.broadcast %490 : vector<1x128xf32> to vector<16x128xf32>
    %492 = arith.mulf %489, %491 : vector<16x128xf32>
    %493 = arith.addf %473, %492 : vector<16x128xf32>
    %494 = vector.extract_strided_slice %341 {offsets = [1, 128], sizes = [16, 128], strides = [1, 1]} : vector<18x272xf32> to vector<16x128xf32>
    %495 = vector.extract_strided_slice %342 {offsets = [31, 0], sizes = [1, 128], strides = [1, 1]} : vector<63x128xf32> to vector<1x128xf32>
    %496 = vector.broadcast %495 : vector<1x128xf32> to vector<16x128xf32>
    %497 = arith.mulf %494, %496 : vector<16x128xf32>
    %498 = arith.addf %478, %497 : vector<16x128xf32>
    %499 = vector.extract_strided_slice %341 {offsets = [1, 129], sizes = [16, 128], strides = [1, 1]} : vector<18x272xf32> to vector<16x128xf32>
    %500 = vector.extract_strided_slice %342 {offsets = [32, 0], sizes = [1, 128], strides = [1, 1]} : vector<63x128xf32> to vector<1x128xf32>
    %501 = vector.broadcast %500 : vector<1x128xf32> to vector<16x128xf32>
    %502 = arith.mulf %499, %501 : vector<16x128xf32>
    %503 = arith.addf %483, %502 : vector<16x128xf32>
    %504 = vector.extract_strided_slice %341 {offsets = [1, 130], sizes = [16, 128], strides = [1, 1]} : vector<18x272xf32> to vector<16x128xf32>
    %505 = vector.extract_strided_slice %342 {offsets = [33, 0], sizes = [1, 128], strides = [1, 1]} : vector<63x128xf32> to vector<1x128xf32>
    %506 = vector.broadcast %505 : vector<1x128xf32> to vector<16x128xf32>
    %507 = arith.mulf %504, %506 : vector<16x128xf32>
    %508 = arith.addf %488, %507 : vector<16x128xf32>
    %509 = vector.extract_strided_slice %341 {offsets = [1, 131], sizes = [16, 128], strides = [1, 1]} : vector<18x272xf32> to vector<16x128xf32>
    %510 = vector.extract_strided_slice %342 {offsets = [34, 0], sizes = [1, 128], strides = [1, 1]} : vector<63x128xf32> to vector<1x128xf32>
    %511 = vector.broadcast %510 : vector<1x128xf32> to vector<16x128xf32>
    %512 = arith.mulf %509, %511 : vector<16x128xf32>
    %513 = arith.addf %493, %512 : vector<16x128xf32>
    %514 = vector.extract_strided_slice %341 {offsets = [1, 133], sizes = [16, 128], strides = [1, 1]} : vector<18x272xf32> to vector<16x128xf32>
    %515 = vector.extract_strided_slice %342 {offsets = [35, 0], sizes = [1, 128], strides = [1, 1]} : vector<63x128xf32> to vector<1x128xf32>
    %516 = vector.broadcast %515 : vector<1x128xf32> to vector<16x128xf32>
    %517 = arith.mulf %514, %516 : vector<16x128xf32>
    %518 = arith.addf %498, %517 : vector<16x128xf32>
    %519 = vector.extract_strided_slice %341 {offsets = [1, 134], sizes = [16, 128], strides = [1, 1]} : vector<18x272xf32> to vector<16x128xf32>
    %520 = vector.extract_strided_slice %342 {offsets = [36, 0], sizes = [1, 128], strides = [1, 1]} : vector<63x128xf32> to vector<1x128xf32>
    %521 = vector.broadcast %520 : vector<1x128xf32> to vector<16x128xf32>
    %522 = arith.mulf %519, %521 : vector<16x128xf32>
    %523 = arith.addf %503, %522 : vector<16x128xf32>
    %524 = vector.extract_strided_slice %341 {offsets = [1, 135], sizes = [16, 128], strides = [1, 1]} : vector<18x272xf32> to vector<16x128xf32>
    %525 = vector.extract_strided_slice %342 {offsets = [37, 0], sizes = [1, 128], strides = [1, 1]} : vector<63x128xf32> to vector<1x128xf32>
    %526 = vector.broadcast %525 : vector<1x128xf32> to vector<16x128xf32>
    %527 = arith.mulf %524, %526 : vector<16x128xf32>
    %528 = arith.addf %508, %527 : vector<16x128xf32>
    %529 = vector.extract_strided_slice %341 {offsets = [1, 136], sizes = [16, 128], strides = [1, 1]} : vector<18x272xf32> to vector<16x128xf32>
    %530 = vector.extract_strided_slice %342 {offsets = [38, 0], sizes = [1, 128], strides = [1, 1]} : vector<63x128xf32> to vector<1x128xf32>
    %531 = vector.broadcast %530 : vector<1x128xf32> to vector<16x128xf32>
    %532 = arith.mulf %529, %531 : vector<16x128xf32>
    %533 = arith.addf %513, %532 : vector<16x128xf32>
    %534 = vector.extract_strided_slice %341 {offsets = [1, 137], sizes = [16, 128], strides = [1, 1]} : vector<18x272xf32> to vector<16x128xf32>
    %535 = vector.extract_strided_slice %342 {offsets = [39, 0], sizes = [1, 128], strides = [1, 1]} : vector<63x128xf32> to vector<1x128xf32>
    %536 = vector.broadcast %535 : vector<1x128xf32> to vector<16x128xf32>
    %537 = arith.mulf %534, %536 : vector<16x128xf32>
    %538 = arith.addf %518, %537 : vector<16x128xf32>
    %539 = vector.extract_strided_slice %341 {offsets = [1, 138], sizes = [16, 128], strides = [1, 1]} : vector<18x272xf32> to vector<16x128xf32>
    %540 = vector.extract_strided_slice %342 {offsets = [40, 0], sizes = [1, 128], strides = [1, 1]} : vector<63x128xf32> to vector<1x128xf32>
    %541 = vector.broadcast %540 : vector<1x128xf32> to vector<16x128xf32>
    %542 = arith.mulf %539, %541 : vector<16x128xf32>
    %543 = arith.addf %523, %542 : vector<16x128xf32>
    %544 = vector.extract_strided_slice %341 {offsets = [1, 139], sizes = [16, 128], strides = [1, 1]} : vector<18x272xf32> to vector<16x128xf32>
    %545 = vector.extract_strided_slice %342 {offsets = [41, 0], sizes = [1, 128], strides = [1, 1]} : vector<63x128xf32> to vector<1x128xf32>
    %546 = vector.broadcast %545 : vector<1x128xf32> to vector<16x128xf32>
    %547 = arith.mulf %544, %546 : vector<16x128xf32>
    %548 = arith.addf %528, %547 : vector<16x128xf32>
    %549 = vector.extract_strided_slice %341 {offsets = [2, 117], sizes = [16, 128], strides = [1, 1]} : vector<18x272xf32> to vector<16x128xf32>
    %550 = vector.extract_strided_slice %342 {offsets = [42, 0], sizes = [1, 128], strides = [1, 1]} : vector<63x128xf32> to vector<1x128xf32>
    %551 = vector.broadcast %550 : vector<1x128xf32> to vector<16x128xf32>
    %552 = arith.mulf %549, %551 : vector<16x128xf32>
    %553 = arith.addf %533, %552 : vector<16x128xf32>
    %554 = vector.extract_strided_slice %341 {offsets = [2, 118], sizes = [16, 128], strides = [1, 1]} : vector<18x272xf32> to vector<16x128xf32>
    %555 = vector.extract_strided_slice %342 {offsets = [43, 0], sizes = [1, 128], strides = [1, 1]} : vector<63x128xf32> to vector<1x128xf32>
    %556 = vector.broadcast %555 : vector<1x128xf32> to vector<16x128xf32>
    %557 = arith.mulf %554, %556 : vector<16x128xf32>
    %558 = arith.addf %538, %557 : vector<16x128xf32>
    %559 = vector.extract_strided_slice %341 {offsets = [2, 119], sizes = [16, 128], strides = [1, 1]} : vector<18x272xf32> to vector<16x128xf32>
    %560 = vector.extract_strided_slice %342 {offsets = [44, 0], sizes = [1, 128], strides = [1, 1]} : vector<63x128xf32> to vector<1x128xf32>
    %561 = vector.broadcast %560 : vector<1x128xf32> to vector<16x128xf32>
    %562 = arith.mulf %559, %561 : vector<16x128xf32>
    %563 = arith.addf %543, %562 : vector<16x128xf32>
    %564 = vector.extract_strided_slice %341 {offsets = [2, 120], sizes = [16, 128], strides = [1, 1]} : vector<18x272xf32> to vector<16x128xf32>
    %565 = vector.extract_strided_slice %342 {offsets = [45, 0], sizes = [1, 128], strides = [1, 1]} : vector<63x128xf32> to vector<1x128xf32>
    %566 = vector.broadcast %565 : vector<1x128xf32> to vector<16x128xf32>
    %567 = arith.mulf %564, %566 : vector<16x128xf32>
    %568 = arith.addf %548, %567 : vector<16x128xf32>
    %569 = vector.extract_strided_slice %341 {offsets = [2, 121], sizes = [16, 128], strides = [1, 1]} : vector<18x272xf32> to vector<16x128xf32>
    %570 = vector.extract_strided_slice %342 {offsets = [46, 0], sizes = [1, 128], strides = [1, 1]} : vector<63x128xf32> to vector<1x128xf32>
    %571 = vector.broadcast %570 : vector<1x128xf32> to vector<16x128xf32>
    %572 = arith.mulf %569, %571 : vector<16x128xf32>
    %573 = arith.addf %553, %572 : vector<16x128xf32>
    %574 = vector.extract_strided_slice %341 {offsets = [2, 122], sizes = [16, 128], strides = [1, 1]} : vector<18x272xf32> to vector<16x128xf32>
    %575 = vector.extract_strided_slice %342 {offsets = [47, 0], sizes = [1, 128], strides = [1, 1]} : vector<63x128xf32> to vector<1x128xf32>
    %576 = vector.broadcast %575 : vector<1x128xf32> to vector<16x128xf32>
    %577 = arith.mulf %574, %576 : vector<16x128xf32>
    %578 = arith.addf %558, %577 : vector<16x128xf32>
    %579 = vector.extract_strided_slice %341 {offsets = [2, 123], sizes = [16, 128], strides = [1, 1]} : vector<18x272xf32> to vector<16x128xf32>
    %580 = vector.extract_strided_slice %342 {offsets = [48, 0], sizes = [1, 128], strides = [1, 1]} : vector<63x128xf32> to vector<1x128xf32>
    %581 = vector.broadcast %580 : vector<1x128xf32> to vector<16x128xf32>
    %582 = arith.mulf %579, %581 : vector<16x128xf32>
    %583 = arith.addf %563, %582 : vector<16x128xf32>
    %584 = vector.extract_strided_slice %341 {offsets = [2, 125], sizes = [16, 128], strides = [1, 1]} : vector<18x272xf32> to vector<16x128xf32>
    %585 = vector.extract_strided_slice %342 {offsets = [49, 0], sizes = [1, 128], strides = [1, 1]} : vector<63x128xf32> to vector<1x128xf32>
    %586 = vector.broadcast %585 : vector<1x128xf32> to vector<16x128xf32>
    %587 = arith.mulf %584, %586 : vector<16x128xf32>
    %588 = arith.addf %568, %587 : vector<16x128xf32>
    %589 = vector.extract_strided_slice %341 {offsets = [2, 126], sizes = [16, 128], strides = [1, 1]} : vector<18x272xf32> to vector<16x128xf32>
    %590 = vector.extract_strided_slice %342 {offsets = [50, 0], sizes = [1, 128], strides = [1, 1]} : vector<63x128xf32> to vector<1x128xf32>
    %591 = vector.broadcast %590 : vector<1x128xf32> to vector<16x128xf32>
    %592 = arith.mulf %589, %591 : vector<16x128xf32>
    %593 = arith.addf %573, %592 : vector<16x128xf32>
    %594 = vector.extract_strided_slice %341 {offsets = [2, 127], sizes = [16, 128], strides = [1, 1]} : vector<18x272xf32> to vector<16x128xf32>
    %595 = vector.extract_strided_slice %342 {offsets = [51, 0], sizes = [1, 128], strides = [1, 1]} : vector<63x128xf32> to vector<1x128xf32>
    %596 = vector.broadcast %595 : vector<1x128xf32> to vector<16x128xf32>
    %597 = arith.mulf %594, %596 : vector<16x128xf32>
    %598 = arith.addf %578, %597 : vector<16x128xf32>
    %599 = vector.extract_strided_slice %341 {offsets = [2, 128], sizes = [16, 128], strides = [1, 1]} : vector<18x272xf32> to vector<16x128xf32>
    %600 = vector.extract_strided_slice %342 {offsets = [52, 0], sizes = [1, 128], strides = [1, 1]} : vector<63x128xf32> to vector<1x128xf32>
    %601 = vector.broadcast %600 : vector<1x128xf32> to vector<16x128xf32>
    %602 = arith.mulf %599, %601 : vector<16x128xf32>
    %603 = arith.addf %583, %602 : vector<16x128xf32>
    %604 = vector.extract_strided_slice %341 {offsets = [2, 129], sizes = [16, 128], strides = [1, 1]} : vector<18x272xf32> to vector<16x128xf32>
    %605 = vector.extract_strided_slice %342 {offsets = [53, 0], sizes = [1, 128], strides = [1, 1]} : vector<63x128xf32> to vector<1x128xf32>
    %606 = vector.broadcast %605 : vector<1x128xf32> to vector<16x128xf32>
    %607 = arith.mulf %604, %606 : vector<16x128xf32>
    %608 = arith.addf %588, %607 : vector<16x128xf32>
    %609 = vector.extract_strided_slice %341 {offsets = [2, 130], sizes = [16, 128], strides = [1, 1]} : vector<18x272xf32> to vector<16x128xf32>
    %610 = vector.extract_strided_slice %342 {offsets = [54, 0], sizes = [1, 128], strides = [1, 1]} : vector<63x128xf32> to vector<1x128xf32>
    %611 = vector.broadcast %610 : vector<1x128xf32> to vector<16x128xf32>
    %612 = arith.mulf %609, %611 : vector<16x128xf32>
    %613 = arith.addf %593, %612 : vector<16x128xf32>
    %614 = vector.extract_strided_slice %341 {offsets = [2, 131], sizes = [16, 128], strides = [1, 1]} : vector<18x272xf32> to vector<16x128xf32>
    %615 = vector.extract_strided_slice %342 {offsets = [55, 0], sizes = [1, 128], strides = [1, 1]} : vector<63x128xf32> to vector<1x128xf32>
    %616 = vector.broadcast %615 : vector<1x128xf32> to vector<16x128xf32>
    %617 = arith.mulf %614, %616 : vector<16x128xf32>
    %618 = arith.addf %598, %617 : vector<16x128xf32>
    %619 = vector.extract_strided_slice %341 {offsets = [2, 133], sizes = [16, 128], strides = [1, 1]} : vector<18x272xf32> to vector<16x128xf32>
    %620 = vector.extract_strided_slice %342 {offsets = [56, 0], sizes = [1, 128], strides = [1, 1]} : vector<63x128xf32> to vector<1x128xf32>
    %621 = vector.broadcast %620 : vector<1x128xf32> to vector<16x128xf32>
    %622 = arith.mulf %619, %621 : vector<16x128xf32>
    %623 = arith.addf %603, %622 : vector<16x128xf32>
    %624 = vector.extract_strided_slice %341 {offsets = [2, 134], sizes = [16, 128], strides = [1, 1]} : vector<18x272xf32> to vector<16x128xf32>
    %625 = vector.extract_strided_slice %342 {offsets = [57, 0], sizes = [1, 128], strides = [1, 1]} : vector<63x128xf32> to vector<1x128xf32>
    %626 = vector.broadcast %625 : vector<1x128xf32> to vector<16x128xf32>
    %627 = arith.mulf %624, %626 : vector<16x128xf32>
    %628 = arith.addf %608, %627 : vector<16x128xf32>
    %629 = vector.extract_strided_slice %341 {offsets = [2, 135], sizes = [16, 128], strides = [1, 1]} : vector<18x272xf32> to vector<16x128xf32>
    %630 = vector.extract_strided_slice %342 {offsets = [58, 0], sizes = [1, 128], strides = [1, 1]} : vector<63x128xf32> to vector<1x128xf32>
    %631 = vector.broadcast %630 : vector<1x128xf32> to vector<16x128xf32>
    %632 = arith.mulf %629, %631 : vector<16x128xf32>
    %633 = arith.addf %613, %632 : vector<16x128xf32>
    %634 = vector.extract_strided_slice %341 {offsets = [2, 136], sizes = [16, 128], strides = [1, 1]} : vector<18x272xf32> to vector<16x128xf32>
    %635 = vector.extract_strided_slice %342 {offsets = [59, 0], sizes = [1, 128], strides = [1, 1]} : vector<63x128xf32> to vector<1x128xf32>
    %636 = vector.broadcast %635 : vector<1x128xf32> to vector<16x128xf32>
    %637 = arith.mulf %634, %636 : vector<16x128xf32>
    %638 = arith.addf %618, %637 : vector<16x128xf32>
    %639 = vector.extract_strided_slice %341 {offsets = [2, 137], sizes = [16, 128], strides = [1, 1]} : vector<18x272xf32> to vector<16x128xf32>
    %640 = vector.extract_strided_slice %342 {offsets = [60, 0], sizes = [1, 128], strides = [1, 1]} : vector<63x128xf32> to vector<1x128xf32>
    %641 = vector.broadcast %640 : vector<1x128xf32> to vector<16x128xf32>
    %642 = arith.mulf %639, %641 : vector<16x128xf32>
    %643 = arith.addf %623, %642 : vector<16x128xf32>
    %644 = vector.extract_strided_slice %341 {offsets = [2, 138], sizes = [16, 128], strides = [1, 1]} : vector<18x272xf32> to vector<16x128xf32>
    %645 = vector.extract_strided_slice %342 {offsets = [61, 0], sizes = [1, 128], strides = [1, 1]} : vector<63x128xf32> to vector<1x128xf32>
    %646 = vector.broadcast %645 : vector<1x128xf32> to vector<16x128xf32>
    %647 = arith.mulf %644, %646 : vector<16x128xf32>
    %648 = arith.addf %628, %647 : vector<16x128xf32>
    %649 = vector.extract_strided_slice %341 {offsets = [2, 139], sizes = [16, 128], strides = [1, 1]} : vector<18x272xf32> to vector<16x128xf32>
    %650 = vector.extract_strided_slice %342 {offsets = [62, 0], sizes = [1, 128], strides = [1, 1]} : vector<63x128xf32> to vector<1x128xf32>
    %651 = vector.broadcast %650 : vector<1x128xf32> to vector<16x128xf32>
    %652 = arith.mulf %649, %651 : vector<16x128xf32>
    %653 = arith.addf %633, %652 : vector<16x128xf32>
    %654 = arith.addf %643, %648 : vector<16x128xf32>
    %655 = arith.addf %653, %638 : vector<16x128xf32>
    %656 = arith.addf %654, %655 : vector<16x128xf32>
    %c0_35 = arith.constant 0 : index
    %c0_36 = arith.constant 0 : index
    %657 = vector.load %arg5[%c0_35, %c0_36] : memref<1x128xf32, #tpu.memory_space<vmem>>, vector<1x128xf32>
    %658 = vector.broadcast %657 : vector<1x128xf32> to vector<16x128xf32>
    %659 = arith.addf %656, %658 : vector<16x128xf32>
    %660 = arith.addf %659, %1 : vector<16x128xf32>
    %cst_37 = arith.constant 0.000000e+00 : f32
    %661 = vector.broadcast %cst_37 : f32 to vector<16x128xf32>
    %662 = arith.maximumf %660, %661 : vector<16x128xf32>
    %c0_38 = arith.constant 0 : index
    %c0_39 = arith.constant 0 : index
    %c0_40 = arith.constant 0 : index
    %663 = vector.load %arg6[%c0_38, %c0_39, %c0_40] : memref<1x16x128xf32, #tpu.memory_space<vmem>>, vector<1x16x128xf32>
    %664 = vector.shape_cast %663 : vector<1x16x128xf32> to vector<16x128xf32>
    %665 = vector.shape_cast %662 : vector<16x128xf32> to vector<1x16x128xf32>
    tpu.vector_store %arg6[%c0_38, %c0_39, %c0_40], %665 {strides = array<i32>} : memref<1x16x128xf32, #tpu.memory_space<vmem>>, vector<1x16x128xf32>,
    return
  }
  func.func @transform_0(%arg0: i32) -> (i32, i32, i32) {
    %c0_i32 = arith.constant 0 : i32
    %c0_i32_0 = arith.constant 0 : i32
    %c0_i32_1 = arith.constant 0 : i32
    return %arg0, %c0_i32, %c0_i32_0 : i32, i32, i32
  }
  func.func @transform_1(%arg0: i32) -> (i32, i32) {
    %c0_i32 = arith.constant 0 : i32
    %c0_i32_0 = arith.constant 0 : i32
    %c0_i32_1 = arith.constant 0 : i32
    return %c0_i32, %c0_i32_0 : i32, i32
  }
  func.func @transform_2(%arg0: i32) -> (i32, i32) {
    %c0_i32 = arith.constant 0 : i32
    %c0_i32_0 = arith.constant 0 : i32
    %c0_i32_1 = arith.constant 0 : i32
    return %c0_i32, %c0_i32_0 : i32, i32
  }
  func.func @transform_3(%arg0: i32) -> (i32, i32) {
    %c0_i32 = arith.constant 0 : i32
    %c0_i32_0 = arith.constant 0 : i32
    %c0_i32_1 = arith.constant 0 : i32
    return %c0_i32, %c0_i32_0 : i32, i32
  }
  func.func @transform_4(%arg0: i32) -> (i32, i32) {
    %c0_i32 = arith.constant 0 : i32
    %c0_i32_0 = arith.constant 0 : i32
    %c0_i32_1 = arith.constant 0 : i32
    return %c0_i32, %c0_i32_0 : i32, i32
  }
  func.func @transform_5(%arg0: i32) -> (i32, i32, i32) {
    %c0_i32 = arith.constant 0 : i32
    %c0_i32_0 = arith.constant 0 : i32
    %c0_i32_1 = arith.constant 0 : i32
    return %arg0, %c0_i32, %c0_i32_0 : i32, i32, i32
  }
}

</mosaic_0001>

<llo_original>
// kernel: forward.1
$region0: #{forward.1}
  #allocation0 [shape = 'u32[]', space=smem, size = 0x4, offset = 0x4, fixed_abs, tag = 'smem constant byte address 0x4 - core index']
  #allocation1 [shape = 'u32[144,128]{1,0:T(1,128)}', space=vmem, size = 0x12000, scoped, tag = 'internal scratch']
  #allocation2 [shape = 'f32[18,272]{1,0:T(8,128)}', space=vmem, size = 0x9000, scoped, tag = 'scratch operand']
  #allocation3 [shape = 'f32[18,272]{1,0:T(8,128)}', space=vmem, size = 0x9000, scoped, tag = 'scratch operand']
  %s0 = inlined_call_operand.vmem [shape: f32[1,16,128], index: 0, kind: input, shape index: {}]
  %s1 = inlined_call_operand.vmem [shape: f32[63,128], index: 1, kind: input, shape index: {}]
  %s2 = inlined_call_operand.vmem [shape: f32[1,128], index: 2, kind: input, shape index: {}]
  %s3 = inlined_call_operand.vmem [shape: f32[63,128], index: 3, kind: input, shape index: {}]
  %s4 = inlined_call_operand.vmem [shape: f32[1,128], index: 4, kind: input, shape index: {}]
  %s5 = inlined_call_operand.vmem [shape: f32[1,16,128], index: 5, kind: output, shape index: {}]
  %s6 = sld [smem:[#allocation0]]
  $region30: #{forward.1} parent=0
    _
  %s8 = ssub.s32 1, %s6
  %s9 = scalar_select 0, %s8, %s6
  // Predicated region
  $region2: #{forward.1} parent=0 // pred_check
    _
  $region3: #{forward.1} parent=0 // pred_check_branch
    %11 = sbr.rel (0) target = $region5
  $region4: #{forward.1} parent=0 // pred_region
    _
  $region5: #{forward.1} parent=0 // pred_fallthru
    _
  // Predicated region
  $region6: #{forward.1} parent=0 // pred_check
    _
  $region7: #{forward.1} parent=0 // pred_check_branch
    %13 = sbr.rel (0) target = $region9
  $region8: #{forward.1} parent=0 // pred_region
    _
  $region9: #{forward.1} parent=0 // pred_fallthru
    _
  // Predicated region
  $region10: #{forward.1} parent=0 // pred_check
    _
  $region11: #{forward.1} parent=0 // pred_check_branch
    %15 = sbr.rel (0) target = $region13
  $region12: #{forward.1} parent=0 // pred_region
    _
  $region13: #{forward.1} parent=0 // pred_fallthru
    _
  // Predicated region
  $region14: #{forward.1} parent=0 // pred_check
    _
  $region15: #{forward.1} parent=0 // pred_check_branch
    %17 = sbr.rel (0) target = $region17
  $region16: #{forward.1} parent=0 // pred_region
    _
  $region17: #{forward.1} parent=0 // pred_fallthru
    _
  // Predicated region
  $region18: #{forward.1} parent=0 // pred_check
    _
  $region19: #{forward.1} parent=0 // pred_check_branch
    %19 = sbr.rel (0) target = $region21
  $region20: #{forward.1} parent=0 // pred_region
    _
  $region21: #{forward.1} parent=0 // pred_fallthru
    _
  %v20 = vld [vmem:[%s0] sm:$0xff]
  %v21 = vld [vmem:[%s0 + $0x8] sm:$0xff]
  %v22 = vlaneseq
  %vm23 = vcmp.ge.s32.totalorder %v22, 0
  %vm24 = vcmp.lt.s32.totalorder %v22, 272
  %vm25 = vmand %vm23, %vm24
  %26 = vst.msk [vmem:[#allocation2] ss:$8 sm:$0x7] %vm25, 0.0
  %27 = vst.msk [vmem:[#allocation2] ss:$8 sm:$0x0] %vm25, 0.0
  %s28 = scalar_lea.vmem [#allocation2], 49
  %29 = vst.msk [vmem:[%s28] ss:$8 sm:$0x7] %vm25, 0.0
  %30 = vst.msk [vmem:[%s28] ss:$8 sm:$0x0] %vm25, 0.0
  %vm31 = vcmask 1048449
  %32 = vst.msk [vmem:[#allocation2] sm:$0xfe] %vm31, 0.0
  %vm33 = vcmask 1048448
  %34 = vst.msk [vmem:[#allocation2 + $0x18] sm:$0xff] %vm33, 0.0
  %vm35 = vcmask 1041280
  %36 = vst.msk [vmem:[#allocation2 + $0x30] sm:$0x1] %vm35, 0.0
  %vm37 = vcmask 130049
  %38 = vst.msk [vmem:[#allocation2 + $0x10] sm:$0xfe] %vm37, 0.0
  %vm39 = vcmask 130048
  %40 = vst.msk [vmem:[#allocation2 + $0x28] sm:$0xff] %vm39, 0.0
  %vm41 = vcmask 122880
  %42 = vst.msk [vmem:[#allocation2 + $0x40] sm:$0x1] %vm41, 0.0
  %vm45 = vcmask 1040384
  %v46 = vrot.slane %v20, 7
  %v47 = vrot.slane %v21, 7
  %v48 = vsel %vm45, %v46, %v47
  %52 = vst [vmem:[#allocation2 + $0x8] sm:$0xfe] %v46
  %53 = vst [vmem:[#allocation2 + $0x20] sm:$0xff] %v48
  %54 = vst [vmem:[#allocation2 + $0x38] sm:$0x1] %v47
  %v55 = vld [vmem:[#allocation2] sm:$0xff]
  %v56 = vld [vmem:[#allocation2 + $0x8] sm:$0xff]
  %v57 = vld [vmem:[#allocation2 + $0x10] sm:$0xff]
  %v58 = vld [vmem:[#allocation2 + $0x18] sm:$0xff]
  %v59 = vld [vmem:[#allocation2 + $0x20] sm:$0xff]
  %v60 = vld [vmem:[#allocation2 + $0x28] sm:$0xff]
  %v61 = vld [vmem:[#allocation2 + $0x30] sm:$0x3]
  %v62 = vld [vmem:[#allocation2 + $0x38] sm:$0x3]
  %v63 = vld [vmem:[#allocation2 + $0x40] sm:$0x3]
  %v64 = vld [vmem:[%s1] sm:$0xff]
  %v65 = vld [vmem:[%s1 + $0x8] sm:$0xff]
  %v66 = vld [vmem:[%s1 + $0x10] sm:$0xff]
  %v67 = vld [vmem:[%s1 + $0x18] sm:$0xff]
  %v68 = vld [vmem:[%s1 + $0x20] sm:$0xff]
  %v69 = vld [vmem:[%s1 + $0x28] sm:$0xff]
  %v70 = vld [vmem:[%s1 + $0x30] sm:$0xff]
  %v71 = vld [vmem:[%s1 + $0x38] sm:$0x7f]
  %v72 = vlaneseq
  %v73 = vshrl.u32 %v72, 7
  %v74 = vsub.s32 0, %v73
  %v75 = vrot.slane %v64, %v74
  %77 = vrot.lane.b32.xlu0 %v75, 117
  %v78 = vpop.permute.xlu0 %77
  %v80 = vmul.f32 %v55, %v78
  %v81 = vmul.f32 %v56, %v78
  %v82 = vmul.f32 %v58, %v78
  %v83 = vmul.f32 %v59, %v78
  %v84 = vlaneseq
  %v85 = vshrl.u32 %v84, 7
  %v86 = vsub.s32 1, %v85
  %v87 = vrot.slane %v64, %v86
  %89 = vrot.lane.b32.xlu0 %v87, 118
  %v90 = vpop.permute.xlu0 %89
  %v92 = vmul.f32 %v55, %v90
  %v93 = vmul.f32 %v56, %v90
  %v94 = vmul.f32 %v58, %v90
  %v95 = vmul.f32 %v59, %v90
  %v96 = vlaneseq
  %v97 = vshrl.u32 %v96, 7
  %v98 = vsub.s32 2, %v97
  %v99 = vrot.slane %v64, %v98
  %101 = vrot.lane.b32.xlu0 %v99, 119
  %v102 = vpop.permute.xlu0 %101
  %v104 = vmul.f32 %v55, %v102
  %v105 = vmul.f32 %v56, %v102
  %v106 = vmul.f32 %v58, %v102
  %v107 = vmul.f32 %v59, %v102
  %v108 = vlaneseq
  %v109 = vshrl.u32 %v108, 7
  %v110 = vsub.s32 3, %v109
  %v111 = vrot.slane %v64, %v110
  %113 = vrot.lane.b32.xlu0 %v111, 120
  %v114 = vpop.permute.xlu0 %113
  %v116 = vmul.f32 %v55, %v114
  %v117 = vmul.f32 %v56, %v114
  %v118 = vmul.f32 %v58, %v114
  %v119 = vmul.f32 %v59, %v114
  %v120 = vlaneseq
  %v121 = vshrl.u32 %v120, 7
  %v122 = vsub.s32 4, %v121
  %v123 = vrot.slane %v64, %v122
  %125 = vrot.lane.b32.xlu0 %v123, 121
  %v126 = vpop.permute.xlu0 %125
  %v128 = vmul.f32 %v55, %v126
  %v129 = vmul.f32 %v56, %v126
  %v130 = vmul.f32 %v58, %v126
  %v131 = vmul.f32 %v59, %v126
  %136 = vrot.lane.b32.xlu0 %v128, 124
  %v137 = vpop.permute.xlu0 %136
  %138 = vrot.lane.b32.xlu0 %v129, 124
  %v139 = vpop.permute.xlu0 %138
  %140 = vrot.lane.b32.xlu0 %v130, 124
  %v141 = vpop.permute.xlu0 %140
  %142 = vrot.lane.b32.xlu0 %v131, 124
  %v143 = vpop.permute.xlu0 %142
  %vm144 = vcmask 1014784
  %v145 = vsel %vm144, %v137, %v139
  %v146 = vsel %vm144, %v141, %v143
  %v151 = vadd.f32 %v80, %v145
  %v152 = vadd.f32 %v81, %v139
  %v153 = vadd.f32 %v82, %v146
  %v154 = vadd.f32 %v83, %v143
  %v155 = vlaneseq
  %v156 = vshrl.u32 %v155, 7
  %v157 = vsub.s32 5, %v156
  %v158 = vrot.slane %v64, %v157
  %160 = vrot.lane.b32.xlu0 %v158, 122
  %v161 = vpop.permute.xlu0 %160
  %v163 = vmul.f32 %v55, %v161
  %v164 = vmul.f32 %v56, %v161
  %v165 = vmul.f32 %v58, %v161
  %v166 = vmul.f32 %v59, %v161
  %171 = vrot.lane.b32.xlu0 %v163, 124
  %v172 = vpop.permute.xlu0 %171
  %173 = vrot.lane.b32.xlu0 %v164, 124
  %v174 = vpop.permute.xlu0 %173
  %175 = vrot.lane.b32.xlu0 %v165, 124
  %v176 = vpop.permute.xlu0 %175
  %177 = vrot.lane.b32.xlu0 %v166, 124
  %v178 = vpop.permute.xlu0 %177
  %v179 = vsel %vm144, %v172, %v174
  %v180 = vsel %vm144, %v176, %v178
  %v185 = vadd.f32 %v92, %v179
  %v186 = vadd.f32 %v93, %v174
  %v187 = vadd.f32 %v94, %v180
  %v188 = vadd.f32 %v95, %v178
  %v189 = vlaneseq
  %v190 = vshrl.u32 %v189, 7
  %v191 = vsub.s32 6, %v190
  %v192 = vrot.slane %v64, %v191
  %194 = vrot.lane.b32.xlu0 %v192, 123
  %v195 = vpop.permute.xlu0 %194
  %v197 = vmul.f32 %v55, %v195
  %v198 = vmul.f32 %v56, %v195
  %v199 = vmul.f32 %v58, %v195
  %v200 = vmul.f32 %v59, %v195
  %205 = vrot.lane.b32.xlu0 %v197, 124
  %v206 = vpop.permute.xlu0 %205
  %207 = vrot.lane.b32.xlu0 %v198, 124
  %v208 = vpop.permute.xlu0 %207
  %209 = vrot.lane.b32.xlu0 %v199, 124
  %v210 = vpop.permute.xlu0 %209
  %211 = vrot.lane.b32.xlu0 %v200, 124
  %v212 = vpop.permute.xlu0 %211
  %v213 = vsel %vm144, %v206, %v208
  %v214 = vsel %vm144, %v210, %v212
  %v219 = vadd.f32 %v104, %v213
  %v220 = vadd.f32 %v105, %v208
  %v221 = vadd.f32 %v106, %v214
  %v222 = vadd.f32 %v107, %v212
  %v223 = vlaneseq
  %v224 = vshrl.u32 %v223, 7
  %v225 = vsub.s32 7, %v224
  %v226 = vrot.slane %v64, %v225
  %228 = vrot.lane.b32.xlu0 %v226, 125
  %v229 = vpop.permute.xlu0 %228
  %v231 = vmul.f32 %v55, %v229
  %v232 = vmul.f32 %v56, %v229
  %v233 = vmul.f32 %v58, %v229
  %v234 = vmul.f32 %v59, %v229
  %239 = vrot.lane.b32.xlu0 %v231, 123
  %v240 = vpop.permute.xlu0 %239
  %241 = vrot.lane.b32.xlu0 %v232, 123
  %v242 = vpop.permute.xlu0 %241
  %243 = vrot.lane.b32.xlu0 %v233, 123
  %v244 = vpop.permute.xlu0 %243
  %245 = vrot.lane.b32.xlu0 %v234, 123
  %v246 = vpop.permute.xlu0 %245
  %vm247 = vcmask 1006592
  %v248 = vsel %vm247, %v240, %v242
  %v249 = vsel %vm247, %v244, %v246
  %v254 = vadd.f32 %v116, %v248
  %v255 = vadd.f32 %v117, %v242
  %v256 = vadd.f32 %v118, %v249
  %v257 = vadd.f32 %v119, %v246
  %v258 = vlaneseq
  %v259 = vshrl.u32 %v258, 7
  %v260 = vsub.s32 0, %v259
  %v261 = vrot.slane %v65, %v260
  %263 = vrot.lane.b32.xlu0 %v261, 126
  %v264 = vpop.permute.xlu0 %263
  %v266 = vmul.f32 %v55, %v264
  %v267 = vmul.f32 %v56, %v264
  %v268 = vmul.f32 %v58, %v264
  %v269 = vmul.f32 %v59, %v264
  %274 = vrot.lane.b32.xlu0 %v266, 119
  %v275 = vpop.permute.xlu0 %274
  %276 = vrot.lane.b32.xlu0 %v267, 119
  %v277 = vpop.permute.xlu0 %276
  %278 = vrot.lane.b32.xlu0 %v268, 119
  %v279 = vpop.permute.xlu0 %278
  %280 = vrot.lane.b32.xlu0 %v269, 119
  %v281 = vpop.permute.xlu0 %280
  %vm282 = vcmask 973824
  %v283 = vsel %vm282, %v275, %v277
  %v284 = vsel %vm282, %v279, %v281
  %v289 = vadd.f32 %v151, %v283
  %v290 = vadd.f32 %v152, %v277
  %v291 = vadd.f32 %v153, %v284
  %v292 = vadd.f32 %v154, %v281
  %v293 = vlaneseq
  %v294 = vshrl.u32 %v293, 7
  %v295 = vsub.s32 1, %v294
  %v296 = vrot.slane %v65, %v295
  %298 = vrot.lane.b32.xlu0 %v296, 127
  %v299 = vpop.permute.xlu0 %298
  %v301 = vmul.f32 %v55, %v299
  %v302 = vmul.f32 %v56, %v299
  %v303 = vmul.f32 %v58, %v299
  %v304 = vmul.f32 %v59, %v299
  %309 = vrot.lane.b32.xlu0 %v301, 119
  %v310 = vpop.permute.xlu0 %309
  %311 = vrot.lane.b32.xlu0 %v302, 119
  %v312 = vpop.permute.xlu0 %311
  %313 = vrot.lane.b32.xlu0 %v303, 119
  %v314 = vpop.permute.xlu0 %313
  %315 = vrot.lane.b32.xlu0 %v304, 119
  %v316 = vpop.permute.xlu0 %315
  %v317 = vsel %vm282, %v310, %v312
  %v318 = vsel %vm282, %v314, %v316
  %v323 = vadd.f32 %v185, %v317
  %v324 = vadd.f32 %v186, %v312
  %v325 = vadd.f32 %v187, %v318
  %v326 = vadd.f32 %v188, %v316
  %v327 = vlaneseq
  %v328 = vshrl.u32 %v327, 7
  %v329 = vsub.s32 2, %v328
  %v330 = vrot.slane %v65, %v329
  %v331 = vmul.f32 %v56, %v330
  %v332 = vmul.f32 %v59, %v330
  %335 = vrot.lane.b32.xlu0 %v331, 119
  %v336 = vpop.permute.xlu0 %335
  %337 = vrot.lane.b32.xlu0 %v332, 119
  %v338 = vpop.permute.xlu0 %337
  %v341 = vadd.f32 %v219, %v336
  %v342 = vadd.f32 %v220, %v336
  %v343 = vadd.f32 %v221, %v338
  %v344 = vadd.f32 %v222, %v338
  %v345 = vlaneseq
  %v346 = vshrl.u32 %v345, 7
  %v347 = vsub.s32 3, %v346
  %v348 = vrot.slane %v65, %v347
  %350 = vrot.lane.b32.xlu0 %v348, 1
  %v351 = vpop.permute.xlu0 %350
  %v353 = vmul.f32 %v56, %v351
  %v354 = vmul.f32 %v57, %v351
  %v355 = vmul.f32 %v59, %v351
  %v356 = vmul.f32 %v60, %v351
  %361 = vrot.lane.b32.xlu0 %v353, 119
  %v362 = vpop.permute.xlu0 %361
  %363 = vrot.lane.b32.xlu0 %v354, 119
  %v364 = vpop.permute.xlu0 %363
  %365 = vrot.lane.b32.xlu0 %v355, 119
  %v366 = vpop.permute.xlu0 %365
  %367 = vrot.lane.b32.xlu0 %v356, 119
  %v368 = vpop.permute.xlu0 %367
  %v369 = vsel %vm282, %v362, %v364
  %v370 = vsel %vm282, %v366, %v368
  %v375 = vadd.f32 %v254, %v362
  %v376 = vadd.f32 %v255, %v369
  %v377 = vadd.f32 %v256, %v366
  %v378 = vadd.f32 %v257, %v370
  %v379 = vlaneseq
  %v380 = vshrl.u32 %v379, 7
  %v381 = vsub.s32 4, %v380
  %v382 = vrot.slane %v65, %v381
  %384 = vrot.lane.b32.xlu0 %v382, 2
  %v385 = vpop.permute.xlu0 %384
  %v387 = vmul.f32 %v56, %v385
  %v388 = vmul.f32 %v57, %v385
  %v389 = vmul.f32 %v59, %v385
  %v390 = vmul.f32 %v60, %v385
  %395 = vrot.lane.b32.xlu0 %v387, 115
  %v396 = vpop.permute.xlu0 %395
  %397 = vrot.lane.b32.xlu0 %v388, 115
  %v398 = vpop.permute.xlu0 %397
  %399 = vrot.lane.b32.xlu0 %v389, 115
  %v400 = vpop.permute.xlu0 %399
  %401 = vrot.lane.b32.xlu0 %v390, 115
  %v402 = vpop.permute.xlu0 %401
  %vm403 = vcmask 941056
  %v404 = vsel %vm403, %v396, %v398
  %v405 = vsel %vm403, %v400, %v402
  %v410 = vadd.f32 %v289, %v396
  %v411 = vadd.f32 %v290, %v404
  %v412 = vadd.f32 %v291, %v400
  %v413 = vadd.f32 %v292, %v405
  %v414 = vlaneseq
  %v415 = vshrl.u32 %v414, 7
  %v416 = vsub.s32 5, %v415
  %v417 = vrot.slane %v65, %v416
  %419 = vrot.lane.b32.xlu0 %v417, 3
  %v420 = vpop.permute.xlu0 %419
  %v422 = vmul.f32 %v56, %v420
  %v423 = vmul.f32 %v57, %v420
  %v424 = vmul.f32 %v59, %v420
  %v425 = vmul.f32 %v60, %v420
  %430 = vrot.lane.b32.xlu0 %v422, 115
  %v431 = vpop.permute.xlu0 %430
  %432 = vrot.lane.b32.xlu0 %v423, 115
  %v433 = vpop.permute.xlu0 %432
  %434 = vrot.lane.b32.xlu0 %v424, 115
  %v435 = vpop.permute.xlu0 %434
  %436 = vrot.lane.b32.xlu0 %v425, 115
  %v437 = vpop.permute.xlu0 %436
  %v438 = vsel %vm403, %v431, %v433
  %v439 = vsel %vm403, %v435, %v437
  %v444 = vadd.f32 %v323, %v431
  %v445 = vadd.f32 %v324, %v438
  %v446 = vadd.f32 %v325, %v435
  %v447 = vadd.f32 %v326, %v439
  %v448 = vlaneseq
  %v449 = vshrl.u32 %v448, 7
  %v450 = vsub.s32 6, %v449
  %v451 = vrot.slane %v65, %v450
  %453 = vrot.lane.b32.xlu0 %v451, 5
  %v454 = vpop.permute.xlu0 %453
  %v456 = vmul.f32 %v56, %v454
  %v457 = vmul.f32 %v57, %v454
  %v458 = vmul.f32 %v59, %v454
  %v459 = vmul.f32 %v60, %v454
  %464 = vrot.lane.b32.xlu0 %v456, 114
  %v465 = vpop.permute.xlu0 %464
  %466 = vrot.lane.b32.xlu0 %v457, 114
  %v467 = vpop.permute.xlu0 %466
  %468 = vrot.lane.b32.xlu0 %v458, 114
  %v469 = vpop.permute.xlu0 %468
  %470 = vrot.lane.b32.xlu0 %v459, 114
  %v471 = vpop.permute.xlu0 %470
  %vm472 = vcmask 932864
  %v473 = vsel %vm472, %v465, %v467
  %v474 = vsel %vm472, %v469, %v471
  %v479 = vadd.f32 %v341, %v465
  %v480 = vadd.f32 %v342, %v473
  %v481 = vadd.f32 %v343, %v469
  %v482 = vadd.f32 %v344, %v474
  %v483 = vlaneseq
  %v484 = vshrl.u32 %v483, 7
  %v485 = vsub.s32 7, %v484
  %v486 = vrot.slane %v65, %v485
  %488 = vrot.lane.b32.xlu0 %v486, 6
  %v489 = vpop.permute.xlu0 %488
  %v491 = vmul.f32 %v56, %v489
  %v492 = vmul.f32 %v57, %v489
  %v493 = vmul.f32 %v59, %v489
  %v494 = vmul.f32 %v60, %v489
  %499 = vrot.lane.b32.xlu0 %v491, 114
  %v500 = vpop.permute.xlu0 %499
  %501 = vrot.lane.b32.xlu0 %v492, 114
  %v502 = vpop.permute.xlu0 %501
  %503 = vrot.lane.b32.xlu0 %v493, 114
  %v504 = vpop.permute.xlu0 %503
  %505 = vrot.lane.b32.xlu0 %v494, 114
  %v506 = vpop.permute.xlu0 %505
  %v507 = vsel %vm472, %v500, %v502
  %v508 = vsel %vm472, %v504, %v506
  %v513 = vadd.f32 %v375, %v500
  %v514 = vadd.f32 %v376, %v507
  %v515 = vadd.f32 %v377, %v504
  %v516 = vadd.f32 %v378, %v508
  %v517 = vlaneseq
  %v518 = vshrl.u32 %v517, 7
  %v519 = vsub.s32 0, %v518
  %v520 = vrot.slane %v66, %v519
  %522 = vrot.lane.b32.xlu0 %v520, 7
  %v523 = vpop.permute.xlu0 %522
  %v525 = vmul.f32 %v56, %v523
  %v526 = vmul.f32 %v57, %v523
  %v527 = vmul.f32 %v59, %v523
  %v528 = vmul.f32 %v60, %v523
  %533 = vrot.lane.b32.xlu0 %v525, 110
  %v534 = vpop.permute.xlu0 %533
  %535 = vrot.lane.b32.xlu0 %v526, 110
  %v536 = vpop.permute.xlu0 %535
  %537 = vrot.lane.b32.xlu0 %v527, 110
  %v538 = vpop.permute.xlu0 %537
  %539 = vrot.lane.b32.xlu0 %v528, 110
  %v540 = vpop.permute.xlu0 %539
  %vm541 = vcmask 900096
  %v542 = vsel %vm541, %v534, %v536
  %v543 = vsel %vm541, %v538, %v540
  %v548 = vadd.f32 %v410, %v534
  %v549 = vadd.f32 %v411, %v542
  %v550 = vadd.f32 %v412, %v538
  %v551 = vadd.f32 %v413, %v543
  %v552 = vlaneseq
  %v553 = vshrl.u32 %v552, 7
  %v554 = vsub.s32 1, %v553
  %v555 = vrot.slane %v66, %v554
  %557 = vrot.lane.b32.xlu0 %v555, 8
  %v558 = vpop.permute.xlu0 %557
  %v560 = vmul.f32 %v56, %v558
  %v561 = vmul.f32 %v57, %v558
  %v562 = vmul.f32 %v59, %v558
  %v563 = vmul.f32 %v60, %v558
  %568 = vrot.lane.b32.xlu0 %v560, 110
  %v569 = vpop.permute.xlu0 %568
  %570 = vrot.lane.b32.xlu0 %v561, 110
  %v571 = vpop.permute.xlu0 %570
  %572 = vrot.lane.b32.xlu0 %v562, 110
  %v573 = vpop.permute.xlu0 %572
  %574 = vrot.lane.b32.xlu0 %v563, 110
  %v575 = vpop.permute.xlu0 %574
  %v576 = vsel %vm541, %v569, %v571
  %v577 = vsel %vm541, %v573, %v575
  %v582 = vadd.f32 %v444, %v569
  %v583 = vadd.f32 %v445, %v576
  %v584 = vadd.f32 %v446, %v573
  %v585 = vadd.f32 %v447, %v577
  %v586 = vlaneseq
  %v587 = vshrl.u32 %v586, 7
  %v588 = vsub.s32 2, %v587
  %v589 = vrot.slane %v66, %v588
  %591 = vrot.lane.b32.xlu0 %v589, 9
  %v592 = vpop.permute.xlu0 %591
  %v594 = vmul.f32 %v56, %v592
  %v595 = vmul.f32 %v57, %v592
  %v596 = vmul.f32 %v59, %v592
  %v597 = vmul.f32 %v60, %v592
  %602 = vrot.lane.b32.xlu0 %v594, 110
  %v603 = vpop.permute.xlu0 %602
  %604 = vrot.lane.b32.xlu0 %v595, 110
  %v605 = vpop.permute.xlu0 %604
  %606 = vrot.lane.b32.xlu0 %v596, 110
  %v607 = vpop.permute.xlu0 %606
  %608 = vrot.lane.b32.xlu0 %v597, 110
  %v609 = vpop.permute.xlu0 %608
  %v610 = vsel %vm541, %v603, %v605
  %v611 = vsel %vm541, %v607, %v609
  %v616 = vadd.f32 %v479, %v603
  %v617 = vadd.f32 %v480, %v610
  %v618 = vadd.f32 %v481, %v607
  %v619 = vadd.f32 %v482, %v611
  %v620 = vlaneseq
  %v621 = vshrl.u32 %v620, 7
  %v622 = vsub.s32 3, %v621
  %v623 = vrot.slane %v66, %v622
  %625 = vrot.lane.b32.xlu0 %v623, 10
  %v626 = vpop.permute.xlu0 %625
  %v628 = vmul.f32 %v56, %v626
  %v629 = vmul.f32 %v57, %v626
  %v630 = vmul.f32 %v59, %v626
  %v631 = vmul.f32 %v60, %v626
  %636 = vrot.lane.b32.xlu0 %v628, 110
  %v637 = vpop.permute.xlu0 %636
  %638 = vrot.lane.b32.xlu0 %v629, 110
  %v639 = vpop.permute.xlu0 %638
  %640 = vrot.lane.b32.xlu0 %v630, 110
  %v641 = vpop.permute.xlu0 %640
  %642 = vrot.lane.b32.xlu0 %v631, 110
  %v643 = vpop.permute.xlu0 %642
  %v644 = vsel %vm541, %v637, %v639
  %v645 = vsel %vm541, %v641, %v643
  %v650 = vadd.f32 %v513, %v637
  %v651 = vadd.f32 %v514, %v644
  %v652 = vadd.f32 %v515, %v641
  %v653 = vadd.f32 %v516, %v645
  %v654 = vlaneseq
  %v655 = vshrl.u32 %v654, 7
  %v656 = vsub.s32 4, %v655
  %v657 = vrot.slane %v66, %v656
  %659 = vrot.lane.b32.xlu0 %v657, 11
  %v660 = vpop.permute.xlu0 %659
  %v662 = vmul.f32 %v56, %v660
  %v663 = vmul.f32 %v57, %v660
  %v664 = vmul.f32 %v59, %v660
  %v665 = vmul.f32 %v60, %v660
  %670 = vrot.lane.b32.xlu0 %v662, 106
  %v671 = vpop.permute.xlu0 %670
  %672 = vrot.lane.b32.xlu0 %v663, 106
  %v673 = vpop.permute.xlu0 %672
  %674 = vrot.lane.b32.xlu0 %v664, 106
  %v675 = vpop.permute.xlu0 %674
  %676 = vrot.lane.b32.xlu0 %v665, 106
  %v677 = vpop.permute.xlu0 %676
  %vm678 = vcmask 867328
  %v679 = vsel %vm678, %v671, %v673
  %v680 = vsel %vm678, %v675, %v677
  %v685 = vadd.f32 %v548, %v671
  %v686 = vadd.f32 %v549, %v679
  %v687 = vadd.f32 %v550, %v675
  %v688 = vadd.f32 %v551, %v680
  %v689 = vlaneseq
  %v690 = vshrl.u32 %v689, 7
  %v691 = vsub.s32 5, %v690
  %v692 = vrot.slane %v66, %v691
  %694 = vrot.lane.b32.xlu0 %v692, 117
  %v695 = vpop.permute.xlu0 %694
  %v697 = vmul.f32 %v55, %v695
  %v698 = vmul.f32 %v56, %v695
  %v699 = vmul.f32 %v58, %v695
  %v700 = vmul.f32 %v59, %v695
  %v701 = vmul.f32 %v61, %v695
  %v702 = vmul.f32 %v62, %v695
  %vm709 = vcmask 1046528
  %v710 = vrot.slane %v697, 1
  %v711 = vrot.slane %v699, 1
  %v712 = vsel %vm709, %v710, %v711
  %v713 = vrot.slane %v698, 1
  %v714 = vrot.slane %v700, 1
  %v715 = vsel %vm709, %v713, %v714
  %v716 = vrot.slane %v701, 1
  %v717 = vsel %vm709, %v711, %v716
  %v718 = vrot.slane %v702, 1
  %v719 = vsel %vm709, %v714, %v718
  %720 = vrot.lane.b32.xlu0 %v712, 1
  %v721 = vpop.permute.xlu0 %720
  %722 = vrot.lane.b32.xlu0 %v715, 1
  %v723 = vpop.permute.xlu0 %722
  %724 = vrot.lane.b32.xlu0 %v717, 1
  %v725 = vpop.permute.xlu0 %724
  %726 = vrot.lane.b32.xlu0 %v719, 1
  %v727 = vpop.permute.xlu0 %726
  %vm728 = vcmask 7168
  %v729 = vsel %vm728, %v721, %v723
  %v730 = vsel %vm728, %v725, %v727
  %v735 = vadd.f32 %v582, %v721
  %v736 = vadd.f32 %v583, %v729
  %v737 = vadd.f32 %v584, %v725
  %v738 = vadd.f32 %v585, %v730
  %v739 = vlaneseq
  %v740 = vshrl.u32 %v739, 7
  %v741 = vsub.s32 6, %v740
  %v742 = vrot.slane %v66, %v741
  %744 = vrot.lane.b32.xlu0 %v742, 118
  %v745 = vpop.permute.xlu0 %744
  %v747 = vmul.f32 %v55, %v745
  %v748 = vmul.f32 %v56, %v745
  %v749 = vmul.f32 %v58, %v745
  %v750 = vmul.f32 %v59, %v745
  %v751 = vmul.f32 %v61, %v745
  %v752 = vmul.f32 %v62, %v745
  %v759 = vrot.slane %v747, 1
  %v760 = vrot.slane %v749, 1
  %v761 = vsel %vm709, %v759, %v760
  %v762 = vrot.slane %v748, 1
  %v763 = vrot.slane %v750, 1
  %v764 = vsel %vm709, %v762, %v763
  %v765 = vrot.slane %v751, 1
  %v766 = vsel %vm709, %v760, %v765
  %v767 = vrot.slane %v752, 1
  %v768 = vsel %vm709, %v763, %v767
  %769 = vrot.lane.b32.xlu0 %v761, 1
  %v770 = vpop.permute.xlu0 %769
  %771 = vrot.lane.b32.xlu0 %v764, 1
  %v772 = vpop.permute.xlu0 %771
  %773 = vrot.lane.b32.xlu0 %v766, 1
  %v774 = vpop.permute.xlu0 %773
  %775 = vrot.lane.b32.xlu0 %v768, 1
  %v776 = vpop.permute.xlu0 %775
  %v777 = vsel %vm728, %v770, %v772
  %v778 = vsel %vm728, %v774, %v776
  %v783 = vadd.f32 %v616, %v770
  %v784 = vadd.f32 %v617, %v777
  %v785 = vadd.f32 %v618, %v774
  %v786 = vadd.f32 %v619, %v778
  %v787 = vlaneseq
  %v788 = vshrl.u32 %v787, 7
  %v789 = vsub.s32 7, %v788
  %v790 = vrot.slane %v66, %v789
  %792 = vrot.lane.b32.xlu0 %v790, 119
  %v793 = vpop.permute.xlu0 %792
  %v795 = vmul.f32 %v55, %v793
  %v796 = vmul.f32 %v56, %v793
  %v797 = vmul.f32 %v58, %v793
  %v798 = vmul.f32 %v59, %v793
  %v799 = vmul.f32 %v61, %v793
  %v800 = vmul.f32 %v62, %v793
  %v807 = vrot.slane %v795, 1
  %v808 = vrot.slane %v797, 1
  %v809 = vsel %vm709, %v807, %v808
  %v810 = vrot.slane %v796, 1
  %v811 = vrot.slane %v798, 1
  %v812 = vsel %vm709, %v810, %v811
  %v813 = vrot.slane %v799, 1
  %v814 = vsel %vm709, %v808, %v813
  %v815 = vrot.slane %v800, 1
  %v816 = vsel %vm709, %v811, %v815
  %817 = vrot.lane.b32.xlu0 %v809, 1
  %v818 = vpop.permute.xlu0 %817
  %819 = vrot.lane.b32.xlu0 %v812, 1
  %v820 = vpop.permute.xlu0 %819
  %821 = vrot.lane.b32.xlu0 %v814, 1
  %v822 = vpop.permute.xlu0 %821
  %823 = vrot.lane.b32.xlu0 %v816, 1
  %v824 = vpop.permute.xlu0 %823
  %v825 = vsel %vm728, %v818, %v820
  %v826 = vsel %vm728, %v822, %v824
  %v831 = vadd.f32 %v650, %v818
  %v832 = vadd.f32 %v651, %v825
  %v833 = vadd.f32 %v652, %v822
  %v834 = vadd.f32 %v653, %v826
  %v835 = vlaneseq
  %v836 = vshrl.u32 %v835, 7
  %v837 = vsub.s32 0, %v836
  %v838 = vrot.slane %v67, %v837
  %840 = vrot.lane.b32.xlu0 %v838, 120
  %v841 = vpop.permute.xlu0 %840
  %v843 = vmul.f32 %v55, %v841
  %v844 = vmul.f32 %v56, %v841
  %v845 = vmul.f32 %v58, %v841
  %v846 = vmul.f32 %v59, %v841
  %v847 = vmul.f32 %v61, %v841
  %v848 = vmul.f32 %v62, %v841
  %v855 = vrot.slane %v843, 1
  %v856 = vrot.slane %v845, 1
  %v857 = vsel %vm709, %v855, %v856
  %v858 = vrot.slane %v844, 1
  %v859 = vrot.slane %v846, 1
  %v860 = vsel %vm709, %v858, %v859
  %v861 = vrot.slane %v847, 1
  %v862 = vsel %vm709, %v856, %v861
  %v863 = vrot.slane %v848, 1
  %v864 = vsel %vm709, %v859, %v863
  %865 = vrot.lane.b32.xlu0 %v857, 125
  %v866 = vpop.permute.xlu0 %865
  %867 = vrot.lane.b32.xlu0 %v860, 125
  %v868 = vpop.permute.xlu0 %867
  %869 = vrot.lane.b32.xlu0 %v862, 125
  %v870 = vpop.permute.xlu0 %869
  %871 = vrot.lane.b32.xlu0 %v864, 125
  %v872 = vpop.permute.xlu0 %871
  %vm873 = vcmask 1022976
  %v874 = vsel %vm873, %v866, %v868
  %v875 = vsel %vm873, %v870, %v872
  %v880 = vadd.f32 %v685, %v874
  %v881 = vadd.f32 %v686, %v868
  %v882 = vadd.f32 %v687, %v875
  %v883 = vadd.f32 %v688, %v872
  %v884 = vlaneseq
  %v885 = vshrl.u32 %v884, 7
  %v886 = vsub.s32 1, %v885
  %v887 = vrot.slane %v67, %v886
  %889 = vrot.lane.b32.xlu0 %v887, 121
  %v890 = vpop.permute.xlu0 %889
  %v892 = vmul.f32 %v55, %v890
  %v893 = vmul.f32 %v56, %v890
  %v894 = vmul.f32 %v58, %v890
  %v895 = vmul.f32 %v59, %v890
  %v896 = vmul.f32 %v61, %v890
  %v897 = vmul.f32 %v62, %v890
  %v904 = vrot.slane %v892, 1
  %v905 = vrot.slane %v894, 1
  %v906 = vsel %vm709, %v904, %v905
  %v907 = vrot.slane %v893, 1
  %v908 = vrot.slane %v895, 1
  %v909 = vsel %vm709, %v907, %v908
  %v910 = vrot.slane %v896, 1
  %v911 = vsel %vm709, %v905, %v910
  %v912 = vrot.slane %v897, 1
  %v913 = vsel %vm709, %v908, %v912
  %914 = vrot.lane.b32.xlu0 %v906, 125
  %v915 = vpop.permute.xlu0 %914
  %916 = vrot.lane.b32.xlu0 %v909, 125
  %v917 = vpop.permute.xlu0 %916
  %918 = vrot.lane.b32.xlu0 %v911, 125
  %v919 = vpop.permute.xlu0 %918
  %920 = vrot.lane.b32.xlu0 %v913, 125
  %v921 = vpop.permute.xlu0 %920
  %v922 = vsel %vm873, %v915, %v917
  %v923 = vsel %vm873, %v919, %v921
  %v928 = vadd.f32 %v735, %v922
  %v929 = vadd.f32 %v736, %v917
  %v930 = vadd.f32 %v737, %v923
  %v931 = vadd.f32 %v738, %v921
  %v932 = vlaneseq
  %v933 = vshrl.u32 %v932, 7
  %v934 = vsub.s32 2, %v933
  %v935 = vrot.slane %v67, %v934
  %937 = vrot.lane.b32.xlu0 %v935, 122
  %v938 = vpop.permute.xlu0 %937
  %v940 = vmul.f32 %v55, %v938
  %v941 = vmul.f32 %v56, %v938
  %v942 = vmul.f32 %v58, %v938
  %v943 = vmul.f32 %v59, %v938
  %v944 = vmul.f32 %v61, %v938
  %v945 = vmul.f32 %v62, %v938
  %v952 = vrot.slane %v940, 1
  %v953 = vrot.slane %v942, 1
  %v954 = vsel %vm709, %v952, %v953
  %v955 = vrot.slane %v941, 1
  %v956 = vrot.slane %v943, 1
  %v957 = vsel %vm709, %v955, %v956
  %v958 = vrot.slane %v944, 1
  %v959 = vsel %vm709, %v953, %v958
  %v960 = vrot.slane %v945, 1
  %v961 = vsel %vm709, %v956, %v960
  %962 = vrot.lane.b32.xlu0 %v954, 125
  %v963 = vpop.permute.xlu0 %962
  %964 = vrot.lane.b32.xlu0 %v957, 125
  %v965 = vpop.permute.xlu0 %964
  %966 = vrot.lane.b32.xlu0 %v959, 125
  %v967 = vpop.permute.xlu0 %966
  %968 = vrot.lane.b32.xlu0 %v961, 125
  %v969 = vpop.permute.xlu0 %968
  %v970 = vsel %vm873, %v963, %v965
  %v971 = vsel %vm873, %v967, %v969
  %v976 = vadd.f32 %v783, %v970
  %v977 = vadd.f32 %v784, %v965
  %v978 = vadd.f32 %v785, %v971
  %v979 = vadd.f32 %v786, %v969
  %v980 = vlaneseq
  %v981 = vshrl.u32 %v980, 7
  %v982 = vsub.s32 3, %v981
  %v983 = vrot.slane %v67, %v982
  %985 = vrot.lane.b32.xlu0 %v983, 123
  %v986 = vpop.permute.xlu0 %985
  %v988 = vmul.f32 %v55, %v986
  %v989 = vmul.f32 %v56, %v986
  %v990 = vmul.f32 %v58, %v986
  %v991 = vmul.f32 %v59, %v986
  %v992 = vmul.f32 %v61, %v986
  %v993 = vmul.f32 %v62, %v986
  %v1000 = vrot.slane %v988, 1
  %v1001 = vrot.slane %v990, 1
  %v1002 = vsel %vm709, %v1000, %v1001
  %v1003 = vrot.slane %v989, 1
  %v1004 = vrot.slane %v991, 1
  %v1005 = vsel %vm709, %v1003, %v1004
  %v1006 = vrot.slane %v992, 1
  %v1007 = vsel %vm709, %v1001, %v1006
  %v1008 = vrot.slane %v993, 1
  %v1009 = vsel %vm709, %v1004, %v1008
  %1010 = vrot.lane.b32.xlu0 %v1002, 125
  %v1011 = vpop.permute.xlu0 %1010
  %1012 = vrot.lane.b32.xlu0 %v1005, 125
  %v1013 = vpop.permute.xlu0 %1012
  %1014 = vrot.lane.b32.xlu0 %v1007, 125
  %v1015 = vpop.permute.xlu0 %1014
  %1016 = vrot.lane.b32.xlu0 %v1009, 125
  %v1017 = vpop.permute.xlu0 %1016
  %v1018 = vsel %vm873, %v1011, %v1013
  %v1019 = vsel %vm873, %v1015, %v1017
  %v1024 = vadd.f32 %v831, %v1018
  %v1025 = vadd.f32 %v832, %v1013
  %v1026 = vadd.f32 %v833, %v1019
  %v1027 = vadd.f32 %v834, %v1017
  %v1028 = vlaneseq
  %v1029 = vshrl.u32 %v1028, 7
  %v1030 = vsub.s32 4, %v1029
  %v1031 = vrot.slane %v67, %v1030
  %1033 = vrot.lane.b32.xlu0 %v1031, 125
  %v1034 = vpop.permute.xlu0 %1033
  %v1036 = vmul.f32 %v55, %v1034
  %v1037 = vmul.f32 %v56, %v1034
  %v1038 = vmul.f32 %v58, %v1034
  %v1039 = vmul.f32 %v59, %v1034
  %v1040 = vmul.f32 %v61, %v1034
  %v1041 = vmul.f32 %v62, %v1034
  %v1048 = vrot.slane %v1036, 1
  %v1049 = vrot.slane %v1038, 1
  %v1050 = vsel %vm709, %v1048, %v1049
  %v1051 = vrot.slane %v1037, 1
  %v1052 = vrot.slane %v1039, 1
  %v1053 = vsel %vm709, %v1051, %v1052
  %v1054 = vrot.slane %v1040, 1
  %v1055 = vsel %vm709, %v1049, %v1054
  %v1056 = vrot.slane %v1041, 1
  %v1057 = vsel %vm709, %v1052, %v1056
  %1058 = vrot.lane.b32.xlu0 %v1050, 120
  %v1059 = vpop.permute.xlu0 %1058
  %1060 = vrot.lane.b32.xlu0 %v1053, 120
  %v1061 = vpop.permute.xlu0 %1060
  %1062 = vrot.lane.b32.xlu0 %v1055, 120
  %v1063 = vpop.permute.xlu0 %1062
  %1064 = vrot.lane.b32.xlu0 %v1057, 120
  %v1065 = vpop.permute.xlu0 %1064
  %vm1066 = vcmask 982016
  %v1067 = vsel %vm1066, %v1059, %v1061
  %v1068 = vsel %vm1066, %v1063, %v1065
  %v1073 = vadd.f32 %v880, %v1067
  %v1074 = vadd.f32 %v881, %v1061
  %v1075 = vadd.f32 %v882, %v1068
  %v1076 = vadd.f32 %v883, %v1065
  %v1077 = vlaneseq
  %v1078 = vshrl.u32 %v1077, 7
  %v1079 = vsub.s32 5, %v1078
  %v1080 = vrot.slane %v67, %v1079
  %1082 = vrot.lane.b32.xlu0 %v1080, 126
  %v1083 = vpop.permute.xlu0 %1082
  %v1085 = vmul.f32 %v55, %v1083
  %v1086 = vmul.f32 %v56, %v1083
  %v1087 = vmul.f32 %v58, %v1083
  %v1088 = vmul.f32 %v59, %v1083
  %v1089 = vmul.f32 %v61, %v1083
  %v1090 = vmul.f32 %v62, %v1083
  %v1097 = vrot.slane %v1085, 1
  %v1098 = vrot.slane %v1087, 1
  %v1099 = vsel %vm709, %v1097, %v1098
  %v1100 = vrot.slane %v1086, 1
  %v1101 = vrot.slane %v1088, 1
  %v1102 = vsel %vm709, %v1100, %v1101
  %v1103 = vrot.slane %v1089, 1
  %v1104 = vsel %vm709, %v1098, %v1103
  %v1105 = vrot.slane %v1090, 1
  %v1106 = vsel %vm709, %v1101, %v1105
  %1107 = vrot.lane.b32.xlu0 %v1099, 120
  %v1108 = vpop.permute.xlu0 %1107
  %1109 = vrot.lane.b32.xlu0 %v1102, 120
  %v1110 = vpop.permute.xlu0 %1109
  %1111 = vrot.lane.b32.xlu0 %v1104, 120
  %v1112 = vpop.permute.xlu0 %1111
  %1113 = vrot.lane.b32.xlu0 %v1106, 120
  %v1114 = vpop.permute.xlu0 %1113
  %v1115 = vsel %vm1066, %v1108, %v1110
  %v1116 = vsel %vm1066, %v1112, %v1114
  %v1121 = vadd.f32 %v928, %v1115
  %v1122 = vadd.f32 %v929, %v1110
  %v1123 = vadd.f32 %v930, %v1116
  %v1124 = vadd.f32 %v931, %v1114
  %v1125 = vlaneseq
  %v1126 = vshrl.u32 %v1125, 7
  %v1127 = vsub.s32 6, %v1126
  %v1128 = vrot.slane %v67, %v1127
  %1130 = vrot.lane.b32.xlu0 %v1128, 127
  %v1131 = vpop.permute.xlu0 %1130
  %v1133 = vmul.f32 %v55, %v1131
  %v1134 = vmul.f32 %v56, %v1131
  %v1135 = vmul.f32 %v58, %v1131
  %v1136 = vmul.f32 %v59, %v1131
  %v1137 = vmul.f32 %v61, %v1131
  %v1138 = vmul.f32 %v62, %v1131
  %v1145 = vrot.slane %v1133, 1
  %v1146 = vrot.slane %v1135, 1
  %v1147 = vsel %vm709, %v1145, %v1146
  %v1148 = vrot.slane %v1134, 1
  %v1149 = vrot.slane %v1136, 1
  %v1150 = vsel %vm709, %v1148, %v1149
  %v1151 = vrot.slane %v1137, 1
  %v1152 = vsel %vm709, %v1146, %v1151
  %v1153 = vrot.slane %v1138, 1
  %v1154 = vsel %vm709, %v1149, %v1153
  %1155 = vrot.lane.b32.xlu0 %v1147, 120
  %v1156 = vpop.permute.xlu0 %1155
  %1157 = vrot.lane.b32.xlu0 %v1150, 120
  %v1158 = vpop.permute.xlu0 %1157
  %1159 = vrot.lane.b32.xlu0 %v1152, 120
  %v1160 = vpop.permute.xlu0 %1159
  %1161 = vrot.lane.b32.xlu0 %v1154, 120
  %v1162 = vpop.permute.xlu0 %1161
  %v1163 = vsel %vm1066, %v1156, %v1158
  %v1164 = vsel %vm1066, %v1160, %v1162
  %v1169 = vadd.f32 %v976, %v1163
  %v1170 = vadd.f32 %v977, %v1158
  %v1171 = vadd.f32 %v978, %v1164
  %v1172 = vadd.f32 %v979, %v1162
  %v1173 = vlaneseq
  %v1174 = vshrl.u32 %v1173, 7
  %v1175 = vsub.s32 7, %v1174
  %v1176 = vrot.slane %v67, %v1175
  %v1177 = vmul.f32 %v56, %v1176
  %v1178 = vmul.f32 %v59, %v1176
  %v1179 = vmul.f32 %v62, %v1176
  %v1183 = vrot.slane %v1177, 1
  %v1184 = vrot.slane %v1178, 1
  %v1185 = vsel %vm709, %v1183, %v1184
  %v1186 = vrot.slane %v1179, 1
  %v1187 = vsel %vm709, %v1184, %v1186
  %1188 = vrot.lane.b32.xlu0 %v1185, 120
  %v1189 = vpop.permute.xlu0 %1188
  %1190 = vrot.lane.b32.xlu0 %v1187, 120
  %v1191 = vpop.permute.xlu0 %1190
  %v1194 = vadd.f32 %v1024, %v1189
  %v1195 = vadd.f32 %v1025, %v1189
  %v1196 = vadd.f32 %v1026, %v1191
  %v1197 = vadd.f32 %v1027, %v1191
  %v1198 = vlaneseq
  %v1199 = vshrl.u32 %v1198, 7
  %v1200 = vsub.s32 0, %v1199
  %v1201 = vrot.slane %v68, %v1200
  %1203 = vrot.lane.b32.xlu0 %v1201, 1
  %v1204 = vpop.permute.xlu0 %1203
  %v1206 = vmul.f32 %v56, %v1204
  %v1207 = vmul.f32 %v57, %v1204
  %v1208 = vmul.f32 %v59, %v1204
  %v1209 = vmul.f32 %v60, %v1204
  %v1210 = vmul.f32 %v62, %v1204
  %v1211 = vmul.f32 %v63, %v1204
  %v1218 = vrot.slane %v1206, 1
  %v1219 = vrot.slane %v1208, 1
  %v1220 = vsel %vm709, %v1218, %v1219
  %v1221 = vrot.slane %v1207, 1
  %v1222 = vrot.slane %v1209, 1
  %v1223 = vsel %vm709, %v1221, %v1222
  %v1224 = vrot.slane %v1210, 1
  %v1225 = vsel %vm709, %v1219, %v1224
  %v1226 = vrot.slane %v1211, 1
  %v1227 = vsel %vm709, %v1222, %v1226
  %1228 = vrot.lane.b32.xlu0 %v1220, 116
  %v1229 = vpop.permute.xlu0 %1228
  %1230 = vrot.lane.b32.xlu0 %v1223, 116
  %v1231 = vpop.permute.xlu0 %1230
  %1232 = vrot.lane.b32.xlu0 %v1225, 116
  %v1233 = vpop.permute.xlu0 %1232
  %1234 = vrot.lane.b32.xlu0 %v1227, 116
  %v1235 = vpop.permute.xlu0 %1234
  %vm1236 = vcmask 949248
  %v1237 = vsel %vm1236, %v1229, %v1231
  %v1238 = vsel %vm1236, %v1233, %v1235
  %v1243 = vadd.f32 %v1073, %v1229
  %v1244 = vadd.f32 %v1074, %v1237
  %v1245 = vadd.f32 %v1075, %v1233
  %v1246 = vadd.f32 %v1076, %v1238
  %v1247 = vlaneseq
  %v1248 = vshrl.u32 %v1247, 7
  %v1249 = vsub.s32 1, %v1248
  %v1250 = vrot.slane %v68, %v1249
  %1252 = vrot.lane.b32.xlu0 %v1250, 2
  %v1253 = vpop.permute.xlu0 %1252
  %v1255 = vmul.f32 %v56, %v1253
  %v1256 = vmul.f32 %v57, %v1253
  %v1257 = vmul.f32 %v59, %v1253
  %v1258 = vmul.f32 %v60, %v1253
  %v1259 = vmul.f32 %v62, %v1253
  %v1260 = vmul.f32 %v63, %v1253
  %v1267 = vrot.slane %v1255, 1
  %v1268 = vrot.slane %v1257, 1
  %v1269 = vsel %vm709, %v1267, %v1268
  %v1270 = vrot.slane %v1256, 1
  %v1271 = vrot.slane %v1258, 1
  %v1272 = vsel %vm709, %v1270, %v1271
  %v1273 = vrot.slane %v1259, 1
  %v1274 = vsel %vm709, %v1268, %v1273
  %v1275 = vrot.slane %v1260, 1
  %v1276 = vsel %vm709, %v1271, %v1275
  %1277 = vrot.lane.b32.xlu0 %v1269, 116
  %v1278 = vpop.permute.xlu0 %1277
  %1279 = vrot.lane.b32.xlu0 %v1272, 116
  %v1280 = vpop.permute.xlu0 %1279
  %1281 = vrot.lane.b32.xlu0 %v1274, 116
  %v1282 = vpop.permute.xlu0 %1281
  %1283 = vrot.lane.b32.xlu0 %v1276, 116
  %v1284 = vpop.permute.xlu0 %1283
  %v1285 = vsel %vm1236, %v1278, %v1280
  %v1286 = vsel %vm1236, %v1282, %v1284
  %v1291 = vadd.f32 %v1121, %v1278
  %v1292 = vadd.f32 %v1122, %v1285
  %v1293 = vadd.f32 %v1123, %v1282
  %v1294 = vadd.f32 %v1124, %v1286
  %v1295 = vlaneseq
  %v1296 = vshrl.u32 %v1295, 7
  %v1297 = vsub.s32 2, %v1296
  %v1298 = vrot.slane %v68, %v1297
  %1300 = vrot.lane.b32.xlu0 %v1298, 3
  %v1301 = vpop.permute.xlu0 %1300
  %v1303 = vmul.f32 %v56, %v1301
  %v1304 = vmul.f32 %v57, %v1301
  %v1305 = vmul.f32 %v59, %v1301
  %v1306 = vmul.f32 %v60, %v1301
  %v1307 = vmul.f32 %v62, %v1301
  %v1308 = vmul.f32 %v63, %v1301
  %v1315 = vrot.slane %v1303, 1
  %v1316 = vrot.slane %v1305, 1
  %v1317 = vsel %vm709, %v1315, %v1316
  %v1318 = vrot.slane %v1304, 1
  %v1319 = vrot.slane %v1306, 1
  %v1320 = vsel %vm709, %v1318, %v1319
  %v1321 = vrot.slane %v1307, 1
  %v1322 = vsel %vm709, %v1316, %v1321
  %v1323 = vrot.slane %v1308, 1
  %v1324 = vsel %vm709, %v1319, %v1323
  %1325 = vrot.lane.b32.xlu0 %v1317, 116
  %v1326 = vpop.permute.xlu0 %1325
  %1327 = vrot.lane.b32.xlu0 %v1320, 116
  %v1328 = vpop.permute.xlu0 %1327
  %1329 = vrot.lane.b32.xlu0 %v1322, 116
  %v1330 = vpop.permute.xlu0 %1329
  %1331 = vrot.lane.b32.xlu0 %v1324, 116
  %v1332 = vpop.permute.xlu0 %1331
  %v1333 = vsel %vm1236, %v1326, %v1328
  %v1334 = vsel %vm1236, %v1330, %v1332
  %v1339 = vadd.f32 %v1169, %v1326
  %v1340 = vadd.f32 %v1170, %v1333
  %v1341 = vadd.f32 %v1171, %v1330
  %v1342 = vadd.f32 %v1172, %v1334
  %v1343 = vlaneseq
  %v1344 = vshrl.u32 %v1343, 7
  %v1345 = vsub.s32 3, %v1344
  %v1346 = vrot.slane %v68, %v1345
  %1348 = vrot.lane.b32.xlu0 %v1346, 5
  %v1349 = vpop.permute.xlu0 %1348
  %v1351 = vmul.f32 %v56, %v1349
  %v1352 = vmul.f32 %v57, %v1349
  %v1353 = vmul.f32 %v59, %v1349
  %v1354 = vmul.f32 %v60, %v1349
  %v1355 = vmul.f32 %v62, %v1349
  %v1356 = vmul.f32 %v63, %v1349
  %v1363 = vrot.slane %v1351, 1
  %v1364 = vrot.slane %v1353, 1
  %v1365 = vsel %vm709, %v1363, %v1364
  %v1366 = vrot.slane %v1352, 1
  %v1367 = vrot.slane %v1354, 1
  %v1368 = vsel %vm709, %v1366, %v1367
  %v1369 = vrot.slane %v1355, 1
  %v1370 = vsel %vm709, %v1364, %v1369
  %v1371 = vrot.slane %v1356, 1
  %v1372 = vsel %vm709, %v1367, %v1371
  %1373 = vrot.lane.b32.xlu0 %v1365, 115
  %v1374 = vpop.permute.xlu0 %1373
  %1375 = vrot.lane.b32.xlu0 %v1368, 115
  %v1376 = vpop.permute.xlu0 %1375
  %1377 = vrot.lane.b32.xlu0 %v1370, 115
  %v1378 = vpop.permute.xlu0 %1377
  %1379 = vrot.lane.b32.xlu0 %v1372, 115
  %v1380 = vpop.permute.xlu0 %1379
  %v1381 = vsel %vm403, %v1374, %v1376
  %v1382 = vsel %vm403, %v1378, %v1380
  %v1387 = vadd.f32 %v1194, %v1374
  %v1388 = vadd.f32 %v1195, %v1381
  %v1389 = vadd.f32 %v1196, %v1378
  %v1390 = vadd.f32 %v1197, %v1382
  %v1391 = vlaneseq
  %v1392 = vshrl.u32 %v1391, 7
  %v1393 = vsub.s32 4, %v1392
  %v1394 = vrot.slane %v68, %v1393
  %1396 = vrot.lane.b32.xlu0 %v1394, 6
  %v1397 = vpop.permute.xlu0 %1396
  %v1399 = vmul.f32 %v56, %v1397
  %v1400 = vmul.f32 %v57, %v1397
  %v1401 = vmul.f32 %v59, %v1397
  %v1402 = vmul.f32 %v60, %v1397
  %v1403 = vmul.f32 %v62, %v1397
  %v1404 = vmul.f32 %v63, %v1397
  %v1411 = vrot.slane %v1399, 1
  %v1412 = vrot.slane %v1401, 1
  %v1413 = vsel %vm709, %v1411, %v1412
  %v1414 = vrot.slane %v1400, 1
  %v1415 = vrot.slane %v1402, 1
  %v1416 = vsel %vm709, %v1414, %v1415
  %v1417 = vrot.slane %v1403, 1
  %v1418 = vsel %vm709, %v1412, %v1417
  %v1419 = vrot.slane %v1404, 1
  %v1420 = vsel %vm709, %v1415, %v1419
  %1421 = vrot.lane.b32.xlu0 %v1413, 111
  %v1422 = vpop.permute.xlu0 %1421
  %1423 = vrot.lane.b32.xlu0 %v1416, 111
  %v1424 = vpop.permute.xlu0 %1423
  %1425 = vrot.lane.b32.xlu0 %v1418, 111
  %v1426 = vpop.permute.xlu0 %1425
  %1427 = vrot.lane.b32.xlu0 %v1420, 111
  %v1428 = vpop.permute.xlu0 %1427
  %vm1429 = vcmask 908288
  %v1430 = vsel %vm1429, %v1422, %v1424
  %v1431 = vsel %vm1429, %v1426, %v1428
  %v1436 = vadd.f32 %v1243, %v1422
  %v1437 = vadd.f32 %v1244, %v1430
  %v1438 = vadd.f32 %v1245, %v1426
  %v1439 = vadd.f32 %v1246, %v1431
  %v1440 = vlaneseq
  %v1441 = vshrl.u32 %v1440, 7
  %v1442 = vsub.s32 5, %v1441
  %v1443 = vrot.slane %v68, %v1442
  %1445 = vrot.lane.b32.xlu0 %v1443, 7
  %v1446 = vpop.permute.xlu0 %1445
  %v1448 = vmul.f32 %v56, %v1446
  %v1449 = vmul.f32 %v57, %v1446
  %v1450 = vmul.f32 %v59, %v1446
  %v1451 = vmul.f32 %v60, %v1446
  %v1452 = vmul.f32 %v62, %v1446
  %v1453 = vmul.f32 %v63, %v1446
  %v1460 = vrot.slane %v1448, 1
  %v1461 = vrot.slane %v1450, 1
  %v1462 = vsel %vm709, %v1460, %v1461
  %v1463 = vrot.slane %v1449, 1
  %v1464 = vrot.slane %v1451, 1
  %v1465 = vsel %vm709, %v1463, %v1464
  %v1466 = vrot.slane %v1452, 1
  %v1467 = vsel %vm709, %v1461, %v1466
  %v1468 = vrot.slane %v1453, 1
  %v1469 = vsel %vm709, %v1464, %v1468
  %1470 = vrot.lane.b32.xlu0 %v1462, 111
  %v1471 = vpop.permute.xlu0 %1470
  %1472 = vrot.lane.b32.xlu0 %v1465, 111
  %v1473 = vpop.permute.xlu0 %1472
  %1474 = vrot.lane.b32.xlu0 %v1467, 111
  %v1475 = vpop.permute.xlu0 %1474
  %1476 = vrot.lane.b32.xlu0 %v1469, 111
  %v1477 = vpop.permute.xlu0 %1476
  %v1478 = vsel %vm1429, %v1471, %v1473
  %v1479 = vsel %vm1429, %v1475, %v1477
  %v1484 = vadd.f32 %v1291, %v1471
  %v1485 = vadd.f32 %v1292, %v1478
  %v1486 = vadd.f32 %v1293, %v1475
  %v1487 = vadd.f32 %v1294, %v1479
  %v1488 = vlaneseq
  %v1489 = vshrl.u32 %v1488, 7
  %v1490 = vsub.s32 6, %v1489
  %v1491 = vrot.slane %v68, %v1490
  %1493 = vrot.lane.b32.xlu0 %v1491, 8
  %v1494 = vpop.permute.xlu0 %1493
  %v1496 = vmul.f32 %v56, %v1494
  %v1497 = vmul.f32 %v57, %v1494
  %v1498 = vmul.f32 %v59, %v1494
  %v1499 = vmul.f32 %v60, %v1494
  %v1500 = vmul.f32 %v62, %v1494
  %v1501 = vmul.f32 %v63, %v1494
  %v1508 = vrot.slane %v1496, 1
  %v1509 = vrot.slane %v1498, 1
  %v1510 = vsel %vm709, %v1508, %v1509
  %v1511 = vrot.slane %v1497, 1
  %v1512 = vrot.slane %v1499, 1
  %v1513 = vsel %vm709, %v1511, %v1512
  %v1514 = vrot.slane %v1500, 1
  %v1515 = vsel %vm709, %v1509, %v1514
  %v1516 = vrot.slane %v1501, 1
  %v1517 = vsel %vm709, %v1512, %v1516
  %1518 = vrot.lane.b32.xlu0 %v1510, 111
  %v1519 = vpop.permute.xlu0 %1518
  %1520 = vrot.lane.b32.xlu0 %v1513, 111
  %v1521 = vpop.permute.xlu0 %1520
  %1522 = vrot.lane.b32.xlu0 %v1515, 111
  %v1523 = vpop.permute.xlu0 %1522
  %1524 = vrot.lane.b32.xlu0 %v1517, 111
  %v1525 = vpop.permute.xlu0 %1524
  %v1526 = vsel %vm1429, %v1519, %v1521
  %v1527 = vsel %vm1429, %v1523, %v1525
  %v1532 = vadd.f32 %v1339, %v1519
  %v1533 = vadd.f32 %v1340, %v1526
  %v1534 = vadd.f32 %v1341, %v1523
  %v1535 = vadd.f32 %v1342, %v1527
  %v1536 = vlaneseq
  %v1537 = vshrl.u32 %v1536, 7
  %v1538 = vsub.s32 7, %v1537
  %v1539 = vrot.slane %v68, %v1538
  %1541 = vrot.lane.b32.xlu0 %v1539, 9
  %v1542 = vpop.permute.xlu0 %1541
  %v1544 = vmul.f32 %v56, %v1542
  %v1545 = vmul.f32 %v57, %v1542
  %v1546 = vmul.f32 %v59, %v1542
  %v1547 = vmul.f32 %v60, %v1542
  %v1548 = vmul.f32 %v62, %v1542
  %v1549 = vmul.f32 %v63, %v1542
  %v1556 = vrot.slane %v1544, 1
  %v1557 = vrot.slane %v1546, 1
  %v1558 = vsel %vm709, %v1556, %v1557
  %v1559 = vrot.slane %v1545, 1
  %v1560 = vrot.slane %v1547, 1
  %v1561 = vsel %vm709, %v1559, %v1560
  %v1562 = vrot.slane %v1548, 1
  %v1563 = vsel %vm709, %v1557, %v1562
  %v1564 = vrot.slane %v1549, 1
  %v1565 = vsel %vm709, %v1560, %v1564
  %1566 = vrot.lane.b32.xlu0 %v1558, 111
  %v1567 = vpop.permute.xlu0 %1566
  %1568 = vrot.lane.b32.xlu0 %v1561, 111
  %v1569 = vpop.permute.xlu0 %1568
  %1570 = vrot.lane.b32.xlu0 %v1563, 111
  %v1571 = vpop.permute.xlu0 %1570
  %1572 = vrot.lane.b32.xlu0 %v1565, 111
  %v1573 = vpop.permute.xlu0 %1572
  %v1574 = vsel %vm1429, %v1567, %v1569
  %v1575 = vsel %vm1429, %v1571, %v1573
  %v1580 = vadd.f32 %v1387, %v1567
  %v1581 = vadd.f32 %v1388, %v1574
  %v1582 = vadd.f32 %v1389, %v1571
  %v1583 = vadd.f32 %v1390, %v1575
  %v1584 = vlaneseq
  %v1585 = vshrl.u32 %v1584, 7
  %v1586 = vsub.s32 0, %v1585
  %v1587 = vrot.slane %v69, %v1586
  %1589 = vrot.lane.b32.xlu0 %v1587, 10
  %v1590 = vpop.permute.xlu0 %1589
  %v1592 = vmul.f32 %v56, %v1590
  %v1593 = vmul.f32 %v57, %v1590
  %v1594 = vmul.f32 %v59, %v1590
  %v1595 = vmul.f32 %v60, %v1590
  %v1596 = vmul.f32 %v62, %v1590
  %v1597 = vmul.f32 %v63, %v1590
  %v1604 = vrot.slane %v1592, 1
  %v1605 = vrot.slane %v1594, 1
  %v1606 = vsel %vm709, %v1604, %v1605
  %v1607 = vrot.slane %v1593, 1
  %v1608 = vrot.slane %v1595, 1
  %v1609 = vsel %vm709, %v1607, %v1608
  %v1610 = vrot.slane %v1596, 1
  %v1611 = vsel %vm709, %v1605, %v1610
  %v1612 = vrot.slane %v1597, 1
  %v1613 = vsel %vm709, %v1608, %v1612
  %1614 = vrot.lane.b32.xlu0 %v1606, 107
  %v1615 = vpop.permute.xlu0 %1614
  %1616 = vrot.lane.b32.xlu0 %v1609, 107
  %v1617 = vpop.permute.xlu0 %1616
  %1618 = vrot.lane.b32.xlu0 %v1611, 107
  %v1619 = vpop.permute.xlu0 %1618
  %1620 = vrot.lane.b32.xlu0 %v1613, 107
  %v1621 = vpop.permute.xlu0 %1620
  %vm1622 = vcmask 875520
  %v1623 = vsel %vm1622, %v1615, %v1617
  %v1624 = vsel %vm1622, %v1619, %v1621
  %v1629 = vadd.f32 %v1436, %v1615
  %v1630 = vadd.f32 %v1437, %v1623
  %v1631 = vadd.f32 %v1438, %v1619
  %v1632 = vadd.f32 %v1439, %v1624
  %v1633 = vlaneseq
  %v1634 = vshrl.u32 %v1633, 7
  %v1635 = vsub.s32 1, %v1634
  %v1636 = vrot.slane %v69, %v1635
  %1638 = vrot.lane.b32.xlu0 %v1636, 11
  %v1639 = vpop.permute.xlu0 %1638
  %v1641 = vmul.f32 %v56, %v1639
  %v1642 = vmul.f32 %v57, %v1639
  %v1643 = vmul.f32 %v59, %v1639
  %v1644 = vmul.f32 %v60, %v1639
  %v1645 = vmul.f32 %v62, %v1639
  %v1646 = vmul.f32 %v63, %v1639
  %v1653 = vrot.slane %v1641, 1
  %v1654 = vrot.slane %v1643, 1
  %v1655 = vsel %vm709, %v1653, %v1654
  %v1656 = vrot.slane %v1642, 1
  %v1657 = vrot.slane %v1644, 1
  %v1658 = vsel %vm709, %v1656, %v1657
  %v1659 = vrot.slane %v1645, 1
  %v1660 = vsel %vm709, %v1654, %v1659
  %v1661 = vrot.slane %v1646, 1
  %v1662 = vsel %vm709, %v1657, %v1661
  %1663 = vrot.lane.b32.xlu0 %v1655, 107
  %v1664 = vpop.permute.xlu0 %1663
  %1665 = vrot.lane.b32.xlu0 %v1658, 107
  %v1666 = vpop.permute.xlu0 %1665
  %1667 = vrot.lane.b32.xlu0 %v1660, 107
  %v1668 = vpop.permute.xlu0 %1667
  %1669 = vrot.lane.b32.xlu0 %v1662, 107
  %v1670 = vpop.permute.xlu0 %1669
  %v1671 = vsel %vm1622, %v1664, %v1666
  %v1672 = vsel %vm1622, %v1668, %v1670
  %v1677 = vadd.f32 %v1484, %v1664
  %v1678 = vadd.f32 %v1485, %v1671
  %v1679 = vadd.f32 %v1486, %v1668
  %v1680 = vadd.f32 %v1487, %v1672
  %v1681 = vlaneseq
  %v1682 = vshrl.u32 %v1681, 7
  %v1683 = vsub.s32 2, %v1682
  %v1684 = vrot.slane %v69, %v1683
  %1686 = vrot.lane.b32.xlu0 %v1684, 117
  %v1687 = vpop.permute.xlu0 %1686
  %v1689 = vmul.f32 %v55, %v1687
  %v1690 = vmul.f32 %v56, %v1687
  %v1691 = vmul.f32 %v58, %v1687
  %v1692 = vmul.f32 %v59, %v1687
  %v1693 = vmul.f32 %v61, %v1687
  %v1694 = vmul.f32 %v62, %v1687
  %vm1701 = vcmask 1045504
  %v1702 = vrot.slane %v1689, 2
  %v1703 = vrot.slane %v1691, 2
  %v1704 = vsel %vm1701, %v1702, %v1703
  %v1705 = vrot.slane %v1690, 2
  %v1706 = vrot.slane %v1692, 2
  %v1707 = vsel %vm1701, %v1705, %v1706
  %v1708 = vrot.slane %v1693, 2
  %v1709 = vsel %vm1701, %v1703, %v1708
  %v1710 = vrot.slane %v1694, 2
  %v1711 = vsel %vm1701, %v1706, %v1710
  %1712 = vrot.lane.b32.xlu0 %v1704, 2
  %v1713 = vpop.permute.xlu0 %1712
  %1714 = vrot.lane.b32.xlu0 %v1707, 2
  %v1715 = vpop.permute.xlu0 %1714
  %1716 = vrot.lane.b32.xlu0 %v1709, 2
  %v1717 = vpop.permute.xlu0 %1716
  %1718 = vrot.lane.b32.xlu0 %v1711, 2
  %v1719 = vpop.permute.xlu0 %1718
  %vm1720 = vcmask 15360
  %v1721 = vsel %vm1720, %v1713, %v1715
  %v1722 = vsel %vm1720, %v1717, %v1719
  %v1727 = vadd.f32 %v1532, %v1713
  %v1728 = vadd.f32 %v1533, %v1721
  %v1729 = vadd.f32 %v1534, %v1717
  %v1730 = vadd.f32 %v1535, %v1722
  %v1731 = vlaneseq
  %v1732 = vshrl.u32 %v1731, 7
  %v1733 = vsub.s32 3, %v1732
  %v1734 = vrot.slane %v69, %v1733
  %1736 = vrot.lane.b32.xlu0 %v1734, 118
  %v1737 = vpop.permute.xlu0 %1736
  %v1739 = vmul.f32 %v55, %v1737
  %v1740 = vmul.f32 %v56, %v1737
  %v1741 = vmul.f32 %v58, %v1737
  %v1742 = vmul.f32 %v59, %v1737
  %v1743 = vmul.f32 %v61, %v1737
  %v1744 = vmul.f32 %v62, %v1737
  %v1751 = vrot.slane %v1739, 2
  %v1752 = vrot.slane %v1741, 2
  %v1753 = vsel %vm1701, %v1751, %v1752
  %v1754 = vrot.slane %v1740, 2
  %v1755 = vrot.slane %v1742, 2
  %v1756 = vsel %vm1701, %v1754, %v1755
  %v1757 = vrot.slane %v1743, 2
  %v1758 = vsel %vm1701, %v1752, %v1757
  %v1759 = vrot.slane %v1744, 2
  %v1760 = vsel %vm1701, %v1755, %v1759
  %1761 = vrot.lane.b32.xlu0 %v1753, 2
  %v1762 = vpop.permute.xlu0 %1761
  %1763 = vrot.lane.b32.xlu0 %v1756, 2
  %v1764 = vpop.permute.xlu0 %1763
  %1765 = vrot.lane.b32.xlu0 %v1758, 2
  %v1766 = vpop.permute.xlu0 %1765
  %1767 = vrot.lane.b32.xlu0 %v1760, 2
  %v1768 = vpop.permute.xlu0 %1767
  %v1769 = vsel %vm1720, %v1762, %v1764
  %v1770 = vsel %vm1720, %v1766, %v1768
  %v1775 = vadd.f32 %v1580, %v1762
  %v1776 = vadd.f32 %v1581, %v1769
  %v1777 = vadd.f32 %v1582, %v1766
  %v1778 = vadd.f32 %v1583, %v1770
  %v1779 = vlaneseq
  %v1780 = vshrl.u32 %v1779, 7
  %v1781 = vsub.s32 4, %v1780
  %v1782 = vrot.slane %v69, %v1781
  %1784 = vrot.lane.b32.xlu0 %v1782, 119
  %v1785 = vpop.permute.xlu0 %1784
  %v1787 = vmul.f32 %v55, %v1785
  %v1788 = vmul.f32 %v56, %v1785
  %v1789 = vmul.f32 %v58, %v1785
  %v1790 = vmul.f32 %v59, %v1785
  %v1791 = vmul.f32 %v61, %v1785
  %v1792 = vmul.f32 %v62, %v1785
  %v1799 = vrot.slane %v1787, 2
  %v1800 = vrot.slane %v1789, 2
  %v1801 = vsel %vm1701, %v1799, %v1800
  %v1802 = vrot.slane %v1788, 2
  %v1803 = vrot.slane %v1790, 2
  %v1804 = vsel %vm1701, %v1802, %v1803
  %v1805 = vrot.slane %v1791, 2
  %v1806 = vsel %vm1701, %v1800, %v1805
  %v1807 = vrot.slane %v1792, 2
  %v1808 = vsel %vm1701, %v1803, %v1807
  %1809 = vrot.lane.b32.xlu0 %v1801, 126
  %v1810 = vpop.permute.xlu0 %1809
  %1811 = vrot.lane.b32.xlu0 %v1804, 126
  %v1812 = vpop.permute.xlu0 %1811
  %1813 = vrot.lane.b32.xlu0 %v1806, 126
  %v1814 = vpop.permute.xlu0 %1813
  %1815 = vrot.lane.b32.xlu0 %v1808, 126
  %v1816 = vpop.permute.xlu0 %1815
  %vm1817 = vcmask 1031168
  %v1818 = vsel %vm1817, %v1810, %v1812
  %v1819 = vsel %vm1817, %v1814, %v1816
  %v1824 = vadd.f32 %v1629, %v1818
  %v1825 = vadd.f32 %v1630, %v1812
  %v1826 = vadd.f32 %v1631, %v1819
  %v1827 = vadd.f32 %v1632, %v1816
  %v1828 = vlaneseq
  %v1829 = vshrl.u32 %v1828, 7
  %v1830 = vsub.s32 5, %v1829
  %v1831 = vrot.slane %v69, %v1830
  %1833 = vrot.lane.b32.xlu0 %v1831, 120
  %v1834 = vpop.permute.xlu0 %1833
  %v1836 = vmul.f32 %v55, %v1834
  %v1837 = vmul.f32 %v56, %v1834
  %v1838 = vmul.f32 %v58, %v1834
  %v1839 = vmul.f32 %v59, %v1834
  %v1840 = vmul.f32 %v61, %v1834
  %v1841 = vmul.f32 %v62, %v1834
  %v1848 = vrot.slane %v1836, 2
  %v1849 = vrot.slane %v1838, 2
  %v1850 = vsel %vm1701, %v1848, %v1849
  %v1851 = vrot.slane %v1837, 2
  %v1852 = vrot.slane %v1839, 2
  %v1853 = vsel %vm1701, %v1851, %v1852
  %v1854 = vrot.slane %v1840, 2
  %v1855 = vsel %vm1701, %v1849, %v1854
  %v1856 = vrot.slane %v1841, 2
  %v1857 = vsel %vm1701, %v1852, %v1856
  %1858 = vrot.lane.b32.xlu0 %v1850, 126
  %v1859 = vpop.permute.xlu0 %1858
  %1860 = vrot.lane.b32.xlu0 %v1853, 126
  %v1861 = vpop.permute.xlu0 %1860
  %1862 = vrot.lane.b32.xlu0 %v1855, 126
  %v1863 = vpop.permute.xlu0 %1862
  %1864 = vrot.lane.b32.xlu0 %v1857, 126
  %v1865 = vpop.permute.xlu0 %1864
  %v1866 = vsel %vm1817, %v1859, %v1861
  %v1867 = vsel %vm1817, %v1863, %v1865
  %v1872 = vadd.f32 %v1677, %v1866
  %v1873 = vadd.f32 %v1678, %v1861
  %v1874 = vadd.f32 %v1679, %v1867
  %v1875 = vadd.f32 %v1680, %v1865
  %v1876 = vlaneseq
  %v1877 = vshrl.u32 %v1876, 7
  %v1878 = vsub.s32 6, %v1877
  %v1879 = vrot.slane %v69, %v1878
  %1881 = vrot.lane.b32.xlu0 %v1879, 121
  %v1882 = vpop.permute.xlu0 %1881
  %v1884 = vmul.f32 %v55, %v1882
  %v1885 = vmul.f32 %v56, %v1882
  %v1886 = vmul.f32 %v58, %v1882
  %v1887 = vmul.f32 %v59, %v1882
  %v1888 = vmul.f32 %v61, %v1882
  %v1889 = vmul.f32 %v62, %v1882
  %v1896 = vrot.slane %v1884, 2
  %v1897 = vrot.slane %v1886, 2
  %v1898 = vsel %vm1701, %v1896, %v1897
  %v1899 = vrot.slane %v1885, 2
  %v1900 = vrot.slane %v1887, 2
  %v1901 = vsel %vm1701, %v1899, %v1900
  %v1902 = vrot.slane %v1888, 2
  %v1903 = vsel %vm1701, %v1897, %v1902
  %v1904 = vrot.slane %v1889, 2
  %v1905 = vsel %vm1701, %v1900, %v1904
  %1906 = vrot.lane.b32.xlu0 %v1898, 126
  %v1907 = vpop.permute.xlu0 %1906
  %1908 = vrot.lane.b32.xlu0 %v1901, 126
  %v1909 = vpop.permute.xlu0 %1908
  %1910 = vrot.lane.b32.xlu0 %v1903, 126
  %v1911 = vpop.permute.xlu0 %1910
  %1912 = vrot.lane.b32.xlu0 %v1905, 126
  %v1913 = vpop.permute.xlu0 %1912
  %v1914 = vsel %vm1817, %v1907, %v1909
  %v1915 = vsel %vm1817, %v1911, %v1913
  %v1920 = vadd.f32 %v1727, %v1914
  %v1921 = vadd.f32 %v1728, %v1909
  %v1922 = vadd.f32 %v1729, %v1915
  %v1923 = vadd.f32 %v1730, %v1913
  %v1924 = vlaneseq
  %v1925 = vshrl.u32 %v1924, 7
  %v1926 = vsub.s32 7, %v1925
  %v1927 = vrot.slane %v69, %v1926
  %1929 = vrot.lane.b32.xlu0 %v1927, 122
  %v1930 = vpop.permute.xlu0 %1929
  %v1932 = vmul.f32 %v55, %v1930
  %v1933 = vmul.f32 %v56, %v1930
  %v1934 = vmul.f32 %v58, %v1930
  %v1935 = vmul.f32 %v59, %v1930
  %v1936 = vmul.f32 %v61, %v1930
  %v1937 = vmul.f32 %v62, %v1930
  %v1944 = vrot.slane %v1932, 2
  %v1945 = vrot.slane %v1934, 2
  %v1946 = vsel %vm1701, %v1944, %v1945
  %v1947 = vrot.slane %v1933, 2
  %v1948 = vrot.slane %v1935, 2
  %v1949 = vsel %vm1701, %v1947, %v1948
  %v1950 = vrot.slane %v1936, 2
  %v1951 = vsel %vm1701, %v1945, %v1950
  %v1952 = vrot.slane %v1937, 2
  %v1953 = vsel %vm1701, %v1948, %v1952
  %1954 = vrot.lane.b32.xlu0 %v1946, 126
  %v1955 = vpop.permute.xlu0 %1954
  %1956 = vrot.lane.b32.xlu0 %v1949, 126
  %v1957 = vpop.permute.xlu0 %1956
  %1958 = vrot.lane.b32.xlu0 %v1951, 126
  %v1959 = vpop.permute.xlu0 %1958
  %1960 = vrot.lane.b32.xlu0 %v1953, 126
  %v1961 = vpop.permute.xlu0 %1960
  %v1962 = vsel %vm1817, %v1955, %v1957
  %v1963 = vsel %vm1817, %v1959, %v1961
  %v1968 = vadd.f32 %v1775, %v1962
  %v1969 = vadd.f32 %v1776, %v1957
  %v1970 = vadd.f32 %v1777, %v1963
  %v1971 = vadd.f32 %v1778, %v1961
  %v1972 = vlaneseq
  %v1973 = vshrl.u32 %v1972, 7
  %v1974 = vsub.s32 0, %v1973
  %v1975 = vrot.slane %v70, %v1974
  %1977 = vrot.lane.b32.xlu0 %v1975, 123
  %v1978 = vpop.permute.xlu0 %1977
  %v1980 = vmul.f32 %v55, %v1978
  %v1981 = vmul.f32 %v56, %v1978
  %v1982 = vmul.f32 %v58, %v1978
  %v1983 = vmul.f32 %v59, %v1978
  %v1984 = vmul.f32 %v61, %v1978
  %v1985 = vmul.f32 %v62, %v1978
  %v1992 = vrot.slane %v1980, 2
  %v1993 = vrot.slane %v1982, 2
  %v1994 = vsel %vm1701, %v1992, %v1993
  %v1995 = vrot.slane %v1981, 2
  %v1996 = vrot.slane %v1983, 2
  %v1997 = vsel %vm1701, %v1995, %v1996
  %v1998 = vrot.slane %v1984, 2
  %v1999 = vsel %vm1701, %v1993, %v1998
  %v2000 = vrot.slane %v1985, 2
  %v2001 = vsel %vm1701, %v1996, %v2000
  %2002 = vrot.lane.b32.xlu0 %v1994, 122
  %v2003 = vpop.permute.xlu0 %2002
  %2004 = vrot.lane.b32.xlu0 %v1997, 122
  %v2005 = vpop.permute.xlu0 %2004
  %2006 = vrot.lane.b32.xlu0 %v1999, 122
  %v2007 = vpop.permute.xlu0 %2006
  %2008 = vrot.lane.b32.xlu0 %v2001, 122
  %v2009 = vpop.permute.xlu0 %2008
  %vm2010 = vcmask 998400
  %v2011 = vsel %vm2010, %v2003, %v2005
  %v2012 = vsel %vm2010, %v2007, %v2009
  %v2017 = vadd.f32 %v1824, %v2011
  %v2018 = vadd.f32 %v1825, %v2005
  %v2019 = vadd.f32 %v1826, %v2012
  %v2020 = vadd.f32 %v1827, %v2009
  %v2021 = vlaneseq
  %v2022 = vshrl.u32 %v2021, 7
  %v2023 = vsub.s32 1, %v2022
  %v2024 = vrot.slane %v70, %v2023
  %2026 = vrot.lane.b32.xlu0 %v2024, 125
  %v2027 = vpop.permute.xlu0 %2026
  %v2029 = vmul.f32 %v55, %v2027
  %v2030 = vmul.f32 %v56, %v2027
  %v2031 = vmul.f32 %v58, %v2027
  %v2032 = vmul.f32 %v59, %v2027
  %v2033 = vmul.f32 %v61, %v2027
  %v2034 = vmul.f32 %v62, %v2027
  %v2041 = vrot.slane %v2029, 2
  %v2042 = vrot.slane %v2031, 2
  %v2043 = vsel %vm1701, %v2041, %v2042
  %v2044 = vrot.slane %v2030, 2
  %v2045 = vrot.slane %v2032, 2
  %v2046 = vsel %vm1701, %v2044, %v2045
  %v2047 = vrot.slane %v2033, 2
  %v2048 = vsel %vm1701, %v2042, %v2047
  %v2049 = vrot.slane %v2034, 2
  %v2050 = vsel %vm1701, %v2045, %v2049
  %2051 = vrot.lane.b32.xlu0 %v2043, 121
  %v2052 = vpop.permute.xlu0 %2051
  %2053 = vrot.lane.b32.xlu0 %v2046, 121
  %v2054 = vpop.permute.xlu0 %2053
  %2055 = vrot.lane.b32.xlu0 %v2048, 121
  %v2056 = vpop.permute.xlu0 %2055
  %2057 = vrot.lane.b32.xlu0 %v2050, 121
  %v2058 = vpop.permute.xlu0 %2057
  %vm2059 = vcmask 990208
  %v2060 = vsel %vm2059, %v2052, %v2054
  %v2061 = vsel %vm2059, %v2056, %v2058
  %v2066 = vadd.f32 %v1872, %v2060
  %v2067 = vadd.f32 %v1873, %v2054
  %v2068 = vadd.f32 %v1874, %v2061
  %v2069 = vadd.f32 %v1875, %v2058
  %v2070 = vlaneseq
  %v2071 = vshrl.u32 %v2070, 7
  %v2072 = vsub.s32 2, %v2071
  %v2073 = vrot.slane %v70, %v2072
  %2075 = vrot.lane.b32.xlu0 %v2073, 126
  %v2076 = vpop.permute.xlu0 %2075
  %v2078 = vmul.f32 %v55, %v2076
  %v2079 = vmul.f32 %v56, %v2076
  %v2080 = vmul.f32 %v58, %v2076
  %v2081 = vmul.f32 %v59, %v2076
  %v2082 = vmul.f32 %v61, %v2076
  %v2083 = vmul.f32 %v62, %v2076
  %v2090 = vrot.slane %v2078, 2
  %v2091 = vrot.slane %v2080, 2
  %v2092 = vsel %vm1701, %v2090, %v2091
  %v2093 = vrot.slane %v2079, 2
  %v2094 = vrot.slane %v2081, 2
  %v2095 = vsel %vm1701, %v2093, %v2094
  %v2096 = vrot.slane %v2082, 2
  %v2097 = vsel %vm1701, %v2091, %v2096
  %v2098 = vrot.slane %v2083, 2
  %v2099 = vsel %vm1701, %v2094, %v2098
  %2100 = vrot.lane.b32.xlu0 %v2092, 121
  %v2101 = vpop.permute.xlu0 %2100
  %2102 = vrot.lane.b32.xlu0 %v2095, 121
  %v2103 = vpop.permute.xlu0 %2102
  %2104 = vrot.lane.b32.xlu0 %v2097, 121
  %v2105 = vpop.permute.xlu0 %2104
  %2106 = vrot.lane.b32.xlu0 %v2099, 121
  %v2107 = vpop.permute.xlu0 %2106
  %v2108 = vsel %vm2059, %v2101, %v2103
  %v2109 = vsel %vm2059, %v2105, %v2107
  %v2114 = vadd.f32 %v1920, %v2108
  %v2115 = vadd.f32 %v1921, %v2103
  %v2116 = vadd.f32 %v1922, %v2109
  %v2117 = vadd.f32 %v1923, %v2107
  %v2118 = vlaneseq
  %v2119 = vshrl.u32 %v2118, 7
  %v2120 = vsub.s32 3, %v2119
  %v2121 = vrot.slane %v70, %v2120
  %2123 = vrot.lane.b32.xlu0 %v2121, 127
  %v2124 = vpop.permute.xlu0 %2123
  %v2126 = vmul.f32 %v55, %v2124
  %v2127 = vmul.f32 %v56, %v2124
  %v2128 = vmul.f32 %v58, %v2124
  %v2129 = vmul.f32 %v59, %v2124
  %v2130 = vmul.f32 %v61, %v2124
  %v2131 = vmul.f32 %v62, %v2124
  %v2138 = vrot.slane %v2126, 2
  %v2139 = vrot.slane %v2128, 2
  %v2140 = vsel %vm1701, %v2138, %v2139
  %v2141 = vrot.slane %v2127, 2
  %v2142 = vrot.slane %v2129, 2
  %v2143 = vsel %vm1701, %v2141, %v2142
  %v2144 = vrot.slane %v2130, 2
  %v2145 = vsel %vm1701, %v2139, %v2144
  %v2146 = vrot.slane %v2131, 2
  %v2147 = vsel %vm1701, %v2142, %v2146
  %2148 = vrot.lane.b32.xlu0 %v2140, 121
  %v2149 = vpop.permute.xlu0 %2148
  %2150 = vrot.lane.b32.xlu0 %v2143, 121
  %v2151 = vpop.permute.xlu0 %2150
  %2152 = vrot.lane.b32.xlu0 %v2145, 121
  %v2153 = vpop.permute.xlu0 %2152
  %2154 = vrot.lane.b32.xlu0 %v2147, 121
  %v2155 = vpop.permute.xlu0 %2154
  %v2156 = vsel %vm2059, %v2149, %v2151
  %v2157 = vsel %vm2059, %v2153, %v2155
  %v2162 = vadd.f32 %v1968, %v2156
  %v2163 = vadd.f32 %v1969, %v2151
  %v2164 = vadd.f32 %v1970, %v2157
  %v2165 = vadd.f32 %v1971, %v2155
  %v2166 = vlaneseq
  %v2167 = vshrl.u32 %v2166, 7
  %v2168 = vsub.s32 4, %v2167
  %v2169 = vrot.slane %v70, %v2168
  %v2170 = vmul.f32 %v56, %v2169
  %v2171 = vmul.f32 %v59, %v2169
  %v2172 = vmul.f32 %v62, %v2169
  %v2176 = vrot.slane %v2170, 2
  %v2177 = vrot.slane %v2171, 2
  %v2178 = vsel %vm1701, %v2176, %v2177
  %v2179 = vrot.slane %v2172, 2
  %v2180 = vsel %vm1701, %v2177, %v2179
  %2181 = vrot.lane.b32.xlu0 %v2178, 117
  %v2182 = vpop.permute.xlu0 %2181
  %2183 = vrot.lane.b32.xlu0 %v2180, 117
  %v2184 = vpop.permute.xlu0 %2183
  %v2187 = vadd.f32 %v2017, %v2182
  %v2188 = vadd.f32 %v2018, %v2182
  %v2189 = vadd.f32 %v2019, %v2184
  %v2190 = vadd.f32 %v2020, %v2184
  %v2191 = vlaneseq
  %v2192 = vshrl.u32 %v2191, 7
  %v2193 = vsub.s32 5, %v2192
  %v2194 = vrot.slane %v70, %v2193
  %2196 = vrot.lane.b32.xlu0 %v2194, 1
  %v2197 = vpop.permute.xlu0 %2196
  %v2199 = vmul.f32 %v56, %v2197
  %v2200 = vmul.f32 %v57, %v2197
  %v2201 = vmul.f32 %v59, %v2197
  %v2202 = vmul.f32 %v60, %v2197
  %v2203 = vmul.f32 %v62, %v2197
  %v2204 = vmul.f32 %v63, %v2197
  %v2211 = vrot.slane %v2199, 2
  %v2212 = vrot.slane %v2201, 2
  %v2213 = vsel %vm1701, %v2211, %v2212
  %v2214 = vrot.slane %v2200, 2
  %v2215 = vrot.slane %v2202, 2
  %v2216 = vsel %vm1701, %v2214, %v2215
  %v2217 = vrot.slane %v2203, 2
  %v2218 = vsel %vm1701, %v2212, %v2217
  %v2219 = vrot.slane %v2204, 2
  %v2220 = vsel %vm1701, %v2215, %v2219
  %2221 = vrot.lane.b32.xlu0 %v2213, 117
  %v2222 = vpop.permute.xlu0 %2221
  %2223 = vrot.lane.b32.xlu0 %v2216, 117
  %v2224 = vpop.permute.xlu0 %2223
  %2225 = vrot.lane.b32.xlu0 %v2218, 117
  %v2226 = vpop.permute.xlu0 %2225
  %2227 = vrot.lane.b32.xlu0 %v2220, 117
  %v2228 = vpop.permute.xlu0 %2227
  %vm2229 = vcmask 957440
  %v2230 = vsel %vm2229, %v2222, %v2224
  %v2231 = vsel %vm2229, %v2226, %v2228
  %v2236 = vadd.f32 %v2066, %v2222
  %v2237 = vadd.f32 %v2067, %v2230
  %v2238 = vadd.f32 %v2068, %v2226
  %v2239 = vadd.f32 %v2069, %v2231
  %v2240 = vlaneseq
  %v2241 = vshrl.u32 %v2240, 7
  %v2242 = vsub.s32 6, %v2241
  %v2243 = vrot.slane %v70, %v2242
  %2245 = vrot.lane.b32.xlu0 %v2243, 2
  %v2246 = vpop.permute.xlu0 %2245
  %v2248 = vmul.f32 %v56, %v2246
  %v2249 = vmul.f32 %v57, %v2246
  %v2250 = vmul.f32 %v59, %v2246
  %v2251 = vmul.f32 %v60, %v2246
  %v2252 = vmul.f32 %v62, %v2246
  %v2253 = vmul.f32 %v63, %v2246
  %v2260 = vrot.slane %v2248, 2
  %v2261 = vrot.slane %v2250, 2
  %v2262 = vsel %vm1701, %v2260, %v2261
  %v2263 = vrot.slane %v2249, 2
  %v2264 = vrot.slane %v2251, 2
  %v2265 = vsel %vm1701, %v2263, %v2264
  %v2266 = vrot.slane %v2252, 2
  %v2267 = vsel %vm1701, %v2261, %v2266
  %v2268 = vrot.slane %v2253, 2
  %v2269 = vsel %vm1701, %v2264, %v2268
  %2270 = vrot.lane.b32.xlu0 %v2262, 117
  %v2271 = vpop.permute.xlu0 %2270
  %2272 = vrot.lane.b32.xlu0 %v2265, 117
  %v2273 = vpop.permute.xlu0 %2272
  %2274 = vrot.lane.b32.xlu0 %v2267, 117
  %v2275 = vpop.permute.xlu0 %2274
  %2276 = vrot.lane.b32.xlu0 %v2269, 117
  %v2277 = vpop.permute.xlu0 %2276
  %v2278 = vsel %vm2229, %v2271, %v2273
  %v2279 = vsel %vm2229, %v2275, %v2277
  %v2284 = vadd.f32 %v2114, %v2271
  %v2285 = vadd.f32 %v2115, %v2278
  %v2286 = vadd.f32 %v2116, %v2275
  %v2287 = vadd.f32 %v2117, %v2279
  %v2288 = vlaneseq
  %v2289 = vshrl.u32 %v2288, 7
  %v2290 = vsub.s32 7, %v2289
  %v2291 = vrot.slane %v70, %v2290
  %2293 = vrot.lane.b32.xlu0 %v2291, 3
  %v2294 = vpop.permute.xlu0 %2293
  %v2296 = vmul.f32 %v56, %v2294
  %v2297 = vmul.f32 %v57, %v2294
  %v2298 = vmul.f32 %v59, %v2294
  %v2299 = vmul.f32 %v60, %v2294
  %v2300 = vmul.f32 %v62, %v2294
  %v2301 = vmul.f32 %v63, %v2294
  %v2308 = vrot.slane %v2296, 2
  %v2309 = vrot.slane %v2298, 2
  %v2310 = vsel %vm1701, %v2308, %v2309
  %v2311 = vrot.slane %v2297, 2
  %v2312 = vrot.slane %v2299, 2
  %v2313 = vsel %vm1701, %v2311, %v2312
  %v2314 = vrot.slane %v2300, 2
  %v2315 = vsel %vm1701, %v2309, %v2314
  %v2316 = vrot.slane %v2301, 2
  %v2317 = vsel %vm1701, %v2312, %v2316
  %2318 = vrot.lane.b32.xlu0 %v2310, 117
  %v2319 = vpop.permute.xlu0 %2318
  %2320 = vrot.lane.b32.xlu0 %v2313, 117
  %v2321 = vpop.permute.xlu0 %2320
  %2322 = vrot.lane.b32.xlu0 %v2315, 117
  %v2323 = vpop.permute.xlu0 %2322
  %2324 = vrot.lane.b32.xlu0 %v2317, 117
  %v2325 = vpop.permute.xlu0 %2324
  %v2326 = vsel %vm2229, %v2319, %v2321
  %v2327 = vsel %vm2229, %v2323, %v2325
  %v2332 = vadd.f32 %v2162, %v2319
  %v2333 = vadd.f32 %v2163, %v2326
  %v2334 = vadd.f32 %v2164, %v2323
  %v2335 = vadd.f32 %v2165, %v2327
  %v2336 = vlaneseq
  %v2337 = vshrl.u32 %v2336, 7
  %v2338 = vsub.s32 0, %v2337
  %v2339 = vrot.slane %v71, %v2338
  %2341 = vrot.lane.b32.xlu0 %v2339, 5
  %v2342 = vpop.permute.xlu0 %2341
  %v2344 = vmul.f32 %v56, %v2342
  %v2345 = vmul.f32 %v57, %v2342
  %v2346 = vmul.f32 %v59, %v2342
  %v2347 = vmul.f32 %v60, %v2342
  %v2348 = vmul.f32 %v62, %v2342
  %v2349 = vmul.f32 %v63, %v2342
  %v2356 = vrot.slane %v2344, 2
  %v2357 = vrot.slane %v2346, 2
  %v2358 = vsel %vm1701, %v2356, %v2357
  %v2359 = vrot.slane %v2345, 2
  %v2360 = vrot.slane %v2347, 2
  %v2361 = vsel %vm1701, %v2359, %v2360
  %v2362 = vrot.slane %v2348, 2
  %v2363 = vsel %vm1701, %v2357, %v2362
  %v2364 = vrot.slane %v2349, 2
  %v2365 = vsel %vm1701, %v2360, %v2364
  %2366 = vrot.lane.b32.xlu0 %v2358, 112
  %v2367 = vpop.permute.xlu0 %2366
  %2368 = vrot.lane.b32.xlu0 %v2361, 112
  %v2369 = vpop.permute.xlu0 %2368
  %2370 = vrot.lane.b32.xlu0 %v2363, 112
  %v2371 = vpop.permute.xlu0 %2370
  %2372 = vrot.lane.b32.xlu0 %v2365, 112
  %v2373 = vpop.permute.xlu0 %2372
  %vm2374 = vcmask 916480
  %v2375 = vsel %vm2374, %v2367, %v2369
  %v2376 = vsel %vm2374, %v2371, %v2373
  %v2381 = vadd.f32 %v2187, %v2367
  %v2382 = vadd.f32 %v2188, %v2375
  %v2383 = vadd.f32 %v2189, %v2371
  %v2384 = vadd.f32 %v2190, %v2376
  %v2385 = vlaneseq
  %v2386 = vshrl.u32 %v2385, 7
  %v2387 = vsub.s32 1, %v2386
  %v2388 = vrot.slane %v71, %v2387
  %2390 = vrot.lane.b32.xlu0 %v2388, 6
  %v2391 = vpop.permute.xlu0 %2390
  %v2393 = vmul.f32 %v56, %v2391
  %v2394 = vmul.f32 %v57, %v2391
  %v2395 = vmul.f32 %v59, %v2391
  %v2396 = vmul.f32 %v60, %v2391
  %v2397 = vmul.f32 %v62, %v2391
  %v2398 = vmul.f32 %v63, %v2391
  %v2405 = vrot.slane %v2393, 2
  %v2406 = vrot.slane %v2395, 2
  %v2407 = vsel %vm1701, %v2405, %v2406
  %v2408 = vrot.slane %v2394, 2
  %v2409 = vrot.slane %v2396, 2
  %v2410 = vsel %vm1701, %v2408, %v2409
  %v2411 = vrot.slane %v2397, 2
  %v2412 = vsel %vm1701, %v2406, %v2411
  %v2413 = vrot.slane %v2398, 2
  %v2414 = vsel %vm1701, %v2409, %v2413
  %2415 = vrot.lane.b32.xlu0 %v2407, 112
  %v2416 = vpop.permute.xlu0 %2415
  %2417 = vrot.lane.b32.xlu0 %v2410, 112
  %v2418 = vpop.permute.xlu0 %2417
  %2419 = vrot.lane.b32.xlu0 %v2412, 112
  %v2420 = vpop.permute.xlu0 %2419
  %2421 = vrot.lane.b32.xlu0 %v2414, 112
  %v2422 = vpop.permute.xlu0 %2421
  %v2423 = vsel %vm2374, %v2416, %v2418
  %v2424 = vsel %vm2374, %v2420, %v2422
  %v2429 = vadd.f32 %v2236, %v2416
  %v2430 = vadd.f32 %v2237, %v2423
  %v2431 = vadd.f32 %v2238, %v2420
  %v2432 = vadd.f32 %v2239, %v2424
  %v2433 = vlaneseq
  %v2434 = vshrl.u32 %v2433, 7
  %v2435 = vsub.s32 2, %v2434
  %v2436 = vrot.slane %v71, %v2435
  %2438 = vrot.lane.b32.xlu0 %v2436, 7
  %v2439 = vpop.permute.xlu0 %2438
  %v2441 = vmul.f32 %v56, %v2439
  %v2442 = vmul.f32 %v57, %v2439
  %v2443 = vmul.f32 %v59, %v2439
  %v2444 = vmul.f32 %v60, %v2439
  %v2445 = vmul.f32 %v62, %v2439
  %v2446 = vmul.f32 %v63, %v2439
  %v2453 = vrot.slane %v2441, 2
  %v2454 = vrot.slane %v2443, 2
  %v2455 = vsel %vm1701, %v2453, %v2454
  %v2456 = vrot.slane %v2442, 2
  %v2457 = vrot.slane %v2444, 2
  %v2458 = vsel %vm1701, %v2456, %v2457
  %v2459 = vrot.slane %v2445, 2
  %v2460 = vsel %vm1701, %v2454, %v2459
  %v2461 = vrot.slane %v2446, 2
  %v2462 = vsel %vm1701, %v2457, %v2461
  %2463 = vrot.lane.b32.xlu0 %v2455, 112
  %v2464 = vpop.permute.xlu0 %2463
  %2465 = vrot.lane.b32.xlu0 %v2458, 112
  %v2466 = vpop.permute.xlu0 %2465
  %2467 = vrot.lane.b32.xlu0 %v2460, 112
  %v2468 = vpop.permute.xlu0 %2467
  %2469 = vrot.lane.b32.xlu0 %v2462, 112
  %v2470 = vpop.permute.xlu0 %2469
  %v2471 = vsel %vm2374, %v2464, %v2466
  %v2472 = vsel %vm2374, %v2468, %v2470
  %v2477 = vadd.f32 %v2284, %v2464
  %v2478 = vadd.f32 %v2285, %v2471
  %v2479 = vadd.f32 %v2286, %v2468
  %v2480 = vadd.f32 %v2287, %v2472
  %v2481 = vlaneseq
  %v2482 = vshrl.u32 %v2481, 7
  %v2483 = vsub.s32 3, %v2482
  %v2484 = vrot.slane %v71, %v2483
  %2486 = vrot.lane.b32.xlu0 %v2484, 8
  %v2487 = vpop.permute.xlu0 %2486
  %v2489 = vmul.f32 %v56, %v2487
  %v2490 = vmul.f32 %v57, %v2487
  %v2491 = vmul.f32 %v59, %v2487
  %v2492 = vmul.f32 %v60, %v2487
  %v2493 = vmul.f32 %v62, %v2487
  %v2494 = vmul.f32 %v63, %v2487
  %v2501 = vrot.slane %v2489, 2
  %v2502 = vrot.slane %v2491, 2
  %v2503 = vsel %vm1701, %v2501, %v2502
  %v2504 = vrot.slane %v2490, 2
  %v2505 = vrot.slane %v2492, 2
  %v2506 = vsel %vm1701, %v2504, %v2505
  %v2507 = vrot.slane %v2493, 2
  %v2508 = vsel %vm1701, %v2502, %v2507
  %v2509 = vrot.slane %v2494, 2
  %v2510 = vsel %vm1701, %v2505, %v2509
  %2511 = vrot.lane.b32.xlu0 %v2503, 112
  %v2512 = vpop.permute.xlu0 %2511
  %2513 = vrot.lane.b32.xlu0 %v2506, 112
  %v2514 = vpop.permute.xlu0 %2513
  %2515 = vrot.lane.b32.xlu0 %v2508, 112
  %v2516 = vpop.permute.xlu0 %2515
  %2517 = vrot.lane.b32.xlu0 %v2510, 112
  %v2518 = vpop.permute.xlu0 %2517
  %v2519 = vsel %vm2374, %v2512, %v2514
  %v2520 = vsel %vm2374, %v2516, %v2518
  %v2525 = vadd.f32 %v2332, %v2512
  %v2526 = vadd.f32 %v2333, %v2519
  %v2527 = vadd.f32 %v2334, %v2516
  %v2528 = vadd.f32 %v2335, %v2520
  %v2529 = vlaneseq
  %v2530 = vshrl.u32 %v2529, 7
  %v2531 = vsub.s32 4, %v2530
  %v2532 = vrot.slane %v71, %v2531
  %2534 = vrot.lane.b32.xlu0 %v2532, 9
  %v2535 = vpop.permute.xlu0 %2534
  %v2537 = vmul.f32 %v56, %v2535
  %v2538 = vmul.f32 %v57, %v2535
  %v2539 = vmul.f32 %v59, %v2535
  %v2540 = vmul.f32 %v60, %v2535
  %v2541 = vmul.f32 %v62, %v2535
  %v2542 = vmul.f32 %v63, %v2535
  %v2549 = vrot.slane %v2537, 2
  %v2550 = vrot.slane %v2539, 2
  %v2551 = vsel %vm1701, %v2549, %v2550
  %v2552 = vrot.slane %v2538, 2
  %v2553 = vrot.slane %v2540, 2
  %v2554 = vsel %vm1701, %v2552, %v2553
  %v2555 = vrot.slane %v2541, 2
  %v2556 = vsel %vm1701, %v2550, %v2555
  %v2557 = vrot.slane %v2542, 2
  %v2558 = vsel %vm1701, %v2553, %v2557
  %2559 = vrot.lane.b32.xlu0 %v2551, 108
  %v2560 = vpop.permute.xlu0 %2559
  %2561 = vrot.lane.b32.xlu0 %v2554, 108
  %v2562 = vpop.permute.xlu0 %2561
  %2563 = vrot.lane.b32.xlu0 %v2556, 108
  %v2564 = vpop.permute.xlu0 %2563
  %2565 = vrot.lane.b32.xlu0 %v2558, 108
  %v2566 = vpop.permute.xlu0 %2565
  %vm2567 = vcmask 883712
  %v2568 = vsel %vm2567, %v2560, %v2562
  %v2569 = vsel %vm2567, %v2564, %v2566
  %v2574 = vadd.f32 %v2381, %v2560
  %v2575 = vadd.f32 %v2382, %v2568
  %v2576 = vadd.f32 %v2383, %v2564
  %v2577 = vadd.f32 %v2384, %v2569
  %v2578 = vlaneseq
  %v2579 = vshrl.u32 %v2578, 7
  %v2580 = vsub.s32 5, %v2579
  %v2581 = vrot.slane %v71, %v2580
  %2583 = vrot.lane.b32.xlu0 %v2581, 10
  %v2584 = vpop.permute.xlu0 %2583
  %v2586 = vmul.f32 %v56, %v2584
  %v2587 = vmul.f32 %v57, %v2584
  %v2588 = vmul.f32 %v59, %v2584
  %v2589 = vmul.f32 %v60, %v2584
  %v2590 = vmul.f32 %v62, %v2584
  %v2591 = vmul.f32 %v63, %v2584
  %v2598 = vrot.slane %v2586, 2
  %v2599 = vrot.slane %v2588, 2
  %v2600 = vsel %vm1701, %v2598, %v2599
  %v2601 = vrot.slane %v2587, 2
  %v2602 = vrot.slane %v2589, 2
  %v2603 = vsel %vm1701, %v2601, %v2602
  %v2604 = vrot.slane %v2590, 2
  %v2605 = vsel %vm1701, %v2599, %v2604
  %v2606 = vrot.slane %v2591, 2
  %v2607 = vsel %vm1701, %v2602, %v2606
  %2608 = vrot.lane.b32.xlu0 %v2600, 108
  %v2609 = vpop.permute.xlu0 %2608
  %2610 = vrot.lane.b32.xlu0 %v2603, 108
  %v2611 = vpop.permute.xlu0 %2610
  %2612 = vrot.lane.b32.xlu0 %v2605, 108
  %v2613 = vpop.permute.xlu0 %2612
  %2614 = vrot.lane.b32.xlu0 %v2607, 108
  %v2615 = vpop.permute.xlu0 %2614
  %v2616 = vsel %vm2567, %v2609, %v2611
  %v2617 = vsel %vm2567, %v2613, %v2615
  %v2622 = vadd.f32 %v2429, %v2609
  %v2623 = vadd.f32 %v2430, %v2616
  %v2624 = vadd.f32 %v2431, %v2613
  %v2625 = vadd.f32 %v2432, %v2617
  %v2626 = vlaneseq
  %v2627 = vshrl.u32 %v2626, 7
  %v2628 = vsub.s32 6, %v2627
  %v2629 = vrot.slane %v71, %v2628
  %2631 = vrot.lane.b32.xlu0 %v2629, 11
  %v2632 = vpop.permute.xlu0 %2631
  %v2634 = vmul.f32 %v56, %v2632
  %v2635 = vmul.f32 %v57, %v2632
  %v2636 = vmul.f32 %v59, %v2632
  %v2637 = vmul.f32 %v60, %v2632
  %v2638 = vmul.f32 %v62, %v2632
  %v2639 = vmul.f32 %v63, %v2632
  %v2646 = vrot.slane %v2634, 2
  %v2647 = vrot.slane %v2636, 2
  %v2648 = vsel %vm1701, %v2646, %v2647
  %v2649 = vrot.slane %v2635, 2
  %v2650 = vrot.slane %v2637, 2
  %v2651 = vsel %vm1701, %v2649, %v2650
  %v2652 = vrot.slane %v2638, 2
  %v2653 = vsel %vm1701, %v2647, %v2652
  %v2654 = vrot.slane %v2639, 2
  %v2655 = vsel %vm1701, %v2650, %v2654
  %2656 = vrot.lane.b32.xlu0 %v2648, 108
  %v2657 = vpop.permute.xlu0 %2656
  %2658 = vrot.lane.b32.xlu0 %v2651, 108
  %v2659 = vpop.permute.xlu0 %2658
  %2660 = vrot.lane.b32.xlu0 %v2653, 108
  %v2661 = vpop.permute.xlu0 %2660
  %2662 = vrot.lane.b32.xlu0 %v2655, 108
  %v2663 = vpop.permute.xlu0 %2662
  %v2664 = vsel %vm2567, %v2657, %v2659
  %v2665 = vsel %vm2567, %v2661, %v2663
  %v2670 = vadd.f32 %v2477, %v2657
  %v2671 = vadd.f32 %v2478, %v2664
  %v2672 = vadd.f32 %v2479, %v2661
  %v2673 = vadd.f32 %v2480, %v2665
  %2678 = vrot.lane.b32.xlu0 %v2622, 127
  %v2679 = vpop.permute.xlu0 %2678
  %2680 = vrot.lane.b32.xlu0 %v2623, 127
  %v2681 = vpop.permute.xlu0 %2680
  %2682 = vrot.lane.b32.xlu0 %v2624, 127
  %v2683 = vpop.permute.xlu0 %2682
  %2684 = vrot.lane.b32.xlu0 %v2625, 127
  %v2685 = vpop.permute.xlu0 %2684
  %vm2686 = vcmask 1039360
  %v2687 = vsel %vm2686, %v2679, %v2681
  %v2688 = vsel %vm2686, %v2683, %v2685
  %v2693 = vadd.f32 %v2574, %v2687
  %v2694 = vadd.f32 %v2575, %v2681
  %v2695 = vadd.f32 %v2576, %v2688
  %v2696 = vadd.f32 %v2577, %v2685
  %2701 = vrot.lane.b32.xlu0 %v2525, 127
  %v2702 = vpop.permute.xlu0 %2701
  %2703 = vrot.lane.b32.xlu0 %v2526, 127
  %v2704 = vpop.permute.xlu0 %2703
  %2705 = vrot.lane.b32.xlu0 %v2527, 127
  %v2706 = vpop.permute.xlu0 %2705
  %2707 = vrot.lane.b32.xlu0 %v2528, 127
  %v2708 = vpop.permute.xlu0 %2707
  %v2709 = vsel %vm2686, %v2702, %v2704
  %v2710 = vsel %vm2686, %v2706, %v2708
  %v2715 = vadd.f32 %v2670, %v2709
  %v2716 = vadd.f32 %v2671, %v2704
  %v2717 = vadd.f32 %v2672, %v2710
  %v2718 = vadd.f32 %v2673, %v2708
  %2723 = vrot.lane.b32.xlu0 %v2715, 126
  %v2724 = vpop.permute.xlu0 %2723
  %2725 = vrot.lane.b32.xlu0 %v2716, 126
  %v2726 = vpop.permute.xlu0 %2725
  %2727 = vrot.lane.b32.xlu0 %v2717, 126
  %v2728 = vpop.permute.xlu0 %2727
  %2729 = vrot.lane.b32.xlu0 %v2718, 126
  %v2730 = vpop.permute.xlu0 %2729
  %v2731 = vsel %vm1817, %v2724, %v2726
  %v2732 = vsel %vm1817, %v2728, %v2730
  %v2737 = vadd.f32 %v2693, %v2731
  %v2738 = vadd.f32 %v2694, %v2726
  %v2739 = vadd.f32 %v2695, %v2732
  %v2740 = vadd.f32 %v2696, %v2730
  %v2741 = vld [vmem:[%s2] sm:$0x1]
  %v2743 = vlaneseq
  %v2744 = vshrl.u32 %v2743, 7
  %v2745 = vsub.s32 0, %v2744
  %v2746 = vrot.slane %v2741, %v2745
  %2747 = vrot.lane.b32.xlu0 %v2746, 117
  %v2748 = vpop.permute.xlu0 %2747
  %v2750 = vadd.f32 %v2737, %v2748
  %v2751 = vadd.f32 %v2738, %v2748
  %v2752 = vadd.f32 %v2739, %v2748
  %v2753 = vadd.f32 %v2740, %v2748
  %v2754 = vmax.f32 %v2750, 0.0
  %v2755 = vmax.f32 %v2751, 0.0
  %v2756 = vmax.f32 %v2752, 0.0
  %v2757 = vmax.f32 %v2753, 0.0
  %2758 = vst.msk [vmem:[#allocation3] ss:$8 sm:$0x7] %vm25, 0.0
  %2759 = vst.msk [vmem:[#allocation3] ss:$8 sm:$0x0] %vm25, 0.0
  %s2760 = scalar_lea.vmem [#allocation3], 49
  %2761 = vst.msk [vmem:[%s2760] ss:$8 sm:$0x7] %vm25, 0.0
  %2762 = vst.msk [vmem:[%s2760] ss:$8 sm:$0x0] %vm25, 0.0
  %2763 = vst.msk [vmem:[#allocation3] sm:$0xfe] %vm31, 0.0
  %2764 = vst.msk [vmem:[#allocation3 + $0x18] sm:$0xff] %vm33, 0.0
  %2765 = vst.msk [vmem:[#allocation3 + $0x30] sm:$0x1] %vm35, 0.0
  %2766 = vst.msk [vmem:[#allocation3 + $0x10] sm:$0xfe] %vm37, 0.0
  %2767 = vst.msk [vmem:[#allocation3 + $0x28] sm:$0xff] %vm39, 0.0
  %2768 = vst.msk [vmem:[#allocation3 + $0x40] sm:$0x1] %vm41, 0.0
  %v2773 = vrot.slane %v2754, 7
  %v2774 = vrot.slane %v2755, 7
  %v2775 = vrot.slane %v2756, 7
  %v2776 = vsel %vm45, %v2773, %v2775
  %v2777 = vrot.slane %v2757, 7
  %v2778 = vsel %vm45, %v2774, %v2777
  %2779 = vrot.lane.b32.xlu0 %v2773, 11
  %v2780 = vpop.permute.xlu0 %2779
  %2781 = vrot.lane.b32.xlu0 %v2774, 11
  %v2782 = vpop.permute.xlu0 %2781
  %2783 = vrot.lane.b32.xlu0 %v2776, 11
  %v2784 = vpop.permute.xlu0 %2783
  %2785 = vrot.lane.b32.xlu0 %v2778, 11
  %v2786 = vpop.permute.xlu0 %2785
  %2787 = vrot.lane.b32.xlu0 %v2775, 11
  %v2788 = vpop.permute.xlu0 %2787
  %2789 = vrot.lane.b32.xlu0 %v2777, 11
  %v2790 = vpop.permute.xlu0 %2789
  %vm2791 = vcmask 89088
  %v2792 = vsel %vm2791, %v2780, %v2782
  %v2793 = vsel %vm2791, %v2784, %v2786
  %v2794 = vsel %vm2791, %v2788, %v2790
  %2798 = vst [vmem:[#allocation3 + $0x8] sm:$0xfe] %v2792
  %2799 = vst [vmem:[#allocation3 + $0x20] sm:$0xff] %v2793
  %2800 = vst [vmem:[#allocation3 + $0x38] sm:$0x1] %v2794
  %v2801 = vld [vmem:[#allocation3] sm:$0xff]
  %v2802 = vld [vmem:[#allocation3 + $0x8] sm:$0xff]
  %v2803 = vld [vmem:[#allocation3 + $0x10] sm:$0xff]
  %v2804 = vld [vmem:[#allocation3 + $0x18] sm:$0xff]
  %v2805 = vld [vmem:[#allocation3 + $0x20] sm:$0xff]
  %v2806 = vld [vmem:[#allocation3 + $0x28] sm:$0xff]
  %v2807 = vld [vmem:[#allocation3 + $0x30] sm:$0x3]
  %v2808 = vld [vmem:[#allocation3 + $0x38] sm:$0x3]
  %v2809 = vld [vmem:[#allocation3 + $0x40] sm:$0x3]
  %v2810 = vld [vmem:[%s3] sm:$0xff]
  %v2811 = vld [vmem:[%s3 + $0x8] sm:$0xff]
  %v2812 = vld [vmem:[%s3 + $0x10] sm:$0xff]
  %v2813 = vld [vmem:[%s3 + $0x18] sm:$0xff]
  %v2814 = vld [vmem:[%s3 + $0x20] sm:$0xff]
  %v2815 = vld [vmem:[%s3 + $0x28] sm:$0xff]
  %v2816 = vld [vmem:[%s3 + $0x30] sm:$0xff]
  %v2817 = vld [vmem:[%s3 + $0x38] sm:$0x7f]
  %v2818 = vlaneseq
  %v2819 = vshrl.u32 %v2818, 7
  %v2820 = vsub.s32 0, %v2819
  %v2821 = vrot.slane %v2810, %v2820
  %2823 = vrot.lane.b32.xlu0 %v2821, 117
  %v2824 = vpop.permute.xlu0 %2823
  %v2826 = vmul.f32 %v2801, %v2824
  %v2827 = vmul.f32 %v2802, %v2824
  %v2828 = vmul.f32 %v2804, %v2824
  %v2829 = vmul.f32 %v2805, %v2824
  %v2830 = vlaneseq
  %v2831 = vshrl.u32 %v2830, 7
  %v2832 = vsub.s32 1, %v2831
  %v2833 = vrot.slane %v2810, %v2832
  %2835 = vrot.lane.b32.xlu0 %v2833, 118
  %v2836 = vpop.permute.xlu0 %2835
  %v2838 = vmul.f32 %v2801, %v2836
  %v2839 = vmul.f32 %v2802, %v2836
  %v2840 = vmul.f32 %v2804, %v2836
  %v2841 = vmul.f32 %v2805, %v2836
  %v2842 = vlaneseq
  %v2843 = vshrl.u32 %v2842, 7
  %v2844 = vsub.s32 2, %v2843
  %v2845 = vrot.slane %v2810, %v2844
  %2847 = vrot.lane.b32.xlu0 %v2845, 119
  %v2848 = vpop.permute.xlu0 %2847
  %v2850 = vmul.f32 %v2801, %v2848
  %v2851 = vmul.f32 %v2802, %v2848
  %v2852 = vmul.f32 %v2804, %v2848
  %v2853 = vmul.f32 %v2805, %v2848
  %v2854 = vlaneseq
  %v2855 = vshrl.u32 %v2854, 7
  %v2856 = vsub.s32 3, %v2855
  %v2857 = vrot.slane %v2810, %v2856
  %2859 = vrot.lane.b32.xlu0 %v2857, 120
  %v2860 = vpop.permute.xlu0 %2859
  %v2862 = vmul.f32 %v2801, %v2860
  %v2863 = vmul.f32 %v2802, %v2860
  %v2864 = vmul.f32 %v2804, %v2860
  %v2865 = vmul.f32 %v2805, %v2860
  %v2866 = vlaneseq
  %v2867 = vshrl.u32 %v2866, 7
  %v2868 = vsub.s32 4, %v2867
  %v2869 = vrot.slane %v2810, %v2868
  %2871 = vrot.lane.b32.xlu0 %v2869, 121
  %v2872 = vpop.permute.xlu0 %2871
  %v2874 = vmul.f32 %v2801, %v2872
  %v2875 = vmul.f32 %v2802, %v2872
  %v2876 = vmul.f32 %v2804, %v2872
  %v2877 = vmul.f32 %v2805, %v2872
  %2882 = vrot.lane.b32.xlu0 %v2874, 124
  %v2883 = vpop.permute.xlu0 %2882
  %2884 = vrot.lane.b32.xlu0 %v2875, 124
  %v2885 = vpop.permute.xlu0 %2884
  %2886 = vrot.lane.b32.xlu0 %v2876, 124
  %v2887 = vpop.permute.xlu0 %2886
  %2888 = vrot.lane.b32.xlu0 %v2877, 124
  %v2889 = vpop.permute.xlu0 %2888
  %v2890 = vsel %vm144, %v2883, %v2885
  %v2891 = vsel %vm144, %v2887, %v2889
  %v2896 = vadd.f32 %v2826, %v2890
  %v2897 = vadd.f32 %v2827, %v2885
  %v2898 = vadd.f32 %v2828, %v2891
  %v2899 = vadd.f32 %v2829, %v2889
  %v2900 = vlaneseq
  %v2901 = vshrl.u32 %v2900, 7
  %v2902 = vsub.s32 5, %v2901
  %v2903 = vrot.slane %v2810, %v2902
  %2905 = vrot.lane.b32.xlu0 %v2903, 122
  %v2906 = vpop.permute.xlu0 %2905
  %v2908 = vmul.f32 %v2801, %v2906
  %v2909 = vmul.f32 %v2802, %v2906
  %v2910 = vmul.f32 %v2804, %v2906
  %v2911 = vmul.f32 %v2805, %v2906
  %2916 = vrot.lane.b32.xlu0 %v2908, 124
  %v2917 = vpop.permute.xlu0 %2916
  %2918 = vrot.lane.b32.xlu0 %v2909, 124
  %v2919 = vpop.permute.xlu0 %2918
  %2920 = vrot.lane.b32.xlu0 %v2910, 124
  %v2921 = vpop.permute.xlu0 %2920
  %2922 = vrot.lane.b32.xlu0 %v2911, 124
  %v2923 = vpop.permute.xlu0 %2922
  %v2924 = vsel %vm144, %v2917, %v2919
  %v2925 = vsel %vm144, %v2921, %v2923
  %v2930 = vadd.f32 %v2838, %v2924
  %v2931 = vadd.f32 %v2839, %v2919
  %v2932 = vadd.f32 %v2840, %v2925
  %v2933 = vadd.f32 %v2841, %v2923
  %v2934 = vlaneseq
  %v2935 = vshrl.u32 %v2934, 7
  %v2936 = vsub.s32 6, %v2935
  %v2937 = vrot.slane %v2810, %v2936
  %2939 = vrot.lane.b32.xlu0 %v2937, 123
  %v2940 = vpop.permute.xlu0 %2939
  %v2942 = vmul.f32 %v2801, %v2940
  %v2943 = vmul.f32 %v2802, %v2940
  %v2944 = vmul.f32 %v2804, %v2940
  %v2945 = vmul.f32 %v2805, %v2940
  %2950 = vrot.lane.b32.xlu0 %v2942, 124
  %v2951 = vpop.permute.xlu0 %2950
  %2952 = vrot.lane.b32.xlu0 %v2943, 124
  %v2953 = vpop.permute.xlu0 %2952
  %2954 = vrot.lane.b32.xlu0 %v2944, 124
  %v2955 = vpop.permute.xlu0 %2954
  %2956 = vrot.lane.b32.xlu0 %v2945, 124
  %v2957 = vpop.permute.xlu0 %2956
  %v2958 = vsel %vm144, %v2951, %v2953
  %v2959 = vsel %vm144, %v2955, %v2957
  %v2964 = vadd.f32 %v2850, %v2958
  %v2965 = vadd.f32 %v2851, %v2953
  %v2966 = vadd.f32 %v2852, %v2959
  %v2967 = vadd.f32 %v2853, %v2957
  %v2968 = vlaneseq
  %v2969 = vshrl.u32 %v2968, 7
  %v2970 = vsub.s32 7, %v2969
  %v2971 = vrot.slane %v2810, %v2970
  %2973 = vrot.lane.b32.xlu0 %v2971, 125
  %v2974 = vpop.permute.xlu0 %2973
  %v2976 = vmul.f32 %v2801, %v2974
  %v2977 = vmul.f32 %v2802, %v2974
  %v2978 = vmul.f32 %v2804, %v2974
  %v2979 = vmul.f32 %v2805, %v2974
  %2984 = vrot.lane.b32.xlu0 %v2976, 123
  %v2985 = vpop.permute.xlu0 %2984
  %2986 = vrot.lane.b32.xlu0 %v2977, 123
  %v2987 = vpop.permute.xlu0 %2986
  %2988 = vrot.lane.b32.xlu0 %v2978, 123
  %v2989 = vpop.permute.xlu0 %2988
  %2990 = vrot.lane.b32.xlu0 %v2979, 123
  %v2991 = vpop.permute.xlu0 %2990
  %v2992 = vsel %vm247, %v2985, %v2987
  %v2993 = vsel %vm247, %v2989, %v2991
  %v2998 = vadd.f32 %v2862, %v2992
  %v2999 = vadd.f32 %v2863, %v2987
  %v3000 = vadd.f32 %v2864, %v2993
  %v3001 = vadd.f32 %v2865, %v2991
  %v3002 = vlaneseq
  %v3003 = vshrl.u32 %v3002, 7
  %v3004 = vsub.s32 0, %v3003
  %v3005 = vrot.slane %v2811, %v3004
  %3007 = vrot.lane.b32.xlu0 %v3005, 126
  %v3008 = vpop.permute.xlu0 %3007
  %v3010 = vmul.f32 %v2801, %v3008
  %v3011 = vmul.f32 %v2802, %v3008
  %v3012 = vmul.f32 %v2804, %v3008
  %v3013 = vmul.f32 %v2805, %v3008
  %3018 = vrot.lane.b32.xlu0 %v3010, 119
  %v3019 = vpop.permute.xlu0 %3018
  %3020 = vrot.lane.b32.xlu0 %v3011, 119
  %v3021 = vpop.permute.xlu0 %3020
  %3022 = vrot.lane.b32.xlu0 %v3012, 119
  %v3023 = vpop.permute.xlu0 %3022
  %3024 = vrot.lane.b32.xlu0 %v3013, 119
  %v3025 = vpop.permute.xlu0 %3024
  %v3026 = vsel %vm282, %v3019, %v3021
  %v3027 = vsel %vm282, %v3023, %v3025
  %v3032 = vadd.f32 %v2896, %v3026
  %v3033 = vadd.f32 %v2897, %v3021
  %v3034 = vadd.f32 %v2898, %v3027
  %v3035 = vadd.f32 %v2899, %v3025
  %v3036 = vlaneseq
  %v3037 = vshrl.u32 %v3036, 7
  %v3038 = vsub.s32 1, %v3037
  %v3039 = vrot.slane %v2811, %v3038
  %3041 = vrot.lane.b32.xlu0 %v3039, 127
  %v3042 = vpop.permute.xlu0 %3041
  %v3044 = vmul.f32 %v2801, %v3042
  %v3045 = vmul.f32 %v2802, %v3042
  %v3046 = vmul.f32 %v2804, %v3042
  %v3047 = vmul.f32 %v2805, %v3042
  %3052 = vrot.lane.b32.xlu0 %v3044, 119
  %v3053 = vpop.permute.xlu0 %3052
  %3054 = vrot.lane.b32.xlu0 %v3045, 119
  %v3055 = vpop.permute.xlu0 %3054
  %3056 = vrot.lane.b32.xlu0 %v3046, 119
  %v3057 = vpop.permute.xlu0 %3056
  %3058 = vrot.lane.b32.xlu0 %v3047, 119
  %v3059 = vpop.permute.xlu0 %3058
  %v3060 = vsel %vm282, %v3053, %v3055
  %v3061 = vsel %vm282, %v3057, %v3059
  %v3066 = vadd.f32 %v2930, %v3060
  %v3067 = vadd.f32 %v2931, %v3055
  %v3068 = vadd.f32 %v2932, %v3061
  %v3069 = vadd.f32 %v2933, %v3059
  %v3070 = vlaneseq
  %v3071 = vshrl.u32 %v3070, 7
  %v3072 = vsub.s32 2, %v3071
  %v3073 = vrot.slane %v2811, %v3072
  %v3074 = vmul.f32 %v2802, %v3073
  %v3075 = vmul.f32 %v2805, %v3073
  %3078 = vrot.lane.b32.xlu0 %v3074, 119
  %v3079 = vpop.permute.xlu0 %3078
  %3080 = vrot.lane.b32.xlu0 %v3075, 119
  %v3081 = vpop.permute.xlu0 %3080
  %v3084 = vadd.f32 %v2964, %v3079
  %v3085 = vadd.f32 %v2965, %v3079
  %v3086 = vadd.f32 %v2966, %v3081
  %v3087 = vadd.f32 %v2967, %v3081
  %v3088 = vlaneseq
  %v3089 = vshrl.u32 %v3088, 7
  %v3090 = vsub.s32 3, %v3089
  %v3091 = vrot.slane %v2811, %v3090
  %3093 = vrot.lane.b32.xlu0 %v3091, 1
  %v3094 = vpop.permute.xlu0 %3093
  %v3096 = vmul.f32 %v2802, %v3094
  %v3097 = vmul.f32 %v2803, %v3094
  %v3098 = vmul.f32 %v2805, %v3094
  %v3099 = vmul.f32 %v2806, %v3094
  %3104 = vrot.lane.b32.xlu0 %v3096, 119
  %v3105 = vpop.permute.xlu0 %3104
  %3106 = vrot.lane.b32.xlu0 %v3097, 119
  %v3107 = vpop.permute.xlu0 %3106
  %3108 = vrot.lane.b32.xlu0 %v3098, 119
  %v3109 = vpop.permute.xlu0 %3108
  %3110 = vrot.lane.b32.xlu0 %v3099, 119
  %v3111 = vpop.permute.xlu0 %3110
  %v3112 = vsel %vm282, %v3105, %v3107
  %v3113 = vsel %vm282, %v3109, %v3111
  %v3118 = vadd.f32 %v2998, %v3105
  %v3119 = vadd.f32 %v2999, %v3112
  %v3120 = vadd.f32 %v3000, %v3109
  %v3121 = vadd.f32 %v3001, %v3113
  %v3122 = vlaneseq
  %v3123 = vshrl.u32 %v3122, 7
  %v3124 = vsub.s32 4, %v3123
  %v3125 = vrot.slane %v2811, %v3124
  %3127 = vrot.lane.b32.xlu0 %v3125, 2
  %v3128 = vpop.permute.xlu0 %3127
  %v3130 = vmul.f32 %v2802, %v3128
  %v3131 = vmul.f32 %v2803, %v3128
  %v3132 = vmul.f32 %v2805, %v3128
  %v3133 = vmul.f32 %v2806, %v3128
  %3138 = vrot.lane.b32.xlu0 %v3130, 115
  %v3139 = vpop.permute.xlu0 %3138
  %3140 = vrot.lane.b32.xlu0 %v3131, 115
  %v3141 = vpop.permute.xlu0 %3140
  %3142 = vrot.lane.b32.xlu0 %v3132, 115
  %v3143 = vpop.permute.xlu0 %3142
  %3144 = vrot.lane.b32.xlu0 %v3133, 115
  %v3145 = vpop.permute.xlu0 %3144
  %v3146 = vsel %vm403, %v3139, %v3141
  %v3147 = vsel %vm403, %v3143, %v3145
  %v3152 = vadd.f32 %v3032, %v3139
  %v3153 = vadd.f32 %v3033, %v3146
  %v3154 = vadd.f32 %v3034, %v3143
  %v3155 = vadd.f32 %v3035, %v3147
  %v3156 = vlaneseq
  %v3157 = vshrl.u32 %v3156, 7
  %v3158 = vsub.s32 5, %v3157
  %v3159 = vrot.slane %v2811, %v3158
  %3161 = vrot.lane.b32.xlu0 %v3159, 3
  %v3162 = vpop.permute.xlu0 %3161
  %v3164 = vmul.f32 %v2802, %v3162
  %v3165 = vmul.f32 %v2803, %v3162
  %v3166 = vmul.f32 %v2805, %v3162
  %v3167 = vmul.f32 %v2806, %v3162
  %3172 = vrot.lane.b32.xlu0 %v3164, 115
  %v3173 = vpop.permute.xlu0 %3172
  %3174 = vrot.lane.b32.xlu0 %v3165, 115
  %v3175 = vpop.permute.xlu0 %3174
  %3176 = vrot.lane.b32.xlu0 %v3166, 115
  %v3177 = vpop.permute.xlu0 %3176
  %3178 = vrot.lane.b32.xlu0 %v3167, 115
  %v3179 = vpop.permute.xlu0 %3178
  %v3180 = vsel %vm403, %v3173, %v3175
  %v3181 = vsel %vm403, %v3177, %v3179
  %v3186 = vadd.f32 %v3066, %v3173
  %v3187 = vadd.f32 %v3067, %v3180
  %v3188 = vadd.f32 %v3068, %v3177
  %v3189 = vadd.f32 %v3069, %v3181
  %v3190 = vlaneseq
  %v3191 = vshrl.u32 %v3190, 7
  %v3192 = vsub.s32 6, %v3191
  %v3193 = vrot.slane %v2811, %v3192
  %3195 = vrot.lane.b32.xlu0 %v3193, 5
  %v3196 = vpop.permute.xlu0 %3195
  %v3198 = vmul.f32 %v2802, %v3196
  %v3199 = vmul.f32 %v2803, %v3196
  %v3200 = vmul.f32 %v2805, %v3196
  %v3201 = vmul.f32 %v2806, %v3196
  %3206 = vrot.lane.b32.xlu0 %v3198, 114
  %v3207 = vpop.permute.xlu0 %3206
  %3208 = vrot.lane.b32.xlu0 %v3199, 114
  %v3209 = vpop.permute.xlu0 %3208
  %3210 = vrot.lane.b32.xlu0 %v3200, 114
  %v3211 = vpop.permute.xlu0 %3210
  %3212 = vrot.lane.b32.xlu0 %v3201, 114
  %v3213 = vpop.permute.xlu0 %3212
  %v3214 = vsel %vm472, %v3207, %v3209
  %v3215 = vsel %vm472, %v3211, %v3213
  %v3220 = vadd.f32 %v3084, %v3207
  %v3221 = vadd.f32 %v3085, %v3214
  %v3222 = vadd.f32 %v3086, %v3211
  %v3223 = vadd.f32 %v3087, %v3215
  %v3224 = vlaneseq
  %v3225 = vshrl.u32 %v3224, 7
  %v3226 = vsub.s32 7, %v3225
  %v3227 = vrot.slane %v2811, %v3226
  %3229 = vrot.lane.b32.xlu0 %v3227, 6
  %v3230 = vpop.permute.xlu0 %3229
  %v3232 = vmul.f32 %v2802, %v3230
  %v3233 = vmul.f32 %v2803, %v3230
  %v3234 = vmul.f32 %v2805, %v3230
  %v3235 = vmul.f32 %v2806, %v3230
  %3240 = vrot.lane.b32.xlu0 %v3232, 114
  %v3241 = vpop.permute.xlu0 %3240
  %3242 = vrot.lane.b32.xlu0 %v3233, 114
  %v3243 = vpop.permute.xlu0 %3242
  %3244 = vrot.lane.b32.xlu0 %v3234, 114
  %v3245 = vpop.permute.xlu0 %3244
  %3246 = vrot.lane.b32.xlu0 %v3235, 114
  %v3247 = vpop.permute.xlu0 %3246
  %v3248 = vsel %vm472, %v3241, %v3243
  %v3249 = vsel %vm472, %v3245, %v3247
  %v3254 = vadd.f32 %v3118, %v3241
  %v3255 = vadd.f32 %v3119, %v3248
  %v3256 = vadd.f32 %v3120, %v3245
  %v3257 = vadd.f32 %v3121, %v3249
  %v3258 = vlaneseq
  %v3259 = vshrl.u32 %v3258, 7
  %v3260 = vsub.s32 0, %v3259
  %v3261 = vrot.slane %v2812, %v3260
  %3263 = vrot.lane.b32.xlu0 %v3261, 7
  %v3264 = vpop.permute.xlu0 %3263
  %v3266 = vmul.f32 %v2802, %v3264
  %v3267 = vmul.f32 %v2803, %v3264
  %v3268 = vmul.f32 %v2805, %v3264
  %v3269 = vmul.f32 %v2806, %v3264
  %3274 = vrot.lane.b32.xlu0 %v3266, 110
  %v3275 = vpop.permute.xlu0 %3274
  %3276 = vrot.lane.b32.xlu0 %v3267, 110
  %v3277 = vpop.permute.xlu0 %3276
  %3278 = vrot.lane.b32.xlu0 %v3268, 110
  %v3279 = vpop.permute.xlu0 %3278
  %3280 = vrot.lane.b32.xlu0 %v3269, 110
  %v3281 = vpop.permute.xlu0 %3280
  %v3282 = vsel %vm541, %v3275, %v3277
  %v3283 = vsel %vm541, %v3279, %v3281
  %v3288 = vadd.f32 %v3152, %v3275
  %v3289 = vadd.f32 %v3153, %v3282
  %v3290 = vadd.f32 %v3154, %v3279
  %v3291 = vadd.f32 %v3155, %v3283
  %v3292 = vlaneseq
  %v3293 = vshrl.u32 %v3292, 7
  %v3294 = vsub.s32 1, %v3293
  %v3295 = vrot.slane %v2812, %v3294
  %3297 = vrot.lane.b32.xlu0 %v3295, 8
  %v3298 = vpop.permute.xlu0 %3297
  %v3300 = vmul.f32 %v2802, %v3298
  %v3301 = vmul.f32 %v2803, %v3298
  %v3302 = vmul.f32 %v2805, %v3298
  %v3303 = vmul.f32 %v2806, %v3298
  %3308 = vrot.lane.b32.xlu0 %v3300, 110
  %v3309 = vpop.permute.xlu0 %3308
  %3310 = vrot.lane.b32.xlu0 %v3301, 110
  %v3311 = vpop.permute.xlu0 %3310
  %3312 = vrot.lane.b32.xlu0 %v3302, 110
  %v3313 = vpop.permute.xlu0 %3312
  %3314 = vrot.lane.b32.xlu0 %v3303, 110
  %v3315 = vpop.permute.xlu0 %3314
  %v3316 = vsel %vm541, %v3309, %v3311
  %v3317 = vsel %vm541, %v3313, %v3315
  %v3322 = vadd.f32 %v3186, %v3309
  %v3323 = vadd.f32 %v3187, %v3316
  %v3324 = vadd.f32 %v3188, %v3313
  %v3325 = vadd.f32 %v3189, %v3317
  %v3326 = vlaneseq
  %v3327 = vshrl.u32 %v3326, 7
  %v3328 = vsub.s32 2, %v3327
  %v3329 = vrot.slane %v2812, %v3328
  %3331 = vrot.lane.b32.xlu0 %v3329, 9
  %v3332 = vpop.permute.xlu0 %3331
  %v3334 = vmul.f32 %v2802, %v3332
  %v3335 = vmul.f32 %v2803, %v3332
  %v3336 = vmul.f32 %v2805, %v3332
  %v3337 = vmul.f32 %v2806, %v3332
  %3342 = vrot.lane.b32.xlu0 %v3334, 110
  %v3343 = vpop.permute.xlu0 %3342
  %3344 = vrot.lane.b32.xlu0 %v3335, 110
  %v3345 = vpop.permute.xlu0 %3344
  %3346 = vrot.lane.b32.xlu0 %v3336, 110
  %v3347 = vpop.permute.xlu0 %3346
  %3348 = vrot.lane.b32.xlu0 %v3337, 110
  %v3349 = vpop.permute.xlu0 %3348
  %v3350 = vsel %vm541, %v3343, %v3345
  %v3351 = vsel %vm541, %v3347, %v3349
  %v3356 = vadd.f32 %v3220, %v3343
  %v3357 = vadd.f32 %v3221, %v3350
  %v3358 = vadd.f32 %v3222, %v3347
  %v3359 = vadd.f32 %v3223, %v3351
  %v3360 = vlaneseq
  %v3361 = vshrl.u32 %v3360, 7
  %v3362 = vsub.s32 3, %v3361
  %v3363 = vrot.slane %v2812, %v3362
  %3365 = vrot.lane.b32.xlu0 %v3363, 10
  %v3366 = vpop.permute.xlu0 %3365
  %v3368 = vmul.f32 %v2802, %v3366
  %v3369 = vmul.f32 %v2803, %v3366
  %v3370 = vmul.f32 %v2805, %v3366
  %v3371 = vmul.f32 %v2806, %v3366
  %3376 = vrot.lane.b32.xlu0 %v3368, 110
  %v3377 = vpop.permute.xlu0 %3376
  %3378 = vrot.lane.b32.xlu0 %v3369, 110
  %v3379 = vpop.permute.xlu0 %3378
  %3380 = vrot.lane.b32.xlu0 %v3370, 110
  %v3381 = vpop.permute.xlu0 %3380
  %3382 = vrot.lane.b32.xlu0 %v3371, 110
  %v3383 = vpop.permute.xlu0 %3382
  %v3384 = vsel %vm541, %v3377, %v3379
  %v3385 = vsel %vm541, %v3381, %v3383
  %v3390 = vadd.f32 %v3254, %v3377
  %v3391 = vadd.f32 %v3255, %v3384
  %v3392 = vadd.f32 %v3256, %v3381
  %v3393 = vadd.f32 %v3257, %v3385
  %v3394 = vlaneseq
  %v3395 = vshrl.u32 %v3394, 7
  %v3396 = vsub.s32 4, %v3395
  %v3397 = vrot.slane %v2812, %v3396
  %3399 = vrot.lane.b32.xlu0 %v3397, 11
  %v3400 = vpop.permute.xlu0 %3399
  %v3402 = vmul.f32 %v2802, %v3400
  %v3403 = vmul.f32 %v2803, %v3400
  %v3404 = vmul.f32 %v2805, %v3400
  %v3405 = vmul.f32 %v2806, %v3400
  %3410 = vrot.lane.b32.xlu0 %v3402, 106
  %v3411 = vpop.permute.xlu0 %3410
  %3412 = vrot.lane.b32.xlu0 %v3403, 106
  %v3413 = vpop.permute.xlu0 %3412
  %3414 = vrot.lane.b32.xlu0 %v3404, 106
  %v3415 = vpop.permute.xlu0 %3414
  %3416 = vrot.lane.b32.xlu0 %v3405, 106
  %v3417 = vpop.permute.xlu0 %3416
  %v3418 = vsel %vm678, %v3411, %v3413
  %v3419 = vsel %vm678, %v3415, %v3417
  %v3424 = vadd.f32 %v3288, %v3411
  %v3425 = vadd.f32 %v3289, %v3418
  %v3426 = vadd.f32 %v3290, %v3415
  %v3427 = vadd.f32 %v3291, %v3419
  %v3428 = vlaneseq
  %v3429 = vshrl.u32 %v3428, 7
  %v3430 = vsub.s32 5, %v3429
  %v3431 = vrot.slane %v2812, %v3430
  %3433 = vrot.lane.b32.xlu0 %v3431, 117
  %v3434 = vpop.permute.xlu0 %3433
  %v3436 = vmul.f32 %v2801, %v3434
  %v3437 = vmul.f32 %v2802, %v3434
  %v3438 = vmul.f32 %v2804, %v3434
  %v3439 = vmul.f32 %v2805, %v3434
  %v3440 = vmul.f32 %v2807, %v3434
  %v3441 = vmul.f32 %v2808, %v3434
  %v3448 = vrot.slane %v3436, 1
  %v3449 = vrot.slane %v3438, 1
  %v3450 = vsel %vm709, %v3448, %v3449
  %v3451 = vrot.slane %v3437, 1
  %v3452 = vrot.slane %v3439, 1
  %v3453 = vsel %vm709, %v3451, %v3452
  %v3454 = vrot.slane %v3440, 1
  %v3455 = vsel %vm709, %v3449, %v3454
  %v3456 = vrot.slane %v3441, 1
  %v3457 = vsel %vm709, %v3452, %v3456
  %3458 = vrot.lane.b32.xlu0 %v3450, 1
  %v3459 = vpop.permute.xlu0 %3458
  %3460 = vrot.lane.b32.xlu0 %v3453, 1
  %v3461 = vpop.permute.xlu0 %3460
  %3462 = vrot.lane.b32.xlu0 %v3455, 1
  %v3463 = vpop.permute.xlu0 %3462
  %3464 = vrot.lane.b32.xlu0 %v3457, 1
  %v3465 = vpop.permute.xlu0 %3464
  %v3466 = vsel %vm728, %v3459, %v3461
  %v3467 = vsel %vm728, %v3463, %v3465
  %v3472 = vadd.f32 %v3322, %v3459
  %v3473 = vadd.f32 %v3323, %v3466
  %v3474 = vadd.f32 %v3324, %v3463
  %v3475 = vadd.f32 %v3325, %v3467
  %v3476 = vlaneseq
  %v3477 = vshrl.u32 %v3476, 7
  %v3478 = vsub.s32 6, %v3477
  %v3479 = vrot.slane %v2812, %v3478
  %3481 = vrot.lane.b32.xlu0 %v3479, 118
  %v3482 = vpop.permute.xlu0 %3481
  %v3484 = vmul.f32 %v2801, %v3482
  %v3485 = vmul.f32 %v2802, %v3482
  %v3486 = vmul.f32 %v2804, %v3482
  %v3487 = vmul.f32 %v2805, %v3482
  %v3488 = vmul.f32 %v2807, %v3482
  %v3489 = vmul.f32 %v2808, %v3482
  %v3496 = vrot.slane %v3484, 1
  %v3497 = vrot.slane %v3486, 1
  %v3498 = vsel %vm709, %v3496, %v3497
  %v3499 = vrot.slane %v3485, 1
  %v3500 = vrot.slane %v3487, 1
  %v3501 = vsel %vm709, %v3499, %v3500
  %v3502 = vrot.slane %v3488, 1
  %v3503 = vsel %vm709, %v3497, %v3502
  %v3504 = vrot.slane %v3489, 1
  %v3505 = vsel %vm709, %v3500, %v3504
  %3506 = vrot.lane.b32.xlu0 %v3498, 1
  %v3507 = vpop.permute.xlu0 %3506
  %3508 = vrot.lane.b32.xlu0 %v3501, 1
  %v3509 = vpop.permute.xlu0 %3508
  %3510 = vrot.lane.b32.xlu0 %v3503, 1
  %v3511 = vpop.permute.xlu0 %3510
  %3512 = vrot.lane.b32.xlu0 %v3505, 1
  %v3513 = vpop.permute.xlu0 %3512
  %v3514 = vsel %vm728, %v3507, %v3509
  %v3515 = vsel %vm728, %v3511, %v3513
  %v3520 = vadd.f32 %v3356, %v3507
  %v3521 = vadd.f32 %v3357, %v3514
  %v3522 = vadd.f32 %v3358, %v3511
  %v3523 = vadd.f32 %v3359, %v3515
  %v3524 = vlaneseq
  %v3525 = vshrl.u32 %v3524, 7
  %v3526 = vsub.s32 7, %v3525
  %v3527 = vrot.slane %v2812, %v3526
  %3529 = vrot.lane.b32.xlu0 %v3527, 119
  %v3530 = vpop.permute.xlu0 %3529
  %v3532 = vmul.f32 %v2801, %v3530
  %v3533 = vmul.f32 %v2802, %v3530
  %v3534 = vmul.f32 %v2804, %v3530
  %v3535 = vmul.f32 %v2805, %v3530
  %v3536 = vmul.f32 %v2807, %v3530
  %v3537 = vmul.f32 %v2808, %v3530
  %v3544 = vrot.slane %v3532, 1
  %v3545 = vrot.slane %v3534, 1
  %v3546 = vsel %vm709, %v3544, %v3545
  %v3547 = vrot.slane %v3533, 1
  %v3548 = vrot.slane %v3535, 1
  %v3549 = vsel %vm709, %v3547, %v3548
  %v3550 = vrot.slane %v3536, 1
  %v3551 = vsel %vm709, %v3545, %v3550
  %v3552 = vrot.slane %v3537, 1
  %v3553 = vsel %vm709, %v3548, %v3552
  %3554 = vrot.lane.b32.xlu0 %v3546, 1
  %v3555 = vpop.permute.xlu0 %3554
  %3556 = vrot.lane.b32.xlu0 %v3549, 1
  %v3557 = vpop.permute.xlu0 %3556
  %3558 = vrot.lane.b32.xlu0 %v3551, 1
  %v3559 = vpop.permute.xlu0 %3558
  %3560 = vrot.lane.b32.xlu0 %v3553, 1
  %v3561 = vpop.permute.xlu0 %3560
  %v3562 = vsel %vm728, %v3555, %v3557
  %v3563 = vsel %vm728, %v3559, %v3561
  %v3568 = vadd.f32 %v3390, %v3555
  %v3569 = vadd.f32 %v3391, %v3562
  %v3570 = vadd.f32 %v3392, %v3559
  %v3571 = vadd.f32 %v3393, %v3563
  %v3572 = vlaneseq
  %v3573 = vshrl.u32 %v3572, 7
  %v3574 = vsub.s32 0, %v3573
  %v3575 = vrot.slane %v2813, %v3574
  %3577 = vrot.lane.b32.xlu0 %v3575, 120
  %v3578 = vpop.permute.xlu0 %3577
  %v3580 = vmul.f32 %v2801, %v3578
  %v3581 = vmul.f32 %v2802, %v3578
  %v3582 = vmul.f32 %v2804, %v3578
  %v3583 = vmul.f32 %v2805, %v3578
  %v3584 = vmul.f32 %v2807, %v3578
  %v3585 = vmul.f32 %v2808, %v3578
  %v3592 = vrot.slane %v3580, 1
  %v3593 = vrot.slane %v3582, 1
  %v3594 = vsel %vm709, %v3592, %v3593
  %v3595 = vrot.slane %v3581, 1
  %v3596 = vrot.slane %v3583, 1
  %v3597 = vsel %vm709, %v3595, %v3596
  %v3598 = vrot.slane %v3584, 1
  %v3599 = vsel %vm709, %v3593, %v3598
  %v3600 = vrot.slane %v3585, 1
  %v3601 = vsel %vm709, %v3596, %v3600
  %3602 = vrot.lane.b32.xlu0 %v3594, 125
  %v3603 = vpop.permute.xlu0 %3602
  %3604 = vrot.lane.b32.xlu0 %v3597, 125
  %v3605 = vpop.permute.xlu0 %3604
  %3606 = vrot.lane.b32.xlu0 %v3599, 125
  %v3607 = vpop.permute.xlu0 %3606
  %3608 = vrot.lane.b32.xlu0 %v3601, 125
  %v3609 = vpop.permute.xlu0 %3608
  %v3610 = vsel %vm873, %v3603, %v3605
  %v3611 = vsel %vm873, %v3607, %v3609
  %v3616 = vadd.f32 %v3424, %v3610
  %v3617 = vadd.f32 %v3425, %v3605
  %v3618 = vadd.f32 %v3426, %v3611
  %v3619 = vadd.f32 %v3427, %v3609
  %v3620 = vlaneseq
  %v3621 = vshrl.u32 %v3620, 7
  %v3622 = vsub.s32 1, %v3621
  %v3623 = vrot.slane %v2813, %v3622
  %3625 = vrot.lane.b32.xlu0 %v3623, 121
  %v3626 = vpop.permute.xlu0 %3625
  %v3628 = vmul.f32 %v2801, %v3626
  %v3629 = vmul.f32 %v2802, %v3626
  %v3630 = vmul.f32 %v2804, %v3626
  %v3631 = vmul.f32 %v2805, %v3626
  %v3632 = vmul.f32 %v2807, %v3626
  %v3633 = vmul.f32 %v2808, %v3626
  %v3640 = vrot.slane %v3628, 1
  %v3641 = vrot.slane %v3630, 1
  %v3642 = vsel %vm709, %v3640, %v3641
  %v3643 = vrot.slane %v3629, 1
  %v3644 = vrot.slane %v3631, 1
  %v3645 = vsel %vm709, %v3643, %v3644
  %v3646 = vrot.slane %v3632, 1
  %v3647 = vsel %vm709, %v3641, %v3646
  %v3648 = vrot.slane %v3633, 1
  %v3649 = vsel %vm709, %v3644, %v3648
  %3650 = vrot.lane.b32.xlu0 %v3642, 125
  %v3651 = vpop.permute.xlu0 %3650
  %3652 = vrot.lane.b32.xlu0 %v3645, 125
  %v3653 = vpop.permute.xlu0 %3652
  %3654 = vrot.lane.b32.xlu0 %v3647, 125
  %v3655 = vpop.permute.xlu0 %3654
  %3656 = vrot.lane.b32.xlu0 %v3649, 125
  %v3657 = vpop.permute.xlu0 %3656
  %v3658 = vsel %vm873, %v3651, %v3653
  %v3659 = vsel %vm873, %v3655, %v3657
  %v3664 = vadd.f32 %v3472, %v3658
  %v3665 = vadd.f32 %v3473, %v3653
  %v3666 = vadd.f32 %v3474, %v3659
  %v3667 = vadd.f32 %v3475, %v3657
  %v3668 = vlaneseq
  %v3669 = vshrl.u32 %v3668, 7
  %v3670 = vsub.s32 2, %v3669
  %v3671 = vrot.slane %v2813, %v3670
  %3673 = vrot.lane.b32.xlu0 %v3671, 122
  %v3674 = vpop.permute.xlu0 %3673
  %v3676 = vmul.f32 %v2801, %v3674
  %v3677 = vmul.f32 %v2802, %v3674
  %v3678 = vmul.f32 %v2804, %v3674
  %v3679 = vmul.f32 %v2805, %v3674
  %v3680 = vmul.f32 %v2807, %v3674
  %v3681 = vmul.f32 %v2808, %v3674
  %v3688 = vrot.slane %v3676, 1
  %v3689 = vrot.slane %v3678, 1
  %v3690 = vsel %vm709, %v3688, %v3689
  %v3691 = vrot.slane %v3677, 1
  %v3692 = vrot.slane %v3679, 1
  %v3693 = vsel %vm709, %v3691, %v3692
  %v3694 = vrot.slane %v3680, 1
  %v3695 = vsel %vm709, %v3689, %v3694
  %v3696 = vrot.slane %v3681, 1
  %v3697 = vsel %vm709, %v3692, %v3696
  %3698 = vrot.lane.b32.xlu0 %v3690, 125
  %v3699 = vpop.permute.xlu0 %3698
  %3700 = vrot.lane.b32.xlu0 %v3693, 125
  %v3701 = vpop.permute.xlu0 %3700
  %3702 = vrot.lane.b32.xlu0 %v3695, 125
  %v3703 = vpop.permute.xlu0 %3702
  %3704 = vrot.lane.b32.xlu0 %v3697, 125
  %v3705 = vpop.permute.xlu0 %3704
  %v3706 = vsel %vm873, %v3699, %v3701
  %v3707 = vsel %vm873, %v3703, %v3705
  %v3712 = vadd.f32 %v3520, %v3706
  %v3713 = vadd.f32 %v3521, %v3701
  %v3714 = vadd.f32 %v3522, %v3707
  %v3715 = vadd.f32 %v3523, %v3705
  %v3716 = vlaneseq
  %v3717 = vshrl.u32 %v3716, 7
  %v3718 = vsub.s32 3, %v3717
  %v3719 = vrot.slane %v2813, %v3718
  %3721 = vrot.lane.b32.xlu0 %v3719, 123
  %v3722 = vpop.permute.xlu0 %3721
  %v3724 = vmul.f32 %v2801, %v3722
  %v3725 = vmul.f32 %v2802, %v3722
  %v3726 = vmul.f32 %v2804, %v3722
  %v3727 = vmul.f32 %v2805, %v3722
  %v3728 = vmul.f32 %v2807, %v3722
  %v3729 = vmul.f32 %v2808, %v3722
  %v3736 = vrot.slane %v3724, 1
  %v3737 = vrot.slane %v3726, 1
  %v3738 = vsel %vm709, %v3736, %v3737
  %v3739 = vrot.slane %v3725, 1
  %v3740 = vrot.slane %v3727, 1
  %v3741 = vsel %vm709, %v3739, %v3740
  %v3742 = vrot.slane %v3728, 1
  %v3743 = vsel %vm709, %v3737, %v3742
  %v3744 = vrot.slane %v3729, 1
  %v3745 = vsel %vm709, %v3740, %v3744
  %3746 = vrot.lane.b32.xlu0 %v3738, 125
  %v3747 = vpop.permute.xlu0 %3746
  %3748 = vrot.lane.b32.xlu0 %v3741, 125
  %v3749 = vpop.permute.xlu0 %3748
  %3750 = vrot.lane.b32.xlu0 %v3743, 125
  %v3751 = vpop.permute.xlu0 %3750
  %3752 = vrot.lane.b32.xlu0 %v3745, 125
  %v3753 = vpop.permute.xlu0 %3752
  %v3754 = vsel %vm873, %v3747, %v3749
  %v3755 = vsel %vm873, %v3751, %v3753
  %v3760 = vadd.f32 %v3568, %v3754
  %v3761 = vadd.f32 %v3569, %v3749
  %v3762 = vadd.f32 %v3570, %v3755
  %v3763 = vadd.f32 %v3571, %v3753
  %v3764 = vlaneseq
  %v3765 = vshrl.u32 %v3764, 7
  %v3766 = vsub.s32 4, %v3765
  %v3767 = vrot.slane %v2813, %v3766
  %3769 = vrot.lane.b32.xlu0 %v3767, 125
  %v3770 = vpop.permute.xlu0 %3769
  %v3772 = vmul.f32 %v2801, %v3770
  %v3773 = vmul.f32 %v2802, %v3770
  %v3774 = vmul.f32 %v2804, %v3770
  %v3775 = vmul.f32 %v2805, %v3770
  %v3776 = vmul.f32 %v2807, %v3770
  %v3777 = vmul.f32 %v2808, %v3770
  %v3784 = vrot.slane %v3772, 1
  %v3785 = vrot.slane %v3774, 1
  %v3786 = vsel %vm709, %v3784, %v3785
  %v3787 = vrot.slane %v3773, 1
  %v3788 = vrot.slane %v3775, 1
  %v3789 = vsel %vm709, %v3787, %v3788
  %v3790 = vrot.slane %v3776, 1
  %v3791 = vsel %vm709, %v3785, %v3790
  %v3792 = vrot.slane %v3777, 1
  %v3793 = vsel %vm709, %v3788, %v3792
  %3794 = vrot.lane.b32.xlu0 %v3786, 120
  %v3795 = vpop.permute.xlu0 %3794
  %3796 = vrot.lane.b32.xlu0 %v3789, 120
  %v3797 = vpop.permute.xlu0 %3796
  %3798 = vrot.lane.b32.xlu0 %v3791, 120
  %v3799 = vpop.permute.xlu0 %3798
  %3800 = vrot.lane.b32.xlu0 %v3793, 120
  %v3801 = vpop.permute.xlu0 %3800
  %v3802 = vsel %vm1066, %v3795, %v3797
  %v3803 = vsel %vm1066, %v3799, %v3801
  %v3808 = vadd.f32 %v3616, %v3802
  %v3809 = vadd.f32 %v3617, %v3797
  %v3810 = vadd.f32 %v3618, %v3803
  %v3811 = vadd.f32 %v3619, %v3801
  %v3812 = vlaneseq
  %v3813 = vshrl.u32 %v3812, 7
  %v3814 = vsub.s32 5, %v3813
  %v3815 = vrot.slane %v2813, %v3814
  %3817 = vrot.lane.b32.xlu0 %v3815, 126
  %v3818 = vpop.permute.xlu0 %3817
  %v3820 = vmul.f32 %v2801, %v3818
  %v3821 = vmul.f32 %v2802, %v3818
  %v3822 = vmul.f32 %v2804, %v3818
  %v3823 = vmul.f32 %v2805, %v3818
  %v3824 = vmul.f32 %v2807, %v3818
  %v3825 = vmul.f32 %v2808, %v3818
  %v3832 = vrot.slane %v3820, 1
  %v3833 = vrot.slane %v3822, 1
  %v3834 = vsel %vm709, %v3832, %v3833
  %v3835 = vrot.slane %v3821, 1
  %v3836 = vrot.slane %v3823, 1
  %v3837 = vsel %vm709, %v3835, %v3836
  %v3838 = vrot.slane %v3824, 1
  %v3839 = vsel %vm709, %v3833, %v3838
  %v3840 = vrot.slane %v3825, 1
  %v3841 = vsel %vm709, %v3836, %v3840
  %3842 = vrot.lane.b32.xlu0 %v3834, 120
  %v3843 = vpop.permute.xlu0 %3842
  %3844 = vrot.lane.b32.xlu0 %v3837, 120
  %v3845 = vpop.permute.xlu0 %3844
  %3846 = vrot.lane.b32.xlu0 %v3839, 120
  %v3847 = vpop.permute.xlu0 %3846
  %3848 = vrot.lane.b32.xlu0 %v3841, 120
  %v3849 = vpop.permute.xlu0 %3848
  %v3850 = vsel %vm1066, %v3843, %v3845
  %v3851 = vsel %vm1066, %v3847, %v3849
  %v3856 = vadd.f32 %v3664, %v3850
  %v3857 = vadd.f32 %v3665, %v3845
  %v3858 = vadd.f32 %v3666, %v3851
  %v3859 = vadd.f32 %v3667, %v3849
  %v3860 = vlaneseq
  %v3861 = vshrl.u32 %v3860, 7
  %v3862 = vsub.s32 6, %v3861
  %v3863 = vrot.slane %v2813, %v3862
  %3865 = vrot.lane.b32.xlu0 %v3863, 127
  %v3866 = vpop.permute.xlu0 %3865
  %v3868 = vmul.f32 %v2801, %v3866
  %v3869 = vmul.f32 %v2802, %v3866
  %v3870 = vmul.f32 %v2804, %v3866
  %v3871 = vmul.f32 %v2805, %v3866
  %v3872 = vmul.f32 %v2807, %v3866
  %v3873 = vmul.f32 %v2808, %v3866
  %v3880 = vrot.slane %v3868, 1
  %v3881 = vrot.slane %v3870, 1
  %v3882 = vsel %vm709, %v3880, %v3881
  %v3883 = vrot.slane %v3869, 1
  %v3884 = vrot.slane %v3871, 1
  %v3885 = vsel %vm709, %v3883, %v3884
  %v3886 = vrot.slane %v3872, 1
  %v3887 = vsel %vm709, %v3881, %v3886
  %v3888 = vrot.slane %v3873, 1
  %v3889 = vsel %vm709, %v3884, %v3888
  %3890 = vrot.lane.b32.xlu0 %v3882, 120
  %v3891 = vpop.permute.xlu0 %3890
  %3892 = vrot.lane.b32.xlu0 %v3885, 120
  %v3893 = vpop.permute.xlu0 %3892
  %3894 = vrot.lane.b32.xlu0 %v3887, 120
  %v3895 = vpop.permute.xlu0 %3894
  %3896 = vrot.lane.b32.xlu0 %v3889, 120
  %v3897 = vpop.permute.xlu0 %3896
  %v3898 = vsel %vm1066, %v3891, %v3893
  %v3899 = vsel %vm1066, %v3895, %v3897
  %v3904 = vadd.f32 %v3712, %v3898
  %v3905 = vadd.f32 %v3713, %v3893
  %v3906 = vadd.f32 %v3714, %v3899
  %v3907 = vadd.f32 %v3715, %v3897
  %v3908 = vlaneseq
  %v3909 = vshrl.u32 %v3908, 7
  %v3910 = vsub.s32 7, %v3909
  %v3911 = vrot.slane %v2813, %v3910
  %v3912 = vmul.f32 %v2802, %v3911
  %v3913 = vmul.f32 %v2805, %v3911
  %v3914 = vmul.f32 %v2808, %v3911
  %v3918 = vrot.slane %v3912, 1
  %v3919 = vrot.slane %v3913, 1
  %v3920 = vsel %vm709, %v3918, %v3919
  %v3921 = vrot.slane %v3914, 1
  %v3922 = vsel %vm709, %v3919, %v3921
  %3923 = vrot.lane.b32.xlu0 %v3920, 120
  %v3924 = vpop.permute.xlu0 %3923
  %3925 = vrot.lane.b32.xlu0 %v3922, 120
  %v3926 = vpop.permute.xlu0 %3925
  %v3929 = vadd.f32 %v3760, %v3924
  %v3930 = vadd.f32 %v3761, %v3924
  %v3931 = vadd.f32 %v3762, %v3926
  %v3932 = vadd.f32 %v3763, %v3926
  %v3933 = vlaneseq
  %v3934 = vshrl.u32 %v3933, 7
  %v3935 = vsub.s32 0, %v3934
  %v3936 = vrot.slane %v2814, %v3935
  %3938 = vrot.lane.b32.xlu0 %v3936, 1
  %v3939 = vpop.permute.xlu0 %3938
  %v3941 = vmul.f32 %v2802, %v3939
  %v3942 = vmul.f32 %v2803, %v3939
  %v3943 = vmul.f32 %v2805, %v3939
  %v3944 = vmul.f32 %v2806, %v3939
  %v3945 = vmul.f32 %v2808, %v3939
  %v3946 = vmul.f32 %v2809, %v3939
  %v3953 = vrot.slane %v3941, 1
  %v3954 = vrot.slane %v3943, 1
  %v3955 = vsel %vm709, %v3953, %v3954
  %v3956 = vrot.slane %v3942, 1
  %v3957 = vrot.slane %v3944, 1
  %v3958 = vsel %vm709, %v3956, %v3957
  %v3959 = vrot.slane %v3945, 1
  %v3960 = vsel %vm709, %v3954, %v3959
  %v3961 = vrot.slane %v3946, 1
  %v3962 = vsel %vm709, %v3957, %v3961
  %3963 = vrot.lane.b32.xlu0 %v3955, 116
  %v3964 = vpop.permute.xlu0 %3963
  %3965 = vrot.lane.b32.xlu0 %v3958, 116
  %v3966 = vpop.permute.xlu0 %3965
  %3967 = vrot.lane.b32.xlu0 %v3960, 116
  %v3968 = vpop.permute.xlu0 %3967
  %3969 = vrot.lane.b32.xlu0 %v3962, 116
  %v3970 = vpop.permute.xlu0 %3969
  %v3971 = vsel %vm1236, %v3964, %v3966
  %v3972 = vsel %vm1236, %v3968, %v3970
  %v3977 = vadd.f32 %v3808, %v3964
  %v3978 = vadd.f32 %v3809, %v3971
  %v3979 = vadd.f32 %v3810, %v3968
  %v3980 = vadd.f32 %v3811, %v3972
  %v3981 = vlaneseq
  %v3982 = vshrl.u32 %v3981, 7
  %v3983 = vsub.s32 1, %v3982
  %v3984 = vrot.slane %v2814, %v3983
  %3986 = vrot.lane.b32.xlu0 %v3984, 2
  %v3987 = vpop.permute.xlu0 %3986
  %v3989 = vmul.f32 %v2802, %v3987
  %v3990 = vmul.f32 %v2803, %v3987
  %v3991 = vmul.f32 %v2805, %v3987
  %v3992 = vmul.f32 %v2806, %v3987
  %v3993 = vmul.f32 %v2808, %v3987
  %v3994 = vmul.f32 %v2809, %v3987
  %v4001 = vrot.slane %v3989, 1
  %v4002 = vrot.slane %v3991, 1
  %v4003 = vsel %vm709, %v4001, %v4002
  %v4004 = vrot.slane %v3990, 1
  %v4005 = vrot.slane %v3992, 1
  %v4006 = vsel %vm709, %v4004, %v4005
  %v4007 = vrot.slane %v3993, 1
  %v4008 = vsel %vm709, %v4002, %v4007
  %v4009 = vrot.slane %v3994, 1
  %v4010 = vsel %vm709, %v4005, %v4009
  %4011 = vrot.lane.b32.xlu0 %v4003, 116
  %v4012 = vpop.permute.xlu0 %4011
  %4013 = vrot.lane.b32.xlu0 %v4006, 116
  %v4014 = vpop.permute.xlu0 %4013
  %4015 = vrot.lane.b32.xlu0 %v4008, 116
  %v4016 = vpop.permute.xlu0 %4015
  %4017 = vrot.lane.b32.xlu0 %v4010, 116
  %v4018 = vpop.permute.xlu0 %4017
  %v4019 = vsel %vm1236, %v4012, %v4014
  %v4020 = vsel %vm1236, %v4016, %v4018
  %v4025 = vadd.f32 %v3856, %v4012
  %v4026 = vadd.f32 %v3857, %v4019
  %v4027 = vadd.f32 %v3858, %v4016
  %v4028 = vadd.f32 %v3859, %v4020
  %v4029 = vlaneseq
  %v4030 = vshrl.u32 %v4029, 7
  %v4031 = vsub.s32 2, %v4030
  %v4032 = vrot.slane %v2814, %v4031
  %4034 = vrot.lane.b32.xlu0 %v4032, 3
  %v4035 = vpop.permute.xlu0 %4034
  %v4037 = vmul.f32 %v2802, %v4035
  %v4038 = vmul.f32 %v2803, %v4035
  %v4039 = vmul.f32 %v2805, %v4035
  %v4040 = vmul.f32 %v2806, %v4035
  %v4041 = vmul.f32 %v2808, %v4035
  %v4042 = vmul.f32 %v2809, %v4035
  %v4049 = vrot.slane %v4037, 1
  %v4050 = vrot.slane %v4039, 1
  %v4051 = vsel %vm709, %v4049, %v4050
  %v4052 = vrot.slane %v4038, 1
  %v4053 = vrot.slane %v4040, 1
  %v4054 = vsel %vm709, %v4052, %v4053
  %v4055 = vrot.slane %v4041, 1
  %v4056 = vsel %vm709, %v4050, %v4055
  %v4057 = vrot.slane %v4042, 1
  %v4058 = vsel %vm709, %v4053, %v4057
  %4059 = vrot.lane.b32.xlu0 %v4051, 116
  %v4060 = vpop.permute.xlu0 %4059
  %4061 = vrot.lane.b32.xlu0 %v4054, 116
  %v4062 = vpop.permute.xlu0 %4061
  %4063 = vrot.lane.b32.xlu0 %v4056, 116
  %v4064 = vpop.permute.xlu0 %4063
  %4065 = vrot.lane.b32.xlu0 %v4058, 116
  %v4066 = vpop.permute.xlu0 %4065
  %v4067 = vsel %vm1236, %v4060, %v4062
  %v4068 = vsel %vm1236, %v4064, %v4066
  %v4073 = vadd.f32 %v3904, %v4060
  %v4074 = vadd.f32 %v3905, %v4067
  %v4075 = vadd.f32 %v3906, %v4064
  %v4076 = vadd.f32 %v3907, %v4068
  %v4077 = vlaneseq
  %v4078 = vshrl.u32 %v4077, 7
  %v4079 = vsub.s32 3, %v4078
  %v4080 = vrot.slane %v2814, %v4079
  %4082 = vrot.lane.b32.xlu0 %v4080, 5
  %v4083 = vpop.permute.xlu0 %4082
  %v4085 = vmul.f32 %v2802, %v4083
  %v4086 = vmul.f32 %v2803, %v4083
  %v4087 = vmul.f32 %v2805, %v4083
  %v4088 = vmul.f32 %v2806, %v4083
  %v4089 = vmul.f32 %v2808, %v4083
  %v4090 = vmul.f32 %v2809, %v4083
  %v4097 = vrot.slane %v4085, 1
  %v4098 = vrot.slane %v4087, 1
  %v4099 = vsel %vm709, %v4097, %v4098
  %v4100 = vrot.slane %v4086, 1
  %v4101 = vrot.slane %v4088, 1
  %v4102 = vsel %vm709, %v4100, %v4101
  %v4103 = vrot.slane %v4089, 1
  %v4104 = vsel %vm709, %v4098, %v4103
  %v4105 = vrot.slane %v4090, 1
  %v4106 = vsel %vm709, %v4101, %v4105
  %4107 = vrot.lane.b32.xlu0 %v4099, 115
  %v4108 = vpop.permute.xlu0 %4107
  %4109 = vrot.lane.b32.xlu0 %v4102, 115
  %v4110 = vpop.permute.xlu0 %4109
  %4111 = vrot.lane.b32.xlu0 %v4104, 115
  %v4112 = vpop.permute.xlu0 %4111
  %4113 = vrot.lane.b32.xlu0 %v4106, 115
  %v4114 = vpop.permute.xlu0 %4113
  %v4115 = vsel %vm403, %v4108, %v4110
  %v4116 = vsel %vm403, %v4112, %v4114
  %v4121 = vadd.f32 %v3929, %v4108
  %v4122 = vadd.f32 %v3930, %v4115
  %v4123 = vadd.f32 %v3931, %v4112
  %v4124 = vadd.f32 %v3932, %v4116
  %v4125 = vlaneseq
  %v4126 = vshrl.u32 %v4125, 7
  %v4127 = vsub.s32 4, %v4126
  %v4128 = vrot.slane %v2814, %v4127
  %4130 = vrot.lane.b32.xlu0 %v4128, 6
  %v4131 = vpop.permute.xlu0 %4130
  %v4133 = vmul.f32 %v2802, %v4131
  %v4134 = vmul.f32 %v2803, %v4131
  %v4135 = vmul.f32 %v2805, %v4131
  %v4136 = vmul.f32 %v2806, %v4131
  %v4137 = vmul.f32 %v2808, %v4131
  %v4138 = vmul.f32 %v2809, %v4131
  %v4145 = vrot.slane %v4133, 1
  %v4146 = vrot.slane %v4135, 1
  %v4147 = vsel %vm709, %v4145, %v4146
  %v4148 = vrot.slane %v4134, 1
  %v4149 = vrot.slane %v4136, 1
  %v4150 = vsel %vm709, %v4148, %v4149
  %v4151 = vrot.slane %v4137, 1
  %v4152 = vsel %vm709, %v4146, %v4151
  %v4153 = vrot.slane %v4138, 1
  %v4154 = vsel %vm709, %v4149, %v4153
  %4155 = vrot.lane.b32.xlu0 %v4147, 111
  %v4156 = vpop.permute.xlu0 %4155
  %4157 = vrot.lane.b32.xlu0 %v4150, 111
  %v4158 = vpop.permute.xlu0 %4157
  %4159 = vrot.lane.b32.xlu0 %v4152, 111
  %v4160 = vpop.permute.xlu0 %4159
  %4161 = vrot.lane.b32.xlu0 %v4154, 111
  %v4162 = vpop.permute.xlu0 %4161
  %v4163 = vsel %vm1429, %v4156, %v4158
  %v4164 = vsel %vm1429, %v4160, %v4162
  %v4169 = vadd.f32 %v3977, %v4156
  %v4170 = vadd.f32 %v3978, %v4163
  %v4171 = vadd.f32 %v3979, %v4160
  %v4172 = vadd.f32 %v3980, %v4164
  %v4173 = vlaneseq
  %v4174 = vshrl.u32 %v4173, 7
  %v4175 = vsub.s32 5, %v4174
  %v4176 = vrot.slane %v2814, %v4175
  %4178 = vrot.lane.b32.xlu0 %v4176, 7
  %v4179 = vpop.permute.xlu0 %4178
  %v4181 = vmul.f32 %v2802, %v4179
  %v4182 = vmul.f32 %v2803, %v4179
  %v4183 = vmul.f32 %v2805, %v4179
  %v4184 = vmul.f32 %v2806, %v4179
  %v4185 = vmul.f32 %v2808, %v4179
  %v4186 = vmul.f32 %v2809, %v4179
  %v4193 = vrot.slane %v4181, 1
  %v4194 = vrot.slane %v4183, 1
  %v4195 = vsel %vm709, %v4193, %v4194
  %v4196 = vrot.slane %v4182, 1
  %v4197 = vrot.slane %v4184, 1
  %v4198 = vsel %vm709, %v4196, %v4197
  %v4199 = vrot.slane %v4185, 1
  %v4200 = vsel %vm709, %v4194, %v4199
  %v4201 = vrot.slane %v4186, 1
  %v4202 = vsel %vm709, %v4197, %v4201
  %4203 = vrot.lane.b32.xlu0 %v4195, 111
  %v4204 = vpop.permute.xlu0 %4203
  %4205 = vrot.lane.b32.xlu0 %v4198, 111
  %v4206 = vpop.permute.xlu0 %4205
  %4207 = vrot.lane.b32.xlu0 %v4200, 111
  %v4208 = vpop.permute.xlu0 %4207
  %4209 = vrot.lane.b32.xlu0 %v4202, 111
  %v4210 = vpop.permute.xlu0 %4209
  %v4211 = vsel %vm1429, %v4204, %v4206
  %v4212 = vsel %vm1429, %v4208, %v4210
  %v4217 = vadd.f32 %v4025, %v4204
  %v4218 = vadd.f32 %v4026, %v4211
  %v4219 = vadd.f32 %v4027, %v4208
  %v4220 = vadd.f32 %v4028, %v4212
  %v4221 = vlaneseq
  %v4222 = vshrl.u32 %v4221, 7
  %v4223 = vsub.s32 6, %v4222
  %v4224 = vrot.slane %v2814, %v4223
  %4226 = vrot.lane.b32.xlu0 %v4224, 8
  %v4227 = vpop.permute.xlu0 %4226
  %v4229 = vmul.f32 %v2802, %v4227
  %v4230 = vmul.f32 %v2803, %v4227
  %v4231 = vmul.f32 %v2805, %v4227
  %v4232 = vmul.f32 %v2806, %v4227
  %v4233 = vmul.f32 %v2808, %v4227
  %v4234 = vmul.f32 %v2809, %v4227
  %v4241 = vrot.slane %v4229, 1
  %v4242 = vrot.slane %v4231, 1
  %v4243 = vsel %vm709, %v4241, %v4242
  %v4244 = vrot.slane %v4230, 1
  %v4245 = vrot.slane %v4232, 1
  %v4246 = vsel %vm709, %v4244, %v4245
  %v4247 = vrot.slane %v4233, 1
  %v4248 = vsel %vm709, %v4242, %v4247
  %v4249 = vrot.slane %v4234, 1
  %v4250 = vsel %vm709, %v4245, %v4249
  %4251 = vrot.lane.b32.xlu0 %v4243, 111
  %v4252 = vpop.permute.xlu0 %4251
  %4253 = vrot.lane.b32.xlu0 %v4246, 111
  %v4254 = vpop.permute.xlu0 %4253
  %4255 = vrot.lane.b32.xlu0 %v4248, 111
  %v4256 = vpop.permute.xlu0 %4255
  %4257 = vrot.lane.b32.xlu0 %v4250, 111
  %v4258 = vpop.permute.xlu0 %4257
  %v4259 = vsel %vm1429, %v4252, %v4254
  %v4260 = vsel %vm1429, %v4256, %v4258
  %v4265 = vadd.f32 %v4073, %v4252
  %v4266 = vadd.f32 %v4074, %v4259
  %v4267 = vadd.f32 %v4075, %v4256
  %v4268 = vadd.f32 %v4076, %v4260
  %v4269 = vlaneseq
  %v4270 = vshrl.u32 %v4269, 7
  %v4271 = vsub.s32 7, %v4270
  %v4272 = vrot.slane %v2814, %v4271
  %4274 = vrot.lane.b32.xlu0 %v4272, 9
  %v4275 = vpop.permute.xlu0 %4274
  %v4277 = vmul.f32 %v2802, %v4275
  %v4278 = vmul.f32 %v2803, %v4275
  %v4279 = vmul.f32 %v2805, %v4275
  %v4280 = vmul.f32 %v2806, %v4275
  %v4281 = vmul.f32 %v2808, %v4275
  %v4282 = vmul.f32 %v2809, %v4275
  %v4289 = vrot.slane %v4277, 1
  %v4290 = vrot.slane %v4279, 1
  %v4291 = vsel %vm709, %v4289, %v4290
  %v4292 = vrot.slane %v4278, 1
  %v4293 = vrot.slane %v4280, 1
  %v4294 = vsel %vm709, %v4292, %v4293
  %v4295 = vrot.slane %v4281, 1
  %v4296 = vsel %vm709, %v4290, %v4295
  %v4297 = vrot.slane %v4282, 1
  %v4298 = vsel %vm709, %v4293, %v4297
  %4299 = vrot.lane.b32.xlu0 %v4291, 111
  %v4300 = vpop.permute.xlu0 %4299
  %4301 = vrot.lane.b32.xlu0 %v4294, 111
  %v4302 = vpop.permute.xlu0 %4301
  %4303 = vrot.lane.b32.xlu0 %v4296, 111
  %v4304 = vpop.permute.xlu0 %4303
  %4305 = vrot.lane.b32.xlu0 %v4298, 111
  %v4306 = vpop.permute.xlu0 %4305
  %v4307 = vsel %vm1429, %v4300, %v4302
  %v4308 = vsel %vm1429, %v4304, %v4306
  %v4313 = vadd.f32 %v4121, %v4300
  %v4314 = vadd.f32 %v4122, %v4307
  %v4315 = vadd.f32 %v4123, %v4304
  %v4316 = vadd.f32 %v4124, %v4308
  %v4317 = vlaneseq
  %v4318 = vshrl.u32 %v4317, 7
  %v4319 = vsub.s32 0, %v4318
  %v4320 = vrot.slane %v2815, %v4319
  %4322 = vrot.lane.b32.xlu0 %v4320, 10
  %v4323 = vpop.permute.xlu0 %4322
  %v4325 = vmul.f32 %v2802, %v4323
  %v4326 = vmul.f32 %v2803, %v4323
  %v4327 = vmul.f32 %v2805, %v4323
  %v4328 = vmul.f32 %v2806, %v4323
  %v4329 = vmul.f32 %v2808, %v4323
  %v4330 = vmul.f32 %v2809, %v4323
  %v4337 = vrot.slane %v4325, 1
  %v4338 = vrot.slane %v4327, 1
  %v4339 = vsel %vm709, %v4337, %v4338
  %v4340 = vrot.slane %v4326, 1
  %v4341 = vrot.slane %v4328, 1
  %v4342 = vsel %vm709, %v4340, %v4341
  %v4343 = vrot.slane %v4329, 1
  %v4344 = vsel %vm709, %v4338, %v4343
  %v4345 = vrot.slane %v4330, 1
  %v4346 = vsel %vm709, %v4341, %v4345
  %4347 = vrot.lane.b32.xlu0 %v4339, 107
  %v4348 = vpop.permute.xlu0 %4347
  %4349 = vrot.lane.b32.xlu0 %v4342, 107
  %v4350 = vpop.permute.xlu0 %4349
  %4351 = vrot.lane.b32.xlu0 %v4344, 107
  %v4352 = vpop.permute.xlu0 %4351
  %4353 = vrot.lane.b32.xlu0 %v4346, 107
  %v4354 = vpop.permute.xlu0 %4353
  %v4355 = vsel %vm1622, %v4348, %v4350
  %v4356 = vsel %vm1622, %v4352, %v4354
  %v4361 = vadd.f32 %v4169, %v4348
  %v4362 = vadd.f32 %v4170, %v4355
  %v4363 = vadd.f32 %v4171, %v4352
  %v4364 = vadd.f32 %v4172, %v4356
  %v4365 = vlaneseq
  %v4366 = vshrl.u32 %v4365, 7
  %v4367 = vsub.s32 1, %v4366
  %v4368 = vrot.slane %v2815, %v4367
  %4370 = vrot.lane.b32.xlu0 %v4368, 11
  %v4371 = vpop.permute.xlu0 %4370
  %v4373 = vmul.f32 %v2802, %v4371
  %v4374 = vmul.f32 %v2803, %v4371
  %v4375 = vmul.f32 %v2805, %v4371
  %v4376 = vmul.f32 %v2806, %v4371
  %v4377 = vmul.f32 %v2808, %v4371
  %v4378 = vmul.f32 %v2809, %v4371
  %v4385 = vrot.slane %v4373, 1
  %v4386 = vrot.slane %v4375, 1
  %v4387 = vsel %vm709, %v4385, %v4386
  %v4388 = vrot.slane %v4374, 1
  %v4389 = vrot.slane %v4376, 1
  %v4390 = vsel %vm709, %v4388, %v4389
  %v4391 = vrot.slane %v4377, 1
  %v4392 = vsel %vm709, %v4386, %v4391
  %v4393 = vrot.slane %v4378, 1
  %v4394 = vsel %vm709, %v4389, %v4393
  %4395 = vrot.lane.b32.xlu0 %v4387, 107
  %v4396 = vpop.permute.xlu0 %4395
  %4397 = vrot.lane.b32.xlu0 %v4390, 107
  %v4398 = vpop.permute.xlu0 %4397
  %4399 = vrot.lane.b32.xlu0 %v4392, 107
  %v4400 = vpop.permute.xlu0 %4399
  %4401 = vrot.lane.b32.xlu0 %v4394, 107
  %v4402 = vpop.permute.xlu0 %4401
  %v4403 = vsel %vm1622, %v4396, %v4398
  %v4404 = vsel %vm1622, %v4400, %v4402
  %v4409 = vadd.f32 %v4217, %v4396
  %v4410 = vadd.f32 %v4218, %v4403
  %v4411 = vadd.f32 %v4219, %v4400
  %v4412 = vadd.f32 %v4220, %v4404
  %v4413 = vlaneseq
  %v4414 = vshrl.u32 %v4413, 7
  %v4415 = vsub.s32 2, %v4414
  %v4416 = vrot.slane %v2815, %v4415
  %4418 = vrot.lane.b32.xlu0 %v4416, 117
  %v4419 = vpop.permute.xlu0 %4418
  %v4421 = vmul.f32 %v2801, %v4419
  %v4422 = vmul.f32 %v2802, %v4419
  %v4423 = vmul.f32 %v2804, %v4419
  %v4424 = vmul.f32 %v2805, %v4419
  %v4425 = vmul.f32 %v2807, %v4419
  %v4426 = vmul.f32 %v2808, %v4419
  %v4433 = vrot.slane %v4421, 2
  %v4434 = vrot.slane %v4423, 2
  %v4435 = vsel %vm1701, %v4433, %v4434
  %v4436 = vrot.slane %v4422, 2
  %v4437 = vrot.slane %v4424, 2
  %v4438 = vsel %vm1701, %v4436, %v4437
  %v4439 = vrot.slane %v4425, 2
  %v4440 = vsel %vm1701, %v4434, %v4439
  %v4441 = vrot.slane %v4426, 2
  %v4442 = vsel %vm1701, %v4437, %v4441
  %4443 = vrot.lane.b32.xlu0 %v4435, 2
  %v4444 = vpop.permute.xlu0 %4443
  %4445 = vrot.lane.b32.xlu0 %v4438, 2
  %v4446 = vpop.permute.xlu0 %4445
  %4447 = vrot.lane.b32.xlu0 %v4440, 2
  %v4448 = vpop.permute.xlu0 %4447
  %4449 = vrot.lane.b32.xlu0 %v4442, 2
  %v4450 = vpop.permute.xlu0 %4449
  %v4451 = vsel %vm1720, %v4444, %v4446
  %v4452 = vsel %vm1720, %v4448, %v4450
  %v4457 = vadd.f32 %v4265, %v4444
  %v4458 = vadd.f32 %v4266, %v4451
  %v4459 = vadd.f32 %v4267, %v4448
  %v4460 = vadd.f32 %v4268, %v4452
  %v4461 = vlaneseq
  %v4462 = vshrl.u32 %v4461, 7
  %v4463 = vsub.s32 3, %v4462
  %v4464 = vrot.slane %v2815, %v4463
  %4466 = vrot.lane.b32.xlu0 %v4464, 118
  %v4467 = vpop.permute.xlu0 %4466
  %v4469 = vmul.f32 %v2801, %v4467
  %v4470 = vmul.f32 %v2802, %v4467
  %v4471 = vmul.f32 %v2804, %v4467
  %v4472 = vmul.f32 %v2805, %v4467
  %v4473 = vmul.f32 %v2807, %v4467
  %v4474 = vmul.f32 %v2808, %v4467
  %v4481 = vrot.slane %v4469, 2
  %v4482 = vrot.slane %v4471, 2
  %v4483 = vsel %vm1701, %v4481, %v4482
  %v4484 = vrot.slane %v4470, 2
  %v4485 = vrot.slane %v4472, 2
  %v4486 = vsel %vm1701, %v4484, %v4485
  %v4487 = vrot.slane %v4473, 2
  %v4488 = vsel %vm1701, %v4482, %v4487
  %v4489 = vrot.slane %v4474, 2
  %v4490 = vsel %vm1701, %v4485, %v4489
  %4491 = vrot.lane.b32.xlu0 %v4483, 2
  %v4492 = vpop.permute.xlu0 %4491
  %4493 = vrot.lane.b32.xlu0 %v4486, 2
  %v4494 = vpop.permute.xlu0 %4493
  %4495 = vrot.lane.b32.xlu0 %v4488, 2
  %v4496 = vpop.permute.xlu0 %4495
  %4497 = vrot.lane.b32.xlu0 %v4490, 2
  %v4498 = vpop.permute.xlu0 %4497
  %v4499 = vsel %vm1720, %v4492, %v4494
  %v4500 = vsel %vm1720, %v4496, %v4498
  %v4505 = vadd.f32 %v4313, %v4492
  %v4506 = vadd.f32 %v4314, %v4499
  %v4507 = vadd.f32 %v4315, %v4496
  %v4508 = vadd.f32 %v4316, %v4500
  %v4509 = vlaneseq
  %v4510 = vshrl.u32 %v4509, 7
  %v4511 = vsub.s32 4, %v4510
  %v4512 = vrot.slane %v2815, %v4511
  %4514 = vrot.lane.b32.xlu0 %v4512, 119
  %v4515 = vpop.permute.xlu0 %4514
  %v4517 = vmul.f32 %v2801, %v4515
  %v4518 = vmul.f32 %v2802, %v4515
  %v4519 = vmul.f32 %v2804, %v4515
  %v4520 = vmul.f32 %v2805, %v4515
  %v4521 = vmul.f32 %v2807, %v4515
  %v4522 = vmul.f32 %v2808, %v4515
  %v4529 = vrot.slane %v4517, 2
  %v4530 = vrot.slane %v4519, 2
  %v4531 = vsel %vm1701, %v4529, %v4530
  %v4532 = vrot.slane %v4518, 2
  %v4533 = vrot.slane %v4520, 2
  %v4534 = vsel %vm1701, %v4532, %v4533
  %v4535 = vrot.slane %v4521, 2
  %v4536 = vsel %vm1701, %v4530, %v4535
  %v4537 = vrot.slane %v4522, 2
  %v4538 = vsel %vm1701, %v4533, %v4537
  %4539 = vrot.lane.b32.xlu0 %v4531, 126
  %v4540 = vpop.permute.xlu0 %4539
  %4541 = vrot.lane.b32.xlu0 %v4534, 126
  %v4542 = vpop.permute.xlu0 %4541
  %4543 = vrot.lane.b32.xlu0 %v4536, 126
  %v4544 = vpop.permute.xlu0 %4543
  %4545 = vrot.lane.b32.xlu0 %v4538, 126
  %v4546 = vpop.permute.xlu0 %4545
  %v4547 = vsel %vm1817, %v4540, %v4542
  %v4548 = vsel %vm1817, %v4544, %v4546
  %v4553 = vadd.f32 %v4361, %v4547
  %v4554 = vadd.f32 %v4362, %v4542
  %v4555 = vadd.f32 %v4363, %v4548
  %v4556 = vadd.f32 %v4364, %v4546
  %v4557 = vlaneseq
  %v4558 = vshrl.u32 %v4557, 7
  %v4559 = vsub.s32 5, %v4558
  %v4560 = vrot.slane %v2815, %v4559
  %4562 = vrot.lane.b32.xlu0 %v4560, 120
  %v4563 = vpop.permute.xlu0 %4562
  %v4565 = vmul.f32 %v2801, %v4563
  %v4566 = vmul.f32 %v2802, %v4563
  %v4567 = vmul.f32 %v2804, %v4563
  %v4568 = vmul.f32 %v2805, %v4563
  %v4569 = vmul.f32 %v2807, %v4563
  %v4570 = vmul.f32 %v2808, %v4563
  %v4577 = vrot.slane %v4565, 2
  %v4578 = vrot.slane %v4567, 2
  %v4579 = vsel %vm1701, %v4577, %v4578
  %v4580 = vrot.slane %v4566, 2
  %v4581 = vrot.slane %v4568, 2
  %v4582 = vsel %vm1701, %v4580, %v4581
  %v4583 = vrot.slane %v4569, 2
  %v4584 = vsel %vm1701, %v4578, %v4583
  %v4585 = vrot.slane %v4570, 2
  %v4586 = vsel %vm1701, %v4581, %v4585
  %4587 = vrot.lane.b32.xlu0 %v4579, 126
  %v4588 = vpop.permute.xlu0 %4587
  %4589 = vrot.lane.b32.xlu0 %v4582, 126
  %v4590 = vpop.permute.xlu0 %4589
  %4591 = vrot.lane.b32.xlu0 %v4584, 126
  %v4592 = vpop.permute.xlu0 %4591
  %4593 = vrot.lane.b32.xlu0 %v4586, 126
  %v4594 = vpop.permute.xlu0 %4593
  %v4595 = vsel %vm1817, %v4588, %v4590
  %v4596 = vsel %vm1817, %v4592, %v4594
  %v4601 = vadd.f32 %v4409, %v4595
  %v4602 = vadd.f32 %v4410, %v4590
  %v4603 = vadd.f32 %v4411, %v4596
  %v4604 = vadd.f32 %v4412, %v4594
  %v4605 = vlaneseq
  %v4606 = vshrl.u32 %v4605, 7
  %v4607 = vsub.s32 6, %v4606
  %v4608 = vrot.slane %v2815, %v4607
  %4610 = vrot.lane.b32.xlu0 %v4608, 121
  %v4611 = vpop.permute.xlu0 %4610
  %v4613 = vmul.f32 %v2801, %v4611
  %v4614 = vmul.f32 %v2802, %v4611
  %v4615 = vmul.f32 %v2804, %v4611
  %v4616 = vmul.f32 %v2805, %v4611
  %v4617 = vmul.f32 %v2807, %v4611
  %v4618 = vmul.f32 %v2808, %v4611
  %v4625 = vrot.slane %v4613, 2
  %v4626 = vrot.slane %v4615, 2
  %v4627 = vsel %vm1701, %v4625, %v4626
  %v4628 = vrot.slane %v4614, 2
  %v4629 = vrot.slane %v4616, 2
  %v4630 = vsel %vm1701, %v4628, %v4629
  %v4631 = vrot.slane %v4617, 2
  %v4632 = vsel %vm1701, %v4626, %v4631
  %v4633 = vrot.slane %v4618, 2
  %v4634 = vsel %vm1701, %v4629, %v4633
  %4635 = vrot.lane.b32.xlu0 %v4627, 126
  %v4636 = vpop.permute.xlu0 %4635
  %4637 = vrot.lane.b32.xlu0 %v4630, 126
  %v4638 = vpop.permute.xlu0 %4637
  %4639 = vrot.lane.b32.xlu0 %v4632, 126
  %v4640 = vpop.permute.xlu0 %4639
  %4641 = vrot.lane.b32.xlu0 %v4634, 126
  %v4642 = vpop.permute.xlu0 %4641
  %v4643 = vsel %vm1817, %v4636, %v4638
  %v4644 = vsel %vm1817, %v4640, %v4642
  %v4649 = vadd.f32 %v4457, %v4643
  %v4650 = vadd.f32 %v4458, %v4638
  %v4651 = vadd.f32 %v4459, %v4644
  %v4652 = vadd.f32 %v4460, %v4642
  %v4653 = vlaneseq
  %v4654 = vshrl.u32 %v4653, 7
  %v4655 = vsub.s32 7, %v4654
  %v4656 = vrot.slane %v2815, %v4655
  %4658 = vrot.lane.b32.xlu0 %v4656, 122
  %v4659 = vpop.permute.xlu0 %4658
  %v4661 = vmul.f32 %v2801, %v4659
  %v4662 = vmul.f32 %v2802, %v4659
  %v4663 = vmul.f32 %v2804, %v4659
  %v4664 = vmul.f32 %v2805, %v4659
  %v4665 = vmul.f32 %v2807, %v4659
  %v4666 = vmul.f32 %v2808, %v4659
  %v4673 = vrot.slane %v4661, 2
  %v4674 = vrot.slane %v4663, 2
  %v4675 = vsel %vm1701, %v4673, %v4674
  %v4676 = vrot.slane %v4662, 2
  %v4677 = vrot.slane %v4664, 2
  %v4678 = vsel %vm1701, %v4676, %v4677
  %v4679 = vrot.slane %v4665, 2
  %v4680 = vsel %vm1701, %v4674, %v4679
  %v4681 = vrot.slane %v4666, 2
  %v4682 = vsel %vm1701, %v4677, %v4681
  %4683 = vrot.lane.b32.xlu0 %v4675, 126
  %v4684 = vpop.permute.xlu0 %4683
  %4685 = vrot.lane.b32.xlu0 %v4678, 126
  %v4686 = vpop.permute.xlu0 %4685
  %4687 = vrot.lane.b32.xlu0 %v4680, 126
  %v4688 = vpop.permute.xlu0 %4687
  %4689 = vrot.lane.b32.xlu0 %v4682, 126
  %v4690 = vpop.permute.xlu0 %4689
  %v4691 = vsel %vm1817, %v4684, %v4686
  %v4692 = vsel %vm1817, %v4688, %v4690
  %v4697 = vadd.f32 %v4505, %v4691
  %v4698 = vadd.f32 %v4506, %v4686
  %v4699 = vadd.f32 %v4507, %v4692
  %v4700 = vadd.f32 %v4508, %v4690
  %v4701 = vlaneseq
  %v4702 = vshrl.u32 %v4701, 7
  %v4703 = vsub.s32 0, %v4702
  %v4704 = vrot.slane %v2816, %v4703
  %4706 = vrot.lane.b32.xlu0 %v4704, 123
  %v4707 = vpop.permute.xlu0 %4706
  %v4709 = vmul.f32 %v2801, %v4707
  %v4710 = vmul.f32 %v2802, %v4707
  %v4711 = vmul.f32 %v2804, %v4707
  %v4712 = vmul.f32 %v2805, %v4707
  %v4713 = vmul.f32 %v2807, %v4707
  %v4714 = vmul.f32 %v2808, %v4707
  %v4721 = vrot.slane %v4709, 2
  %v4722 = vrot.slane %v4711, 2
  %v4723 = vsel %vm1701, %v4721, %v4722
  %v4724 = vrot.slane %v4710, 2
  %v4725 = vrot.slane %v4712, 2
  %v4726 = vsel %vm1701, %v4724, %v4725
  %v4727 = vrot.slane %v4713, 2
  %v4728 = vsel %vm1701, %v4722, %v4727
  %v4729 = vrot.slane %v4714, 2
  %v4730 = vsel %vm1701, %v4725, %v4729
  %4731 = vrot.lane.b32.xlu0 %v4723, 122
  %v4732 = vpop.permute.xlu0 %4731
  %4733 = vrot.lane.b32.xlu0 %v4726, 122
  %v4734 = vpop.permute.xlu0 %4733
  %4735 = vrot.lane.b32.xlu0 %v4728, 122
  %v4736 = vpop.permute.xlu0 %4735
  %4737 = vrot.lane.b32.xlu0 %v4730, 122
  %v4738 = vpop.permute.xlu0 %4737
  %v4739 = vsel %vm2010, %v4732, %v4734
  %v4740 = vsel %vm2010, %v4736, %v4738
  %v4745 = vadd.f32 %v4553, %v4739
  %v4746 = vadd.f32 %v4554, %v4734
  %v4747 = vadd.f32 %v4555, %v4740
  %v4748 = vadd.f32 %v4556, %v4738
  %v4749 = vlaneseq
  %v4750 = vshrl.u32 %v4749, 7
  %v4751 = vsub.s32 1, %v4750
  %v4752 = vrot.slane %v2816, %v4751
  %4754 = vrot.lane.b32.xlu0 %v4752, 125
  %v4755 = vpop.permute.xlu0 %4754
  %v4757 = vmul.f32 %v2801, %v4755
  %v4758 = vmul.f32 %v2802, %v4755
  %v4759 = vmul.f32 %v2804, %v4755
  %v4760 = vmul.f32 %v2805, %v4755
  %v4761 = vmul.f32 %v2807, %v4755
  %v4762 = vmul.f32 %v2808, %v4755
  %v4769 = vrot.slane %v4757, 2
  %v4770 = vrot.slane %v4759, 2
  %v4771 = vsel %vm1701, %v4769, %v4770
  %v4772 = vrot.slane %v4758, 2
  %v4773 = vrot.slane %v4760, 2
  %v4774 = vsel %vm1701, %v4772, %v4773
  %v4775 = vrot.slane %v4761, 2
  %v4776 = vsel %vm1701, %v4770, %v4775
  %v4777 = vrot.slane %v4762, 2
  %v4778 = vsel %vm1701, %v4773, %v4777
  %4779 = vrot.lane.b32.xlu0 %v4771, 121
  %v4780 = vpop.permute.xlu0 %4779
  %4781 = vrot.lane.b32.xlu0 %v4774, 121
  %v4782 = vpop.permute.xlu0 %4781
  %4783 = vrot.lane.b32.xlu0 %v4776, 121
  %v4784 = vpop.permute.xlu0 %4783
  %4785 = vrot.lane.b32.xlu0 %v4778, 121
  %v4786 = vpop.permute.xlu0 %4785
  %v4787 = vsel %vm2059, %v4780, %v4782
  %v4788 = vsel %vm2059, %v4784, %v4786
  %v4793 = vadd.f32 %v4601, %v4787
  %v4794 = vadd.f32 %v4602, %v4782
  %v4795 = vadd.f32 %v4603, %v4788
  %v4796 = vadd.f32 %v4604, %v4786
  %v4797 = vlaneseq
  %v4798 = vshrl.u32 %v4797, 7
  %v4799 = vsub.s32 2, %v4798
  %v4800 = vrot.slane %v2816, %v4799
  %4802 = vrot.lane.b32.xlu0 %v4800, 126
  %v4803 = vpop.permute.xlu0 %4802
  %v4805 = vmul.f32 %v2801, %v4803
  %v4806 = vmul.f32 %v2802, %v4803
  %v4807 = vmul.f32 %v2804, %v4803
  %v4808 = vmul.f32 %v2805, %v4803
  %v4809 = vmul.f32 %v2807, %v4803
  %v4810 = vmul.f32 %v2808, %v4803
  %v4817 = vrot.slane %v4805, 2
  %v4818 = vrot.slane %v4807, 2
  %v4819 = vsel %vm1701, %v4817, %v4818
  %v4820 = vrot.slane %v4806, 2
  %v4821 = vrot.slane %v4808, 2
  %v4822 = vsel %vm1701, %v4820, %v4821
  %v4823 = vrot.slane %v4809, 2
  %v4824 = vsel %vm1701, %v4818, %v4823
  %v4825 = vrot.slane %v4810, 2
  %v4826 = vsel %vm1701, %v4821, %v4825
  %4827 = vrot.lane.b32.xlu0 %v4819, 121
  %v4828 = vpop.permute.xlu0 %4827
  %4829 = vrot.lane.b32.xlu0 %v4822, 121
  %v4830 = vpop.permute.xlu0 %4829
  %4831 = vrot.lane.b32.xlu0 %v4824, 121
  %v4832 = vpop.permute.xlu0 %4831
  %4833 = vrot.lane.b32.xlu0 %v4826, 121
  %v4834 = vpop.permute.xlu0 %4833
  %v4835 = vsel %vm2059, %v4828, %v4830
  %v4836 = vsel %vm2059, %v4832, %v4834
  %v4841 = vadd.f32 %v4649, %v4835
  %v4842 = vadd.f32 %v4650, %v4830
  %v4843 = vadd.f32 %v4651, %v4836
  %v4844 = vadd.f32 %v4652, %v4834
  %v4845 = vlaneseq
  %v4846 = vshrl.u32 %v4845, 7
  %v4847 = vsub.s32 3, %v4846
  %v4848 = vrot.slane %v2816, %v4847
  %4850 = vrot.lane.b32.xlu0 %v4848, 127
  %v4851 = vpop.permute.xlu0 %4850
  %v4853 = vmul.f32 %v2801, %v4851
  %v4854 = vmul.f32 %v2802, %v4851
  %v4855 = vmul.f32 %v2804, %v4851
  %v4856 = vmul.f32 %v2805, %v4851
  %v4857 = vmul.f32 %v2807, %v4851
  %v4858 = vmul.f32 %v2808, %v4851
  %v4865 = vrot.slane %v4853, 2
  %v4866 = vrot.slane %v4855, 2
  %v4867 = vsel %vm1701, %v4865, %v4866
  %v4868 = vrot.slane %v4854, 2
  %v4869 = vrot.slane %v4856, 2
  %v4870 = vsel %vm1701, %v4868, %v4869
  %v4871 = vrot.slane %v4857, 2
  %v4872 = vsel %vm1701, %v4866, %v4871
  %v4873 = vrot.slane %v4858, 2
  %v4874 = vsel %vm1701, %v4869, %v4873
  %4875 = vrot.lane.b32.xlu0 %v4867, 121
  %v4876 = vpop.permute.xlu0 %4875
  %4877 = vrot.lane.b32.xlu0 %v4870, 121
  %v4878 = vpop.permute.xlu0 %4877
  %4879 = vrot.lane.b32.xlu0 %v4872, 121
  %v4880 = vpop.permute.xlu0 %4879
  %4881 = vrot.lane.b32.xlu0 %v4874, 121
  %v4882 = vpop.permute.xlu0 %4881
  %v4883 = vsel %vm2059, %v4876, %v4878
  %v4884 = vsel %vm2059, %v4880, %v4882
  %v4889 = vadd.f32 %v4697, %v4883
  %v4890 = vadd.f32 %v4698, %v4878
  %v4891 = vadd.f32 %v4699, %v4884
  %v4892 = vadd.f32 %v4700, %v4882
  %v4893 = vlaneseq
  %v4894 = vshrl.u32 %v4893, 7
  %v4895 = vsub.s32 4, %v4894
  %v4896 = vrot.slane %v2816, %v4895
  %v4897 = vmul.f32 %v2802, %v4896
  %v4898 = vmul.f32 %v2805, %v4896
  %v4899 = vmul.f32 %v2808, %v4896
  %v4903 = vrot.slane %v4897, 2
  %v4904 = vrot.slane %v4898, 2
  %v4905 = vsel %vm1701, %v4903, %v4904
  %v4906 = vrot.slane %v4899, 2
  %v4907 = vsel %vm1701, %v4904, %v4906
  %4908 = vrot.lane.b32.xlu0 %v4905, 117
  %v4909 = vpop.permute.xlu0 %4908
  %4910 = vrot.lane.b32.xlu0 %v4907, 117
  %v4911 = vpop.permute.xlu0 %4910
  %v4914 = vadd.f32 %v4745, %v4909
  %v4915 = vadd.f32 %v4746, %v4909
  %v4916 = vadd.f32 %v4747, %v4911
  %v4917 = vadd.f32 %v4748, %v4911
  %v4918 = vlaneseq
  %v4919 = vshrl.u32 %v4918, 7
  %v4920 = vsub.s32 5, %v4919
  %v4921 = vrot.slane %v2816, %v4920
  %4923 = vrot.lane.b32.xlu0 %v4921, 1
  %v4924 = vpop.permute.xlu0 %4923
  %v4926 = vmul.f32 %v2802, %v4924
  %v4927 = vmul.f32 %v2803, %v4924
  %v4928 = vmul.f32 %v2805, %v4924
  %v4929 = vmul.f32 %v2806, %v4924
  %v4930 = vmul.f32 %v2808, %v4924
  %v4931 = vmul.f32 %v2809, %v4924
  %v4938 = vrot.slane %v4926, 2
  %v4939 = vrot.slane %v4928, 2
  %v4940 = vsel %vm1701, %v4938, %v4939
  %v4941 = vrot.slane %v4927, 2
  %v4942 = vrot.slane %v4929, 2
  %v4943 = vsel %vm1701, %v4941, %v4942
  %v4944 = vrot.slane %v4930, 2
  %v4945 = vsel %vm1701, %v4939, %v4944
  %v4946 = vrot.slane %v4931, 2
  %v4947 = vsel %vm1701, %v4942, %v4946
  %4948 = vrot.lane.b32.xlu0 %v4940, 117
  %v4949 = vpop.permute.xlu0 %4948
  %4950 = vrot.lane.b32.xlu0 %v4943, 117
  %v4951 = vpop.permute.xlu0 %4950
  %4952 = vrot.lane.b32.xlu0 %v4945, 117
  %v4953 = vpop.permute.xlu0 %4952
  %4954 = vrot.lane.b32.xlu0 %v4947, 117
  %v4955 = vpop.permute.xlu0 %4954
  %v4956 = vsel %vm2229, %v4949, %v4951
  %v4957 = vsel %vm2229, %v4953, %v4955
  %v4962 = vadd.f32 %v4793, %v4949
  %v4963 = vadd.f32 %v4794, %v4956
  %v4964 = vadd.f32 %v4795, %v4953
  %v4965 = vadd.f32 %v4796, %v4957
  %v4966 = vlaneseq
  %v4967 = vshrl.u32 %v4966, 7
  %v4968 = vsub.s32 6, %v4967
  %v4969 = vrot.slane %v2816, %v4968
  %4971 = vrot.lane.b32.xlu0 %v4969, 2
  %v4972 = vpop.permute.xlu0 %4971
  %v4974 = vmul.f32 %v2802, %v4972
  %v4975 = vmul.f32 %v2803, %v4972
  %v4976 = vmul.f32 %v2805, %v4972
  %v4977 = vmul.f32 %v2806, %v4972
  %v4978 = vmul.f32 %v2808, %v4972
  %v4979 = vmul.f32 %v2809, %v4972
  %v4986 = vrot.slane %v4974, 2
  %v4987 = vrot.slane %v4976, 2
  %v4988 = vsel %vm1701, %v4986, %v4987
  %v4989 = vrot.slane %v4975, 2
  %v4990 = vrot.slane %v4977, 2
  %v4991 = vsel %vm1701, %v4989, %v4990
  %v4992 = vrot.slane %v4978, 2
  %v4993 = vsel %vm1701, %v4987, %v4992
  %v4994 = vrot.slane %v4979, 2
  %v4995 = vsel %vm1701, %v4990, %v4994
  %4996 = vrot.lane.b32.xlu0 %v4988, 117
  %v4997 = vpop.permute.xlu0 %4996
  %4998 = vrot.lane.b32.xlu0 %v4991, 117
  %v4999 = vpop.permute.xlu0 %4998
  %5000 = vrot.lane.b32.xlu0 %v4993, 117
  %v5001 = vpop.permute.xlu0 %5000
  %5002 = vrot.lane.b32.xlu0 %v4995, 117
  %v5003 = vpop.permute.xlu0 %5002
  %v5004 = vsel %vm2229, %v4997, %v4999
  %v5005 = vsel %vm2229, %v5001, %v5003
  %v5010 = vadd.f32 %v4841, %v4997
  %v5011 = vadd.f32 %v4842, %v5004
  %v5012 = vadd.f32 %v4843, %v5001
  %v5013 = vadd.f32 %v4844, %v5005
  %v5014 = vlaneseq
  %v5015 = vshrl.u32 %v5014, 7
  %v5016 = vsub.s32 7, %v5015
  %v5017 = vrot.slane %v2816, %v5016
  %5019 = vrot.lane.b32.xlu0 %v5017, 3
  %v5020 = vpop.permute.xlu0 %5019
  %v5022 = vmul.f32 %v2802, %v5020
  %v5023 = vmul.f32 %v2803, %v5020
  %v5024 = vmul.f32 %v2805, %v5020
  %v5025 = vmul.f32 %v2806, %v5020
  %v5026 = vmul.f32 %v2808, %v5020
  %v5027 = vmul.f32 %v2809, %v5020
  %v5034 = vrot.slane %v5022, 2
  %v5035 = vrot.slane %v5024, 2
  %v5036 = vsel %vm1701, %v5034, %v5035
  %v5037 = vrot.slane %v5023, 2
  %v5038 = vrot.slane %v5025, 2
  %v5039 = vsel %vm1701, %v5037, %v5038
  %v5040 = vrot.slane %v5026, 2
  %v5041 = vsel %vm1701, %v5035, %v5040
  %v5042 = vrot.slane %v5027, 2
  %v5043 = vsel %vm1701, %v5038, %v5042
  %5044 = vrot.lane.b32.xlu0 %v5036, 117
  %v5045 = vpop.permute.xlu0 %5044
  %5046 = vrot.lane.b32.xlu0 %v5039, 117
  %v5047 = vpop.permute.xlu0 %5046
  %5048 = vrot.lane.b32.xlu0 %v5041, 117
  %v5049 = vpop.permute.xlu0 %5048
  %5050 = vrot.lane.b32.xlu0 %v5043, 117
  %v5051 = vpop.permute.xlu0 %5050
  %v5052 = vsel %vm2229, %v5045, %v5047
  %v5053 = vsel %vm2229, %v5049, %v5051
  %v5058 = vadd.f32 %v4889, %v5045
  %v5059 = vadd.f32 %v4890, %v5052
  %v5060 = vadd.f32 %v4891, %v5049
  %v5061 = vadd.f32 %v4892, %v5053
  %v5062 = vlaneseq
  %v5063 = vshrl.u32 %v5062, 7
  %v5064 = vsub.s32 0, %v5063
  %v5065 = vrot.slane %v2817, %v5064
  %5067 = vrot.lane.b32.xlu0 %v5065, 5
  %v5068 = vpop.permute.xlu0 %5067
  %v5070 = vmul.f32 %v2802, %v5068
  %v5071 = vmul.f32 %v2803, %v5068
  %v5072 = vmul.f32 %v2805, %v5068
  %v5073 = vmul.f32 %v2806, %v5068
  %v5074 = vmul.f32 %v2808, %v5068
  %v5075 = vmul.f32 %v2809, %v5068
  %v5082 = vrot.slane %v5070, 2
  %v5083 = vrot.slane %v5072, 2
  %v5084 = vsel %vm1701, %v5082, %v5083
  %v5085 = vrot.slane %v5071, 2
  %v5086 = vrot.slane %v5073, 2
  %v5087 = vsel %vm1701, %v5085, %v5086
  %v5088 = vrot.slane %v5074, 2
  %v5089 = vsel %vm1701, %v5083, %v5088
  %v5090 = vrot.slane %v5075, 2
  %v5091 = vsel %vm1701, %v5086, %v5090
  %5092 = vrot.lane.b32.xlu0 %v5084, 112
  %v5093 = vpop.permute.xlu0 %5092
  %5094 = vrot.lane.b32.xlu0 %v5087, 112
  %v5095 = vpop.permute.xlu0 %5094
  %5096 = vrot.lane.b32.xlu0 %v5089, 112
  %v5097 = vpop.permute.xlu0 %5096
  %5098 = vrot.lane.b32.xlu0 %v5091, 112
  %v5099 = vpop.permute.xlu0 %5098
  %v5100 = vsel %vm2374, %v5093, %v5095
  %v5101 = vsel %vm2374, %v5097, %v5099
  %v5106 = vadd.f32 %v4914, %v5093
  %v5107 = vadd.f32 %v4915, %v5100
  %v5108 = vadd.f32 %v4916, %v5097
  %v5109 = vadd.f32 %v4917, %v5101
  %v5110 = vlaneseq
  %v5111 = vshrl.u32 %v5110, 7
  %v5112 = vsub.s32 1, %v5111
  %v5113 = vrot.slane %v2817, %v5112
  %5115 = vrot.lane.b32.xlu0 %v5113, 6
  %v5116 = vpop.permute.xlu0 %5115
  %v5118 = vmul.f32 %v2802, %v5116
  %v5119 = vmul.f32 %v2803, %v5116
  %v5120 = vmul.f32 %v2805, %v5116
  %v5121 = vmul.f32 %v2806, %v5116
  %v5122 = vmul.f32 %v2808, %v5116
  %v5123 = vmul.f32 %v2809, %v5116
  %v5130 = vrot.slane %v5118, 2
  %v5131 = vrot.slane %v5120, 2
  %v5132 = vsel %vm1701, %v5130, %v5131
  %v5133 = vrot.slane %v5119, 2
  %v5134 = vrot.slane %v5121, 2
  %v5135 = vsel %vm1701, %v5133, %v5134
  %v5136 = vrot.slane %v5122, 2
  %v5137 = vsel %vm1701, %v5131, %v5136
  %v5138 = vrot.slane %v5123, 2
  %v5139 = vsel %vm1701, %v5134, %v5138
  %5140 = vrot.lane.b32.xlu0 %v5132, 112
  %v5141 = vpop.permute.xlu0 %5140
  %5142 = vrot.lane.b32.xlu0 %v5135, 112
  %v5143 = vpop.permute.xlu0 %5142
  %5144 = vrot.lane.b32.xlu0 %v5137, 112
  %v5145 = vpop.permute.xlu0 %5144
  %5146 = vrot.lane.b32.xlu0 %v5139, 112
  %v5147 = vpop.permute.xlu0 %5146
  %v5148 = vsel %vm2374, %v5141, %v5143
  %v5149 = vsel %vm2374, %v5145, %v5147
  %v5154 = vadd.f32 %v4962, %v5141
  %v5155 = vadd.f32 %v4963, %v5148
  %v5156 = vadd.f32 %v4964, %v5145
  %v5157 = vadd.f32 %v4965, %v5149
  %v5158 = vlaneseq
  %v5159 = vshrl.u32 %v5158, 7
  %v5160 = vsub.s32 2, %v5159
  %v5161 = vrot.slane %v2817, %v5160
  %5163 = vrot.lane.b32.xlu0 %v5161, 7
  %v5164 = vpop.permute.xlu0 %5163
  %v5166 = vmul.f32 %v2802, %v5164
  %v5167 = vmul.f32 %v2803, %v5164
  %v5168 = vmul.f32 %v2805, %v5164
  %v5169 = vmul.f32 %v2806, %v5164
  %v5170 = vmul.f32 %v2808, %v5164
  %v5171 = vmul.f32 %v2809, %v5164
  %v5178 = vrot.slane %v5166, 2
  %v5179 = vrot.slane %v5168, 2
  %v5180 = vsel %vm1701, %v5178, %v5179
  %v5181 = vrot.slane %v5167, 2
  %v5182 = vrot.slane %v5169, 2
  %v5183 = vsel %vm1701, %v5181, %v5182
  %v5184 = vrot.slane %v5170, 2
  %v5185 = vsel %vm1701, %v5179, %v5184
  %v5186 = vrot.slane %v5171, 2
  %v5187 = vsel %vm1701, %v5182, %v5186
  %5188 = vrot.lane.b32.xlu0 %v5180, 112
  %v5189 = vpop.permute.xlu0 %5188
  %5190 = vrot.lane.b32.xlu0 %v5183, 112
  %v5191 = vpop.permute.xlu0 %5190
  %5192 = vrot.lane.b32.xlu0 %v5185, 112
  %v5193 = vpop.permute.xlu0 %5192
  %5194 = vrot.lane.b32.xlu0 %v5187, 112
  %v5195 = vpop.permute.xlu0 %5194
  %v5196 = vsel %vm2374, %v5189, %v5191
  %v5197 = vsel %vm2374, %v5193, %v5195
  %v5202 = vadd.f32 %v5010, %v5189
  %v5203 = vadd.f32 %v5011, %v5196
  %v5204 = vadd.f32 %v5012, %v5193
  %v5205 = vadd.f32 %v5013, %v5197
  %v5206 = vlaneseq
  %v5207 = vshrl.u32 %v5206, 7
  %v5208 = vsub.s32 3, %v5207
  %v5209 = vrot.slane %v2817, %v5208
  %5211 = vrot.lane.b32.xlu0 %v5209, 8
  %v5212 = vpop.permute.xlu0 %5211
  %v5214 = vmul.f32 %v2802, %v5212
  %v5215 = vmul.f32 %v2803, %v5212
  %v5216 = vmul.f32 %v2805, %v5212
  %v5217 = vmul.f32 %v2806, %v5212
  %v5218 = vmul.f32 %v2808, %v5212
  %v5219 = vmul.f32 %v2809, %v5212
  %v5226 = vrot.slane %v5214, 2
  %v5227 = vrot.slane %v5216, 2
  %v5228 = vsel %vm1701, %v5226, %v5227
  %v5229 = vrot.slane %v5215, 2
  %v5230 = vrot.slane %v5217, 2
  %v5231 = vsel %vm1701, %v5229, %v5230
  %v5232 = vrot.slane %v5218, 2
  %v5233 = vsel %vm1701, %v5227, %v5232
  %v5234 = vrot.slane %v5219, 2
  %v5235 = vsel %vm1701, %v5230, %v5234
  %5236 = vrot.lane.b32.xlu0 %v5228, 112
  %v5237 = vpop.permute.xlu0 %5236
  %5238 = vrot.lane.b32.xlu0 %v5231, 112
  %v5239 = vpop.permute.xlu0 %5238
  %5240 = vrot.lane.b32.xlu0 %v5233, 112
  %v5241 = vpop.permute.xlu0 %5240
  %5242 = vrot.lane.b32.xlu0 %v5235, 112
  %v5243 = vpop.permute.xlu0 %5242
  %v5244 = vsel %vm2374, %v5237, %v5239
  %v5245 = vsel %vm2374, %v5241, %v5243
  %v5250 = vadd.f32 %v5058, %v5237
  %v5251 = vadd.f32 %v5059, %v5244
  %v5252 = vadd.f32 %v5060, %v5241
  %v5253 = vadd.f32 %v5061, %v5245
  %v5254 = vlaneseq
  %v5255 = vshrl.u32 %v5254, 7
  %v5256 = vsub.s32 4, %v5255
  %v5257 = vrot.slane %v2817, %v5256
  %5259 = vrot.lane.b32.xlu0 %v5257, 9
  %v5260 = vpop.permute.xlu0 %5259
  %v5262 = vmul.f32 %v2802, %v5260
  %v5263 = vmul.f32 %v2803, %v5260
  %v5264 = vmul.f32 %v2805, %v5260
  %v5265 = vmul.f32 %v2806, %v5260
  %v5266 = vmul.f32 %v2808, %v5260
  %v5267 = vmul.f32 %v2809, %v5260
  %v5274 = vrot.slane %v5262, 2
  %v5275 = vrot.slane %v5264, 2
  %v5276 = vsel %vm1701, %v5274, %v5275
  %v5277 = vrot.slane %v5263, 2
  %v5278 = vrot.slane %v5265, 2
  %v5279 = vsel %vm1701, %v5277, %v5278
  %v5280 = vrot.slane %v5266, 2
  %v5281 = vsel %vm1701, %v5275, %v5280
  %v5282 = vrot.slane %v5267, 2
  %v5283 = vsel %vm1701, %v5278, %v5282
  %5284 = vrot.lane.b32.xlu0 %v5276, 108
  %v5285 = vpop.permute.xlu0 %5284
  %5286 = vrot.lane.b32.xlu0 %v5279, 108
  %v5287 = vpop.permute.xlu0 %5286
  %5288 = vrot.lane.b32.xlu0 %v5281, 108
  %v5289 = vpop.permute.xlu0 %5288
  %5290 = vrot.lane.b32.xlu0 %v5283, 108
  %v5291 = vpop.permute.xlu0 %5290
  %v5292 = vsel %vm2567, %v5285, %v5287
  %v5293 = vsel %vm2567, %v5289, %v5291
  %v5298 = vadd.f32 %v5106, %v5285
  %v5299 = vadd.f32 %v5107, %v5292
  %v5300 = vadd.f32 %v5108, %v5289
  %v5301 = vadd.f32 %v5109, %v5293
  %v5302 = vlaneseq
  %v5303 = vshrl.u32 %v5302, 7
  %v5304 = vsub.s32 5, %v5303
  %v5305 = vrot.slane %v2817, %v5304
  %5307 = vrot.lane.b32.xlu0 %v5305, 10
  %v5308 = vpop.permute.xlu0 %5307
  %v5310 = vmul.f32 %v2802, %v5308
  %v5311 = vmul.f32 %v2803, %v5308
  %v5312 = vmul.f32 %v2805, %v5308
  %v5313 = vmul.f32 %v2806, %v5308
  %v5314 = vmul.f32 %v2808, %v5308
  %v5315 = vmul.f32 %v2809, %v5308
  %v5322 = vrot.slane %v5310, 2
  %v5323 = vrot.slane %v5312, 2
  %v5324 = vsel %vm1701, %v5322, %v5323
  %v5325 = vrot.slane %v5311, 2
  %v5326 = vrot.slane %v5313, 2
  %v5327 = vsel %vm1701, %v5325, %v5326
  %v5328 = vrot.slane %v5314, 2
  %v5329 = vsel %vm1701, %v5323, %v5328
  %v5330 = vrot.slane %v5315, 2
  %v5331 = vsel %vm1701, %v5326, %v5330
  %5332 = vrot.lane.b32.xlu0 %v5324, 108
  %v5333 = vpop.permute.xlu0 %5332
  %5334 = vrot.lane.b32.xlu0 %v5327, 108
  %v5335 = vpop.permute.xlu0 %5334
  %5336 = vrot.lane.b32.xlu0 %v5329, 108
  %v5337 = vpop.permute.xlu0 %5336
  %5338 = vrot.lane.b32.xlu0 %v5331, 108
  %v5339 = vpop.permute.xlu0 %5338
  %v5340 = vsel %vm2567, %v5333, %v5335
  %v5341 = vsel %vm2567, %v5337, %v5339
  %v5346 = vadd.f32 %v5154, %v5333
  %v5347 = vadd.f32 %v5155, %v5340
  %v5348 = vadd.f32 %v5156, %v5337
  %v5349 = vadd.f32 %v5157, %v5341
  %v5350 = vlaneseq
  %v5351 = vshrl.u32 %v5350, 7
  %v5352 = vsub.s32 6, %v5351
  %v5353 = vrot.slane %v2817, %v5352
  %5355 = vrot.lane.b32.xlu0 %v5353, 11
  %v5356 = vpop.permute.xlu0 %5355
  %v5358 = vmul.f32 %v2802, %v5356
  %v5359 = vmul.f32 %v2803, %v5356
  %v5360 = vmul.f32 %v2805, %v5356
  %v5361 = vmul.f32 %v2806, %v5356
  %v5362 = vmul.f32 %v2808, %v5356
  %v5363 = vmul.f32 %v2809, %v5356
  %v5370 = vrot.slane %v5358, 2
  %v5371 = vrot.slane %v5360, 2
  %v5372 = vsel %vm1701, %v5370, %v5371
  %v5373 = vrot.slane %v5359, 2
  %v5374 = vrot.slane %v5361, 2
  %v5375 = vsel %vm1701, %v5373, %v5374
  %v5376 = vrot.slane %v5362, 2
  %v5377 = vsel %vm1701, %v5371, %v5376
  %v5378 = vrot.slane %v5363, 2
  %v5379 = vsel %vm1701, %v5374, %v5378
  %5380 = vrot.lane.b32.xlu0 %v5372, 108
  %v5381 = vpop.permute.xlu0 %5380
  %5382 = vrot.lane.b32.xlu0 %v5375, 108
  %v5383 = vpop.permute.xlu0 %5382
  %5384 = vrot.lane.b32.xlu0 %v5377, 108
  %v5385 = vpop.permute.xlu0 %5384
  %5386 = vrot.lane.b32.xlu0 %v5379, 108
  %v5387 = vpop.permute.xlu0 %5386
  %v5388 = vsel %vm2567, %v5381, %v5383
  %v5389 = vsel %vm2567, %v5385, %v5387
  %v5394 = vadd.f32 %v5202, %v5381
  %v5395 = vadd.f32 %v5203, %v5388
  %v5396 = vadd.f32 %v5204, %v5385
  %v5397 = vadd.f32 %v5205, %v5389
  %5402 = vrot.lane.b32.xlu0 %v5346, 127
  %v5403 = vpop.permute.xlu0 %5402
  %5404 = vrot.lane.b32.xlu0 %v5347, 127
  %v5405 = vpop.permute.xlu0 %5404
  %5406 = vrot.lane.b32.xlu0 %v5348, 127
  %v5407 = vpop.permute.xlu0 %5406
  %5408 = vrot.lane.b32.xlu0 %v5349, 127
  %v5409 = vpop.permute.xlu0 %5408
  %v5410 = vsel %vm2686, %v5403, %v5405
  %v5411 = vsel %vm2686, %v5407, %v5409
  %v5416 = vadd.f32 %v5298, %v5410
  %v5417 = vadd.f32 %v5299, %v5405
  %v5418 = vadd.f32 %v5300, %v5411
  %v5419 = vadd.f32 %v5301, %v5409
  %5424 = vrot.lane.b32.xlu0 %v5250, 127
  %v5425 = vpop.permute.xlu0 %5424
  %5426 = vrot.lane.b32.xlu0 %v5251, 127
  %v5427 = vpop.permute.xlu0 %5426
  %5428 = vrot.lane.b32.xlu0 %v5252, 127
  %v5429 = vpop.permute.xlu0 %5428
  %5430 = vrot.lane.b32.xlu0 %v5253, 127
  %v5431 = vpop.permute.xlu0 %5430
  %v5432 = vsel %vm2686, %v5425, %v5427
  %v5433 = vsel %vm2686, %v5429, %v5431
  %v5438 = vadd.f32 %v5394, %v5432
  %v5439 = vadd.f32 %v5395, %v5427
  %v5440 = vadd.f32 %v5396, %v5433
  %v5441 = vadd.f32 %v5397, %v5431
  %5446 = vrot.lane.b32.xlu0 %v5438, 126
  %v5447 = vpop.permute.xlu0 %5446
  %5448 = vrot.lane.b32.xlu0 %v5439, 126
  %v5449 = vpop.permute.xlu0 %5448
  %5450 = vrot.lane.b32.xlu0 %v5440, 126
  %v5451 = vpop.permute.xlu0 %5450
  %5452 = vrot.lane.b32.xlu0 %v5441, 126
  %v5453 = vpop.permute.xlu0 %5452
  %v5454 = vsel %vm1817, %v5447, %v5449
  %v5455 = vsel %vm1817, %v5451, %v5453
  %v5460 = vadd.f32 %v5416, %v5454
  %v5461 = vadd.f32 %v5417, %v5449
  %v5462 = vadd.f32 %v5418, %v5455
  %v5463 = vadd.f32 %v5419, %v5453
  %v5464 = vld [vmem:[%s4] sm:$0x1]
  %v5466 = vlaneseq
  %v5467 = vshrl.u32 %v5466, 7
  %v5468 = vsub.s32 0, %v5467
  %v5469 = vrot.slane %v5464, %v5468
  %5470 = vrot.lane.b32.xlu0 %v5469, 117
  %v5471 = vpop.permute.xlu0 %5470
  %v5473 = vadd.f32 %v5460, %v5471
  %v5474 = vadd.f32 %v5461, %v5471
  %v5475 = vadd.f32 %v5462, %v5471
  %v5476 = vadd.f32 %v5463, %v5471
  %5477 = vrot.lane.b32.xlu0 %v20, 117
  %v5478 = vpop.permute.xlu0 %5477
  %5479 = vrot.lane.b32.xlu0 %v21, 117
  %v5480 = vpop.permute.xlu0 %5479
  %v5483 = vadd.f32 %v5473, %v5478
  %v5484 = vadd.f32 %v5474, %v5478
  %v5485 = vadd.f32 %v5475, %v5480
  %v5486 = vadd.f32 %v5476, %v5480
  %v5487 = vmax.f32 %v5483, 0.0
  %v5488 = vmax.f32 %v5484, 0.0
  %v5489 = vmax.f32 %v5485, 0.0
  %v5490 = vmax.f32 %v5486, 0.0
  %5495 = vrot.lane.b32.xlu0 %v5487, 11
  %v5496 = vpop.permute.xlu0 %5495
  %5497 = vrot.lane.b32.xlu0 %v5488, 11
  %v5498 = vpop.permute.xlu0 %5497
  %5499 = vrot.lane.b32.xlu0 %v5489, 11
  %v5500 = vpop.permute.xlu0 %5499
  %5501 = vrot.lane.b32.xlu0 %v5490, 11
  %v5502 = vpop.permute.xlu0 %5501
  %v5503 = vsel %vm2791, %v5496, %v5498
  %v5504 = vsel %vm2791, %v5500, %v5502
  %5507 = vst [vmem:[%s5] sm:$0xff] %v5503
  %5508 = vst [vmem:[%s5 + $0x8] sm:$0xff] %v5504
  // Predicated region
  $region22: #{forward.1} parent=0 // pred_check
    _
  $region23: #{forward.1} parent=0 // pred_check_branch
    %5510 = sbr.rel (0) target = $region25
  $region24: #{forward.1} parent=0 // pred_region
    _
  $region25: #{forward.1} parent=0 // pred_fallthru
    _
  // Predicated region
  $region26: #{forward.1} parent=0 // pred_check
    _
  $region27: #{forward.1} parent=0 // pred_check_branch
    %5512 = sbr.rel (0) target = $region29
  $region28: #{forward.1} parent=0 // pred_region
    _
  $region29: #{forward.1} parent=0 // pred_fallthru
    _

</llo_original>
